<compile_context>
chip_gen: v5e
topology: v5e:2x2
jax: 0.10.0
libtpu: 0.0.40
codegen_flags: <defaults>
</compile_context>

<pallas_src>
import functools

import jax
import jax.numpy as jnp
from jax import lax
from jax.experimental import pallas as pl
from jax.experimental.pallas import tpu as pltpu

NEG = -1e30        # "unreachable" score for padded CRF tags (must stay f32)
LANES = 128
SUBLANES = 8


def _round_up(n, m):
    return ((n + m - 1) // m) * m


# ----------------------------------------------------------------------------
# Fused kernel: BiLSTM -> hidden2tag -> CRF (log-partition AND gold score)
# ----------------------------------------------------------------------------
def _fused_bilstm_crf_kernel(
    emb_ref,      # (T*Bp, Din)  bf16  time-major rows: row = t*Bp + b
    wih_ref,      # (Din, 8H)    bf16  [fwd i,f,g,o | bwd i,f,g,o]
    whh_ref,      # (2H, 8H)     bf16  block-diag [[whh_f, 0], [0, whh_b]]
    bias_ref,     # (1, 8H)      f32   b_ih + b_hh per direction, concatenated
    w2t_ref,      # (2H, Kp)     bf16  hidden2tag (unsplit), zero-padded cols
    b2t_ref,      # (1, Kp)      f32
    start_ref,    # (1, Kp)      f32   padded with NEG
    end_ref,      # (1, Kp)      f32   padded with NEG
    trans_ref,    # (Kp, Kp)     f32   trans[i, j] = score(i -> j), NEG-padded
    mask_ref,     # (T*Bp, 1)    f32   (padded batch rows are all-zero)
    tags_ref,     # (T*Bp, 1)    i32   gold tags (padded rows = 0, masked out)
    loss_ref,     # OUT (1, 1)   f32   sum_b logZ_b - sum_b gold_score_b
    xp_ref,       # scratch (T*Bp, 8H) f32
    h_ref,        # scratch (T*Bp, 2H) f32  [h_fwd | h_bwd] per time row
    em_ref,       # scratch (T*Bp, Kp) f32  emissions (stay in VMEM)
    *, T, Bp, H):
    G = 4 * H
    TB = T * Bp
    Kp = trans_ref.shape[0]

    # ---- 1) hoisted input projection: one bf16 MXU matmul for all steps -----
    xp_ref[...] = (jnp.dot(emb_ref[...], wih_ref[...],
                           preferred_element_type=jnp.float32) + bias_ref[...])

    whh = whh_ref[...]                          # (2H, 8H) bf16, stays resident
    zeros = jnp.zeros((Bp, H), jnp.float32)

    # ---- 2) interleaved fwd/bwd recurrence, fully unrolled -------------------
    def lstm_step(t, carry):
        hf, cf, hb, cb = carry
        t_rev = T - 1 - t
        rf = pl.multiple_of(t * Bp, SUBLANES)
        rb = pl.multiple_of(t_rev * Bp, SUBLANES)
        xf = xp_ref[pl.ds(rf, Bp), 0:G]          # (Bp, 4H) fwd pre-activations
        xb = xp_ref[pl.ds(rb, Bp), G:2 * G]      # (Bp, 4H) bwd pre-activations
        # single block-diagonal recurrence matmul: [hf|hb] @ [[Wf,0],[0,Wb]]
        hcat = jnp.concatenate([hf, hb], axis=1).astype(jnp.bfloat16)
        proj = jnp.dot(hcat, whh, preferred_element_type=jnp.float32)  # (Bp,8H)
        gf = xf + proj[:, 0:G]
        gb = xb + proj[:, G:2 * G]
        # full-vreg activations, then per-gate slices (gate order i, f, g, o)
        sf = jax.nn.sigmoid(gf)
        tfv = jnp.tanh(gf)
        sb = jax.nn.sigmoid(gb)
        tbv = jnp.tanh(gb)
        cf = sf[:, H:2 * H] * cf + sf[:, 0:H] * tfv[:, 2 * H:3 * H]
        hf = sf[:, 3 * H:4 * H] * jnp.tanh(cf)
        cb = sb[:, H:2 * H] * cb + sb[:, 0:H] * tbv[:, 2 * H:3 * H]
        hb = sb[:, 3 * H:4 * H] * jnp.tanh(cb)
        h_ref[pl.ds(rf, Bp), 0:H] = hf
        h_ref[pl.ds(rb, Bp), H:2 * H] = hb
        return (hf, cf, hb, cb)

    lax.fori_loop(0, T, lstm_step, (zeros, zeros, zeros, zeros), unroll=True)

    # ---- 3) hidden2tag: single bf16 MXU matmul over all T*Bp rows ------------
    em_ref[...] = (jnp.dot(h_ref[...].astype(jnp.bfloat16), w2t_ref[...],
                           preferred_element_type=jnp.float32) + b2t_ref[...])

    # ---- 4) CRF log-partition via exp-space matmul (torchcrf semantics) ------
    start = start_ref[...]
    end = end_ref[...]
    trans = trans_ref[...]
    et = jnp.exp(trans)                      # NEG padding -> exactly 0 (f32)
    batch_valid = mask_ref[0:Bp, :]          # (Bp,1) mask at t=0 (1 for real b)

    alpha0 = start + em_ref[0:Bp, :]         # (Bp, Kp)

    def crf_step(t, alpha):
        r = pl.multiple_of(t * Bp, SUBLANES)
        em_t = em_ref[pl.ds(r, Bp), :]       # (Bp, Kp)
        m_t = mask_ref[pl.ds(r, Bp), :]      # (Bp, 1)
        m = jnp.max(alpha, axis=-1, keepdims=True)
        s = jnp.dot(jnp.exp(alpha - m), et, preferred_element_type=jnp.float32)
        nxt = m + jnp.log(s) + em_t          # padded lanes -> -inf (harmless)
        return jnp.where(m_t > 0.5, nxt, alpha)

    alpha = lax.fori_loop(1, T, crf_step, alpha0, unroll=True)
    final = alpha + end
    mxf = jnp.max(final, axis=-1, keepdims=True)
    denom_b = mxf + jnp.log(jnp.sum(jnp.exp(final - mxf), axis=-1,
                                    keepdims=True))              # (Bp, 1)
    denom = jnp.sum(denom_b * batch_valid, keepdims=True)        # (1, 1)

    # ---- 5) gold-path numerator via one-hot matmul (in-kernel, no HBM em) ----
    em = em_ref[...]
    maskv = mask_ref[...]
    onehot = (lax.broadcasted_iota(jnp.int32, (TB, Kp), 1)
              == tags_ref[...]).astype(jnp.float32)              # (TB, Kp)
    em_gold = jnp.sum(em * onehot, axis=-1, keepdims=True)       # (TB, 1)
    end_gold = jnp.sum(onehot * end, axis=-1, keepdims=True)     # (TB, 1)

    # t = 0: start[tag_0] + em[0, tag_0], zeroed for padded batch rows
    start_gold = jnp.sum(onehot[0:Bp, :] * start, axis=-1, keepdims=True)
    numerator = jnp.sum((start_gold + em_gold[0:Bp, :]) * batch_valid,
                        keepdims=True)                           # (1, 1)
    if T > 1:
        # t >= 1: (trans[tag_{t-1}, tag_t] + em[t, tag_t]) * mask[t]
        a_prev = jnp.dot(onehot[0:(T - 1) * Bp, :], trans,
                         preferred_element_type=jnp.float32)     # ((T-1)Bp, Kp)
        trans_gold = jnp.sum(a_prev * onehot[Bp:TB, :], axis=-1, keepdims=True)
        numerator = numerator + jnp.sum(
            (trans_gold + em_gold[Bp:TB, :]) * maskv[Bp:TB, :], keepdims=True)
        # end[tag_last]: last valid step t has mask[t]=1 and mask[t+1]=0
        is_last_head = maskv[0:(T - 1) * Bp, :] * (1.0 - maskv[Bp:TB, :])
        numerator = numerator + jnp.sum(
            is_last_head * end_gold[0:(T - 1) * Bp, :], keepdims=True)
    numerator = numerator + jnp.sum(
        maskv[(T - 1) * Bp:TB, :] * end_gold[(T - 1) * Bp:TB, :], keepdims=True)

    # loss = sum_b logZ_b - sum_b gold_score_b
    loss_ref[...] = denom - numerator


# ----------------------------------------------------------------------------
# pallas_call wrapper (single fused launch, scalar loss output)
# ----------------------------------------------------------------------------
def run_fused(emb_flat, mask_flat, tags_flat, p, *, T, Bp):
    TB, _ = emb_flat.shape
    H = p["whh_f"].shape[0]
    K = p["crf_trans"].shape[0]
    Kp = _round_up(max(K, LANES), LANES)
    padK = Kp - K

    # host-side weight plumbing (concat / pad / block-diag / bf16 cast, once)
    wih_cat = jnp.concatenate([p["wih_f"], p["wih_b"]],
                              axis=1).astype(jnp.bfloat16)        # (Din, 8H)
    zH = jnp.zeros((H, 4 * H), jnp.float32)
    whh_bd = jnp.concatenate(
        [jnp.concatenate([p["whh_f"], zH], axis=1),
         jnp.concatenate([zH, p["whh_b"]], axis=1)],
        axis=0).astype(jnp.bfloat16)                              # (2H, 8H)
    bias_cat = jnp.concatenate([p["b_f"], p["b_b"]], axis=1)      # (1, 8H) f32
    w2t = jnp.pad(p["h2t_w"], ((0, 0), (0, padK))).astype(jnp.bfloat16)
    b2t = jnp.pad(p["h2t_b"], ((0, 0), (0, padK)))
    start_p = jnp.pad(p["crf_start"], ((0, 0), (0, padK)), constant_values=NEG)
    end_p = jnp.pad(p["crf_end"], ((0, 0), (0, padK)), constant_values=NEG)
    trans_p = jnp.pad(p["crf_trans"], ((0, padK), (0, padK)),
                      constant_values=NEG)                        # (Kp, Kp) f32

    kernel = functools.partial(_fused_bilstm_crf_kernel, T=T, Bp=Bp, H=H)
    vmem = lambda: pl.BlockSpec(memory_space=pltpu.MemorySpace.VMEM)

    loss = pl.pallas_call(
        kernel,
        in_specs=[vmem() for _ in range(11)],
        out_specs=vmem(),
        out_shape=jax.ShapeDtypeStruct((1, 1), jnp.float32),
        scratch_shapes=[pltpu.VMEM((TB, 8 * H), jnp.float32),
                        pltpu.VMEM((TB, 2 * H), jnp.float32),
                        pltpu.VMEM((TB, Kp), jnp.float32)],
    )(emb_flat, wih_cat, whh_bd, bias_cat, w2t, b2t,
      start_p, end_p, trans_p, mask_flat, tags_flat)
    return loss


# ----------------------------------------------------------------------------
# Full forward: embeddings (plain JAX gathers) + one fused kernel call
# ----------------------------------------------------------------------------
def bilstm_crf_loss(params, x_tok, y_tags, pre_tags, pinyin_tags, mask=None):
    # Embedding lookups (gather) — plain JAX glue outside the kernel.
    char_e = jnp.take(params["embed"], x_tok, axis=0)                # (B, T, E)
    tag_e = jnp.take(params["tag_embed"], pre_tags, axis=0)          # (B, T, TE)
    pin_e = jnp.take(params["pinyin_embed"], pinyin_tags, axis=0)    # (B, T, PE)
    # TODO(synk): nn.Dropout(p=0.5) treated as identity (eval-mode forward).
    embedded = jnp.concatenate([char_e, pin_e, tag_e], axis=-1)      # (B, T, Din)
    B, T, Din = embedded.shape
    Bp = _round_up(max(B, SUBLANES), SUBLANES)   # pad batch to 8 sublanes

    # time-major, batch-padded layouts: row = t*Bp + b
    emb_p = jnp.zeros((Bp, T, Din), jnp.float32).at[:B].set(
        embedded.astype(jnp.float32))
    emb_flat = jnp.transpose(emb_p, (1, 0, 2)).reshape(T * Bp, Din)
    emb_flat = emb_flat.astype(jnp.bfloat16)

    # mask: padded batch rows are all-zero; mask[t=0] doubles as batch validity
    # (torchcrf requires mask[:, 0] == 1 for real sequences, contiguous prefix).
    if mask is None:
        mask_b = jnp.ones((B, T), jnp.float32)
    else:
        mask_b = mask.astype(jnp.float32)
    mask_p = jnp.zeros((Bp, T), jnp.float32).at[:B].set(mask_b)
    mask_flat = jnp.transpose(mask_p, (1, 0)).reshape(T * Bp, 1)

    tags_p = jnp.zeros((Bp, T), jnp.int32).at[:B].set(y_tags.astype(jnp.int32))
    tags_flat = jnp.transpose(tags_p, (1, 0)).reshape(T * Bp, 1)

    loss = run_fused(emb_flat, mask_flat, tags_flat, params, T=T, Bp=Bp)
    return loss[0, 0]


# ----------------------------------------------------------------------------
# Deterministic parameter init (shapes follow BiLSTM_CRF.__init__)
# ----------------------------------------------------------------------------
def init_params(key, vocab_size, E, TE, PE, num_pinyin, H, K):
    ks = jax.random.split(key, 14)
    u = lambda k, shape, s=0.1: jax.random.uniform(k, shape, jnp.float32, -s, s)
    Din = E + PE + TE
    embed = u(ks[0], (vocab_size, E))
    embed = embed.at[-2:].set(0.0)      # the two zero "pad" rows of new_matrix
    return dict(
        embed=embed,
        tag_embed=u(ks[1], (K, TE)),
        pinyin_embed=u(ks[2], (num_pinyin, PE)),
        # LSTM weights stored pre-transposed: (Din, 4H) / (H, 4H);
        # biases are b_ih + b_hh combined, shape (1, 4H). Gate order i,f,g,o.
        wih_f=u(ks[3], (Din, 4 * H)), whh_f=u(ks[4], (H, 4 * H)),
        b_f=u(ks[5], (1, 4 * H)),
        wih_b=u(ks[6], (Din, 4 * H)), whh_b=u(ks[7], (H, 4 * H)),
        b_b=u(ks[8], (1, 4 * H)),
        h2t_w=u(ks[9], (2 * H, K)), h2t_b=u(ks[10], (1, K)),
        crf_start=u(ks[11], (1, K)), crf_end=u(ks[12], (1, K)),
        crf_trans=u(ks[13], (K, K)),
    )


if __name__ == "__main__":
    B, T = 2, 8
    vocab_size, num_pinyin, num_tags = 20, 12, 5
    E, TE, PE = 16, 8, 8           # char / tag / pinyin embedding dims
    H = 32                         # hidden_size

    key = jax.random.PRNGKey(0)
    kp, kx, ky, kt, kq = jax.random.split(key, 5)
    params = init_params(kp, vocab_size, E, TE, PE, num_pinyin, H, num_tags)

    x = jax.random.randint(kx, (B, T), 0, vocab_size, dtype=jnp.int32)
    y = jax.random.randint(ky, (B, T), 0, num_tags, dtype=jnp.int32)
    pre_tags = jax.random.randint(kt, (B, T), 0, num_tags, dtype=jnp.int32)
    pinyin_tags = jax.random.randint(kq, (B, T), 0, num_pinyin, dtype=jnp.int32)

    loss_fn = jax.jit(bilstm_crf_loss)
    loss = loss_fn(params, x, y, pre_tags, pinyin_tags)
    jax.block_until_ready(loss)
    assert loss.shape == () and bool(jnp.isfinite(loss))
    print("KERNEL_OK")
</pallas_src>

<mosaic_0001>
module attributes {stable_mosaic.version = 11 : i64} {
  func.func @_fused_bilstm_crf_kernel(%arg0: memref<64x32xbf16, #tpu.memory_space<vmem>>, %arg1: memref<32x256xbf16, #tpu.memory_space<vmem>>, %arg2: memref<64x256xbf16, #tpu.memory_space<vmem>>, %arg3: memref<1x256xf32, #tpu.memory_space<vmem>>, %arg4: memref<64x128xbf16, #tpu.memory_space<vmem>>, %arg5: memref<1x128xf32, #tpu.memory_space<vmem>>, %arg6: memref<1x128xf32, #tpu.memory_space<vmem>>, %arg7: memref<1x128xf32, #tpu.memory_space<vmem>>, %arg8: memref<128x128xf32, #tpu.memory_space<vmem>>, %arg9: memref<64x1xf32, #tpu.memory_space<vmem>>, %arg10: memref<64x1xi32, #tpu.memory_space<vmem>>, %arg11: memref<1x1xf32, #tpu.memory_space<vmem>>, %arg12: memref<64x256xf32, #tpu.memory_space<vmem>>, %arg13: memref<64x64xf32, #tpu.memory_space<vmem>>, %arg14: memref<64x128xf32, #tpu.memory_space<vmem>>) attributes {dimension_semantics = [], scalar_prefetch = 0 : i64, scratch_operands = 3 : i64, tpu.core_type = #tpu.core_type<tc>} {
    %c0 = arith.constant 0 : index
    %c0_0 = arith.constant 0 : index
    %0 = vector.load %arg0[%c0, %c0_0] : memref<64x32xbf16, #tpu.memory_space<vmem>>, vector<64x32xbf16>
    %c0_1 = arith.constant 0 : index
    %c0_2 = arith.constant 0 : index
    %1 = vector.load %arg1[%c0_1, %c0_2] : memref<32x256xbf16, #tpu.memory_space<vmem>>, vector<32x256xbf16>
    %cst = arith.constant dense<0.000000e+00> : vector<64x256xf32>
    %2 = tpu.matmul %0, %1, %cst {dimension_numbers = #tpu.dot_dimension_numbers<[1], [0], [0], [1], [0, 0, 1, 1], [], []>} : vector<64x32xbf16>, vector<32x256xbf16>, vector<64x256xf32> -> vector<64x256xf32>
    %c0_3 = arith.constant 0 : index
    %c0_4 = arith.constant 0 : index
    %3 = vector.load %arg3[%c0_3, %c0_4] : memref<1x256xf32, #tpu.memory_space<vmem>>, vector<1x256xf32>
    %4 = vector.broadcast %3 : vector<1x256xf32> to vector<64x256xf32>
    %5 = arith.addf %2, %4 : vector<64x256xf32>
    %c0_5 = arith.constant 0 : index
    %c0_6 = arith.constant 0 : index
    %6 = vector.load %arg12[%c0_5, %c0_6] : memref<64x256xf32, #tpu.memory_space<vmem>>, vector<64x256xf32>
    tpu.vector_store %arg12[%c0_5, %c0_6], %5 {strides = array<i32>} : memref<64x256xf32, #tpu.memory_space<vmem>>, vector<64x256xf32>,
    %c0_7 = arith.constant 0 : index
    %c0_8 = arith.constant 0 : index
    %7 = vector.load %arg2[%c0_7, %c0_8] : memref<64x256xbf16, #tpu.memory_space<vmem>>, vector<64x256xbf16>
    %cst_9 = arith.constant 0.000000e+00 : f32
    %8 = vector.broadcast %cst_9 : f32 to vector<8x32xf32>
    %c0_i32 = arith.constant 0 : i32
    %c7_i32 = arith.constant 7 : i32
    %9 = arith.subi %c7_i32, %c0_i32 : i32
    %c8_i32 = arith.constant 8 : i32
    %10 = arith.muli %c0_i32, %c8_i32 : i32
    %11 = tpu.assume_multiple %10, 8 : i32
    %c8_i32_10 = arith.constant 8 : i32
    %12 = arith.muli %9, %c8_i32_10 : i32
    %13 = tpu.assume_multiple %12, 8 : i32
    %14 = arith.index_cast %11 : i32 to index
    %c0_11 = arith.constant 0 : index
    %15 = vector.load %arg12[%14, %c0_11] : memref<64x256xf32, #tpu.memory_space<vmem>>, vector<8x128xf32>
    %16 = arith.index_cast %13 : i32 to index
    %c128 = arith.constant 128 : index
    %17 = vector.load %arg12[%16, %c128] : memref<64x256xf32, #tpu.memory_space<vmem>>, vector<8x128xf32>
    %18 = tpu.concatenate %8, %8 in 1 : vector<8x32xf32>, vector<8x32xf32> -> vector<8x64xf32>
    %19 = arith.truncf %18 : vector<8x64xf32> to vector<8x64xbf16>
    %cst_12 = arith.constant dense<0.000000e+00> : vector<8x256xf32>
    %20 = tpu.matmul %19, %7, %cst_12 {dimension_numbers = #tpu.dot_dimension_numbers<[1], [0], [0], [1], [0, 0, 1, 1], [], []>} : vector<8x64xbf16>, vector<64x256xbf16>, vector<8x256xf32> -> vector<8x256xf32>
    %21 = vector.extract_strided_slice %20 {offsets = [0, 0], sizes = [8, 128], strides = [1, 1]} : vector<8x256xf32> to vector<8x128xf32>
    %22 = arith.addf %15, %21 : vector<8x128xf32>
    %23 = vector.extract_strided_slice %20 {offsets = [0, 128], sizes = [8, 128], strides = [1, 1]} : vector<8x256xf32> to vector<8x128xf32>
    %24 = arith.addf %17, %23 : vector<8x128xf32>
    %25 = arith.negf %22 : vector<8x128xf32>
    %26 = math.exp %25 : vector<8x128xf32>
    %cst_13 = arith.constant 1.000000e+00 : f32
    %27 = vector.broadcast %cst_13 : f32 to vector<8x128xf32>
    %28 = arith.addf %27, %26 : vector<8x128xf32>
    %29 = arith.divf %27, %28 : vector<8x128xf32>
    %30 = math.tanh %22 : vector<8x128xf32>
    %31 = arith.negf %24 : vector<8x128xf32>
    %32 = math.exp %31 : vector<8x128xf32>
    %cst_14 = arith.constant 1.000000e+00 : f32
    %33 = vector.broadcast %cst_14 : f32 to vector<8x128xf32>
    %34 = arith.addf %33, %32 : vector<8x128xf32>
    %35 = arith.divf %33, %34 : vector<8x128xf32>
    %36 = math.tanh %24 : vector<8x128xf32>
    %37 = vector.extract_strided_slice %29 {offsets = [0, 32], sizes = [8, 32], strides = [1, 1]} : vector<8x128xf32> to vector<8x32xf32>
    %38 = arith.mulf %37, %8 : vector<8x32xf32>
    %39 = vector.extract_strided_slice %29 {offsets = [0, 0], sizes = [8, 32], strides = [1, 1]} : vector<8x128xf32> to vector<8x32xf32>
    %40 = vector.extract_strided_slice %30 {offsets = [0, 64], sizes = [8, 32], strides = [1, 1]} : vector<8x128xf32> to vector<8x32xf32>
    %41 = arith.mulf %39, %40 : vector<8x32xf32>
    %42 = arith.addf %38, %41 : vector<8x32xf32>
    %43 = vector.extract_strided_slice %29 {offsets = [0, 96], sizes = [8, 32], strides = [1, 1]} : vector<8x128xf32> to vector<8x32xf32>
    %44 = math.tanh %42 : vector<8x32xf32>
    %45 = arith.mulf %43, %44 : vector<8x32xf32>
    %46 = vector.extract_strided_slice %35 {offsets = [0, 32], sizes = [8, 32], strides = [1, 1]} : vector<8x128xf32> to vector<8x32xf32>
    %47 = arith.mulf %46, %8 : vector<8x32xf32>
    %48 = vector.extract_strided_slice %35 {offsets = [0, 0], sizes = [8, 32], strides = [1, 1]} : vector<8x128xf32> to vector<8x32xf32>
    %49 = vector.extract_strided_slice %36 {offsets = [0, 64], sizes = [8, 32], strides = [1, 1]} : vector<8x128xf32> to vector<8x32xf32>
    %50 = arith.mulf %48, %49 : vector<8x32xf32>
    %51 = arith.addf %47, %50 : vector<8x32xf32>
    %52 = vector.extract_strided_slice %35 {offsets = [0, 96], sizes = [8, 32], strides = [1, 1]} : vector<8x128xf32> to vector<8x32xf32>
    %53 = math.tanh %51 : vector<8x32xf32>
    %54 = arith.mulf %52, %53 : vector<8x32xf32>
    %55 = arith.index_cast %11 : i32 to index
    %c0_15 = arith.constant 0 : index
    %56 = vector.load %arg13[%55, %c0_15] : memref<64x64xf32, #tpu.memory_space<vmem>>, vector<8x32xf32>
    tpu.vector_store %arg13[%55, %c0_15], %45 {strides = array<i32>} : memref<64x64xf32, #tpu.memory_space<vmem>>, vector<8x32xf32>,
    %57 = arith.index_cast %13 : i32 to index
    %c32 = arith.constant 32 : index
    %58 = vector.load %arg13[%57, %c32] : memref<64x64xf32, #tpu.memory_space<vmem>>, vector<8x32xf32>
    tpu.vector_store %arg13[%57, %c32], %54 {strides = array<i32>} : memref<64x64xf32, #tpu.memory_space<vmem>>, vector<8x32xf32>,
    %c1_i32 = arith.constant 1 : i32
    %c7_i32_16 = arith.constant 7 : i32
    %59 = arith.subi %c7_i32_16, %c1_i32 : i32
    %c8_i32_17 = arith.constant 8 : i32
    %60 = arith.muli %c1_i32, %c8_i32_17 : i32
    %61 = tpu.assume_multiple %60, 8 : i32
    %c8_i32_18 = arith.constant 8 : i32
    %62 = arith.muli %59, %c8_i32_18 : i32
    %63 = tpu.assume_multiple %62, 8 : i32
    %64 = arith.index_cast %61 : i32 to index
    %c0_19 = arith.constant 0 : index
    %65 = vector.load %arg12[%64, %c0_19] : memref<64x256xf32, #tpu.memory_space<vmem>>, vector<8x128xf32>
    %66 = arith.index_cast %63 : i32 to index
    %c128_20 = arith.constant 128 : index
    %67 = vector.load %arg12[%66, %c128_20] : memref<64x256xf32, #tpu.memory_space<vmem>>, vector<8x128xf32>
    %68 = tpu.concatenate %45, %54 in 1 : vector<8x32xf32>, vector<8x32xf32> -> vector<8x64xf32>
    %69 = arith.truncf %68 : vector<8x64xf32> to vector<8x64xbf16>
    %cst_21 = arith.constant dense<0.000000e+00> : vector<8x256xf32>
    %70 = tpu.matmul %69, %7, %cst_21 {dimension_numbers = #tpu.dot_dimension_numbers<[1], [0], [0], [1], [0, 0, 1, 1], [], []>} : vector<8x64xbf16>, vector<64x256xbf16>, vector<8x256xf32> -> vector<8x256xf32>
    %71 = vector.extract_strided_slice %70 {offsets = [0, 0], sizes = [8, 128], strides = [1, 1]} : vector<8x256xf32> to vector<8x128xf32>
    %72 = arith.addf %65, %71 : vector<8x128xf32>
    %73 = vector.extract_strided_slice %70 {offsets = [0, 128], sizes = [8, 128], strides = [1, 1]} : vector<8x256xf32> to vector<8x128xf32>
    %74 = arith.addf %67, %73 : vector<8x128xf32>
    %75 = arith.negf %72 : vector<8x128xf32>
    %76 = math.exp %75 : vector<8x128xf32>
    %cst_22 = arith.constant 1.000000e+00 : f32
    %77 = vector.broadcast %cst_22 : f32 to vector<8x128xf32>
    %78 = arith.addf %77, %76 : vector<8x128xf32>
    %79 = arith.divf %77, %78 : vector<8x128xf32>
    %80 = math.tanh %72 : vector<8x128xf32>
    %81 = arith.negf %74 : vector<8x128xf32>
    %82 = math.exp %81 : vector<8x128xf32>
    %cst_23 = arith.constant 1.000000e+00 : f32
    %83 = vector.broadcast %cst_23 : f32 to vector<8x128xf32>
    %84 = arith.addf %83, %82 : vector<8x128xf32>
    %85 = arith.divf %83, %84 : vector<8x128xf32>
    %86 = math.tanh %74 : vector<8x128xf32>
    %87 = vector.extract_strided_slice %79 {offsets = [0, 32], sizes = [8, 32], strides = [1, 1]} : vector<8x128xf32> to vector<8x32xf32>
    %88 = arith.mulf %87, %42 : vector<8x32xf32>
    %89 = vector.extract_strided_slice %79 {offsets = [0, 0], sizes = [8, 32], strides = [1, 1]} : vector<8x128xf32> to vector<8x32xf32>
    %90 = vector.extract_strided_slice %80 {offsets = [0, 64], sizes = [8, 32], strides = [1, 1]} : vector<8x128xf32> to vector<8x32xf32>
    %91 = arith.mulf %89, %90 : vector<8x32xf32>
    %92 = arith.addf %88, %91 : vector<8x32xf32>
    %93 = vector.extract_strided_slice %79 {offsets = [0, 96], sizes = [8, 32], strides = [1, 1]} : vector<8x128xf32> to vector<8x32xf32>
    %94 = math.tanh %92 : vector<8x32xf32>
    %95 = arith.mulf %93, %94 : vector<8x32xf32>
    %96 = vector.extract_strided_slice %85 {offsets = [0, 32], sizes = [8, 32], strides = [1, 1]} : vector<8x128xf32> to vector<8x32xf32>
    %97 = arith.mulf %96, %51 : vector<8x32xf32>
    %98 = vector.extract_strided_slice %85 {offsets = [0, 0], sizes = [8, 32], strides = [1, 1]} : vector<8x128xf32> to vector<8x32xf32>
    %99 = vector.extract_strided_slice %86 {offsets = [0, 64], sizes = [8, 32], strides = [1, 1]} : vector<8x128xf32> to vector<8x32xf32>
    %100 = arith.mulf %98, %99 : vector<8x32xf32>
    %101 = arith.addf %97, %100 : vector<8x32xf32>
    %102 = vector.extract_strided_slice %85 {offsets = [0, 96], sizes = [8, 32], strides = [1, 1]} : vector<8x128xf32> to vector<8x32xf32>
    %103 = math.tanh %101 : vector<8x32xf32>
    %104 = arith.mulf %102, %103 : vector<8x32xf32>
    %105 = arith.index_cast %61 : i32 to index
    %c0_24 = arith.constant 0 : index
    %106 = vector.load %arg13[%105, %c0_24] : memref<64x64xf32, #tpu.memory_space<vmem>>, vector<8x32xf32>
    tpu.vector_store %arg13[%105, %c0_24], %95 {strides = array<i32>} : memref<64x64xf32, #tpu.memory_space<vmem>>, vector<8x32xf32>,
    %107 = arith.index_cast %63 : i32 to index
    %c32_25 = arith.constant 32 : index
    %108 = vector.load %arg13[%107, %c32_25] : memref<64x64xf32, #tpu.memory_space<vmem>>, vector<8x32xf32>
    tpu.vector_store %arg13[%107, %c32_25], %104 {strides = array<i32>} : memref<64x64xf32, #tpu.memory_space<vmem>>, vector<8x32xf32>,
    %c2_i32 = arith.constant 2 : i32
    %c7_i32_26 = arith.constant 7 : i32
    %109 = arith.subi %c7_i32_26, %c2_i32 : i32
    %c8_i32_27 = arith.constant 8 : i32
    %110 = arith.muli %c2_i32, %c8_i32_27 : i32
    %111 = tpu.assume_multiple %110, 8 : i32
    %c8_i32_28 = arith.constant 8 : i32
    %112 = arith.muli %109, %c8_i32_28 : i32
    %113 = tpu.assume_multiple %112, 8 : i32
    %114 = arith.index_cast %111 : i32 to index
    %c0_29 = arith.constant 0 : index
    %115 = vector.load %arg12[%114, %c0_29] : memref<64x256xf32, #tpu.memory_space<vmem>>, vector<8x128xf32>
    %116 = arith.index_cast %113 : i32 to index
    %c128_30 = arith.constant 128 : index
    %117 = vector.load %arg12[%116, %c128_30] : memref<64x256xf32, #tpu.memory_space<vmem>>, vector<8x128xf32>
    %118 = tpu.concatenate %95, %104 in 1 : vector<8x32xf32>, vector<8x32xf32> -> vector<8x64xf32>
    %119 = arith.truncf %118 : vector<8x64xf32> to vector<8x64xbf16>
    %cst_31 = arith.constant dense<0.000000e+00> : vector<8x256xf32>
    %120 = tpu.matmul %119, %7, %cst_31 {dimension_numbers = #tpu.dot_dimension_numbers<[1], [0], [0], [1], [0, 0, 1, 1], [], []>} : vector<8x64xbf16>, vector<64x256xbf16>, vector<8x256xf32> -> vector<8x256xf32>
    %121 = vector.extract_strided_slice %120 {offsets = [0, 0], sizes = [8, 128], strides = [1, 1]} : vector<8x256xf32> to vector<8x128xf32>
    %122 = arith.addf %115, %121 : vector<8x128xf32>
    %123 = vector.extract_strided_slice %120 {offsets = [0, 128], sizes = [8, 128], strides = [1, 1]} : vector<8x256xf32> to vector<8x128xf32>
    %124 = arith.addf %117, %123 : vector<8x128xf32>
    %125 = arith.negf %122 : vector<8x128xf32>
    %126 = math.exp %125 : vector<8x128xf32>
    %cst_32 = arith.constant 1.000000e+00 : f32
    %127 = vector.broadcast %cst_32 : f32 to vector<8x128xf32>
    %128 = arith.addf %127, %126 : vector<8x128xf32>
    %129 = arith.divf %127, %128 : vector<8x128xf32>
    %130 = math.tanh %122 : vector<8x128xf32>
    %131 = arith.negf %124 : vector<8x128xf32>
    %132 = math.exp %131 : vector<8x128xf32>
    %cst_33 = arith.constant 1.000000e+00 : f32
    %133 = vector.broadcast %cst_33 : f32 to vector<8x128xf32>
    %134 = arith.addf %133, %132 : vector<8x128xf32>
    %135 = arith.divf %133, %134 : vector<8x128xf32>
    %136 = math.tanh %124 : vector<8x128xf32>
    %137 = vector.extract_strided_slice %129 {offsets = [0, 32], sizes = [8, 32], strides = [1, 1]} : vector<8x128xf32> to vector<8x32xf32>
    %138 = arith.mulf %137, %92 : vector<8x32xf32>
    %139 = vector.extract_strided_slice %129 {offsets = [0, 0], sizes = [8, 32], strides = [1, 1]} : vector<8x128xf32> to vector<8x32xf32>
    %140 = vector.extract_strided_slice %130 {offsets = [0, 64], sizes = [8, 32], strides = [1, 1]} : vector<8x128xf32> to vector<8x32xf32>
    %141 = arith.mulf %139, %140 : vector<8x32xf32>
    %142 = arith.addf %138, %141 : vector<8x32xf32>
    %143 = vector.extract_strided_slice %129 {offsets = [0, 96], sizes = [8, 32], strides = [1, 1]} : vector<8x128xf32> to vector<8x32xf32>
    %144 = math.tanh %142 : vector<8x32xf32>
    %145 = arith.mulf %143, %144 : vector<8x32xf32>
    %146 = vector.extract_strided_slice %135 {offsets = [0, 32], sizes = [8, 32], strides = [1, 1]} : vector<8x128xf32> to vector<8x32xf32>
    %147 = arith.mulf %146, %101 : vector<8x32xf32>
    %148 = vector.extract_strided_slice %135 {offsets = [0, 0], sizes = [8, 32], strides = [1, 1]} : vector<8x128xf32> to vector<8x32xf32>
    %149 = vector.extract_strided_slice %136 {offsets = [0, 64], sizes = [8, 32], strides = [1, 1]} : vector<8x128xf32> to vector<8x32xf32>
    %150 = arith.mulf %148, %149 : vector<8x32xf32>
    %151 = arith.addf %147, %150 : vector<8x32xf32>
    %152 = vector.extract_strided_slice %135 {offsets = [0, 96], sizes = [8, 32], strides = [1, 1]} : vector<8x128xf32> to vector<8x32xf32>
    %153 = math.tanh %151 : vector<8x32xf32>
    %154 = arith.mulf %152, %153 : vector<8x32xf32>
    %155 = arith.index_cast %111 : i32 to index
    %c0_34 = arith.constant 0 : index
    %156 = vector.load %arg13[%155, %c0_34] : memref<64x64xf32, #tpu.memory_space<vmem>>, vector<8x32xf32>
    tpu.vector_store %arg13[%155, %c0_34], %145 {strides = array<i32>} : memref<64x64xf32, #tpu.memory_space<vmem>>, vector<8x32xf32>,
    %157 = arith.index_cast %113 : i32 to index
    %c32_35 = arith.constant 32 : index
    %158 = vector.load %arg13[%157, %c32_35] : memref<64x64xf32, #tpu.memory_space<vmem>>, vector<8x32xf32>
    tpu.vector_store %arg13[%157, %c32_35], %154 {strides = array<i32>} : memref<64x64xf32, #tpu.memory_space<vmem>>, vector<8x32xf32>,
    %c3_i32 = arith.constant 3 : i32
    %c7_i32_36 = arith.constant 7 : i32
    %159 = arith.subi %c7_i32_36, %c3_i32 : i32
    %c8_i32_37 = arith.constant 8 : i32
    %160 = arith.muli %c3_i32, %c8_i32_37 : i32
    %161 = tpu.assume_multiple %160, 8 : i32
    %c8_i32_38 = arith.constant 8 : i32
    %162 = arith.muli %159, %c8_i32_38 : i32
    %163 = tpu.assume_multiple %162, 8 : i32
    %164 = arith.index_cast %161 : i32 to index
    %c0_39 = arith.constant 0 : index
    %165 = vector.load %arg12[%164, %c0_39] : memref<64x256xf32, #tpu.memory_space<vmem>>, vector<8x128xf32>
    %166 = arith.index_cast %163 : i32 to index
    %c128_40 = arith.constant 128 : index
    %167 = vector.load %arg12[%166, %c128_40] : memref<64x256xf32, #tpu.memory_space<vmem>>, vector<8x128xf32>
    %168 = tpu.concatenate %145, %154 in 1 : vector<8x32xf32>, vector<8x32xf32> -> vector<8x64xf32>
    %169 = arith.truncf %168 : vector<8x64xf32> to vector<8x64xbf16>
    %cst_41 = arith.constant dense<0.000000e+00> : vector<8x256xf32>
    %170 = tpu.matmul %169, %7, %cst_41 {dimension_numbers = #tpu.dot_dimension_numbers<[1], [0], [0], [1], [0, 0, 1, 1], [], []>} : vector<8x64xbf16>, vector<64x256xbf16>, vector<8x256xf32> -> vector<8x256xf32>
    %171 = vector.extract_strided_slice %170 {offsets = [0, 0], sizes = [8, 128], strides = [1, 1]} : vector<8x256xf32> to vector<8x128xf32>
    %172 = arith.addf %165, %171 : vector<8x128xf32>
    %173 = vector.extract_strided_slice %170 {offsets = [0, 128], sizes = [8, 128], strides = [1, 1]} : vector<8x256xf32> to vector<8x128xf32>
    %174 = arith.addf %167, %173 : vector<8x128xf32>
    %175 = arith.negf %172 : vector<8x128xf32>
    %176 = math.exp %175 : vector<8x128xf32>
    %cst_42 = arith.constant 1.000000e+00 : f32
    %177 = vector.broadcast %cst_42 : f32 to vector<8x128xf32>
    %178 = arith.addf %177, %176 : vector<8x128xf32>
    %179 = arith.divf %177, %178 : vector<8x128xf32>
    %180 = math.tanh %172 : vector<8x128xf32>
    %181 = arith.negf %174 : vector<8x128xf32>
    %182 = math.exp %181 : vector<8x128xf32>
    %cst_43 = arith.constant 1.000000e+00 : f32
    %183 = vector.broadcast %cst_43 : f32 to vector<8x128xf32>
    %184 = arith.addf %183, %182 : vector<8x128xf32>
    %185 = arith.divf %183, %184 : vector<8x128xf32>
    %186 = math.tanh %174 : vector<8x128xf32>
    %187 = vector.extract_strided_slice %179 {offsets = [0, 32], sizes = [8, 32], strides = [1, 1]} : vector<8x128xf32> to vector<8x32xf32>
    %188 = arith.mulf %187, %142 : vector<8x32xf32>
    %189 = vector.extract_strided_slice %179 {offsets = [0, 0], sizes = [8, 32], strides = [1, 1]} : vector<8x128xf32> to vector<8x32xf32>
    %190 = vector.extract_strided_slice %180 {offsets = [0, 64], sizes = [8, 32], strides = [1, 1]} : vector<8x128xf32> to vector<8x32xf32>
    %191 = arith.mulf %189, %190 : vector<8x32xf32>
    %192 = arith.addf %188, %191 : vector<8x32xf32>
    %193 = vector.extract_strided_slice %179 {offsets = [0, 96], sizes = [8, 32], strides = [1, 1]} : vector<8x128xf32> to vector<8x32xf32>
    %194 = math.tanh %192 : vector<8x32xf32>
    %195 = arith.mulf %193, %194 : vector<8x32xf32>
    %196 = vector.extract_strided_slice %185 {offsets = [0, 32], sizes = [8, 32], strides = [1, 1]} : vector<8x128xf32> to vector<8x32xf32>
    %197 = arith.mulf %196, %151 : vector<8x32xf32>
    %198 = vector.extract_strided_slice %185 {offsets = [0, 0], sizes = [8, 32], strides = [1, 1]} : vector<8x128xf32> to vector<8x32xf32>
    %199 = vector.extract_strided_slice %186 {offsets = [0, 64], sizes = [8, 32], strides = [1, 1]} : vector<8x128xf32> to vector<8x32xf32>
    %200 = arith.mulf %198, %199 : vector<8x32xf32>
    %201 = arith.addf %197, %200 : vector<8x32xf32>
    %202 = vector.extract_strided_slice %185 {offsets = [0, 96], sizes = [8, 32], strides = [1, 1]} : vector<8x128xf32> to vector<8x32xf32>
    %203 = math.tanh %201 : vector<8x32xf32>
    %204 = arith.mulf %202, %203 : vector<8x32xf32>
    %205 = arith.index_cast %161 : i32 to index
    %c0_44 = arith.constant 0 : index
    %206 = vector.load %arg13[%205, %c0_44] : memref<64x64xf32, #tpu.memory_space<vmem>>, vector<8x32xf32>
    tpu.vector_store %arg13[%205, %c0_44], %195 {strides = array<i32>} : memref<64x64xf32, #tpu.memory_space<vmem>>, vector<8x32xf32>,
    %207 = arith.index_cast %163 : i32 to index
    %c32_45 = arith.constant 32 : index
    %208 = vector.load %arg13[%207, %c32_45] : memref<64x64xf32, #tpu.memory_space<vmem>>, vector<8x32xf32>
    tpu.vector_store %arg13[%207, %c32_45], %204 {strides = array<i32>} : memref<64x64xf32, #tpu.memory_space<vmem>>, vector<8x32xf32>,
    %c4_i32 = arith.constant 4 : i32
    %c7_i32_46 = arith.constant 7 : i32
    %209 = arith.subi %c7_i32_46, %c4_i32 : i32
    %c8_i32_47 = arith.constant 8 : i32
    %210 = arith.muli %c4_i32, %c8_i32_47 : i32
    %211 = tpu.assume_multiple %210, 8 : i32
    %c8_i32_48 = arith.constant 8 : i32
    %212 = arith.muli %209, %c8_i32_48 : i32
    %213 = tpu.assume_multiple %212, 8 : i32
    %214 = arith.index_cast %211 : i32 to index
    %c0_49 = arith.constant 0 : index
    %215 = vector.load %arg12[%214, %c0_49] : memref<64x256xf32, #tpu.memory_space<vmem>>, vector<8x128xf32>
    %216 = arith.index_cast %213 : i32 to index
    %c128_50 = arith.constant 128 : index
    %217 = vector.load %arg12[%216, %c128_50] : memref<64x256xf32, #tpu.memory_space<vmem>>, vector<8x128xf32>
    %218 = tpu.concatenate %195, %204 in 1 : vector<8x32xf32>, vector<8x32xf32> -> vector<8x64xf32>
    %219 = arith.truncf %218 : vector<8x64xf32> to vector<8x64xbf16>
    %cst_51 = arith.constant dense<0.000000e+00> : vector<8x256xf32>
    %220 = tpu.matmul %219, %7, %cst_51 {dimension_numbers = #tpu.dot_dimension_numbers<[1], [0], [0], [1], [0, 0, 1, 1], [], []>} : vector<8x64xbf16>, vector<64x256xbf16>, vector<8x256xf32> -> vector<8x256xf32>
    %221 = vector.extract_strided_slice %220 {offsets = [0, 0], sizes = [8, 128], strides = [1, 1]} : vector<8x256xf32> to vector<8x128xf32>
    %222 = arith.addf %215, %221 : vector<8x128xf32>
    %223 = vector.extract_strided_slice %220 {offsets = [0, 128], sizes = [8, 128], strides = [1, 1]} : vector<8x256xf32> to vector<8x128xf32>
    %224 = arith.addf %217, %223 : vector<8x128xf32>
    %225 = arith.negf %222 : vector<8x128xf32>
    %226 = math.exp %225 : vector<8x128xf32>
    %cst_52 = arith.constant 1.000000e+00 : f32
    %227 = vector.broadcast %cst_52 : f32 to vector<8x128xf32>
    %228 = arith.addf %227, %226 : vector<8x128xf32>
    %229 = arith.divf %227, %228 : vector<8x128xf32>
    %230 = math.tanh %222 : vector<8x128xf32>
    %231 = arith.negf %224 : vector<8x128xf32>
    %232 = math.exp %231 : vector<8x128xf32>
    %cst_53 = arith.constant 1.000000e+00 : f32
    %233 = vector.broadcast %cst_53 : f32 to vector<8x128xf32>
    %234 = arith.addf %233, %232 : vector<8x128xf32>
    %235 = arith.divf %233, %234 : vector<8x128xf32>
    %236 = math.tanh %224 : vector<8x128xf32>
    %237 = vector.extract_strided_slice %229 {offsets = [0, 32], sizes = [8, 32], strides = [1, 1]} : vector<8x128xf32> to vector<8x32xf32>
    %238 = arith.mulf %237, %192 : vector<8x32xf32>
    %239 = vector.extract_strided_slice %229 {offsets = [0, 0], sizes = [8, 32], strides = [1, 1]} : vector<8x128xf32> to vector<8x32xf32>
    %240 = vector.extract_strided_slice %230 {offsets = [0, 64], sizes = [8, 32], strides = [1, 1]} : vector<8x128xf32> to vector<8x32xf32>
    %241 = arith.mulf %239, %240 : vector<8x32xf32>
    %242 = arith.addf %238, %241 : vector<8x32xf32>
    %243 = vector.extract_strided_slice %229 {offsets = [0, 96], sizes = [8, 32], strides = [1, 1]} : vector<8x128xf32> to vector<8x32xf32>
    %244 = math.tanh %242 : vector<8x32xf32>
    %245 = arith.mulf %243, %244 : vector<8x32xf32>
    %246 = vector.extract_strided_slice %235 {offsets = [0, 32], sizes = [8, 32], strides = [1, 1]} : vector<8x128xf32> to vector<8x32xf32>
    %247 = arith.mulf %246, %201 : vector<8x32xf32>
    %248 = vector.extract_strided_slice %235 {offsets = [0, 0], sizes = [8, 32], strides = [1, 1]} : vector<8x128xf32> to vector<8x32xf32>
    %249 = vector.extract_strided_slice %236 {offsets = [0, 64], sizes = [8, 32], strides = [1, 1]} : vector<8x128xf32> to vector<8x32xf32>
    %250 = arith.mulf %248, %249 : vector<8x32xf32>
    %251 = arith.addf %247, %250 : vector<8x32xf32>
    %252 = vector.extract_strided_slice %235 {offsets = [0, 96], sizes = [8, 32], strides = [1, 1]} : vector<8x128xf32> to vector<8x32xf32>
    %253 = math.tanh %251 : vector<8x32xf32>
    %254 = arith.mulf %252, %253 : vector<8x32xf32>
    %255 = arith.index_cast %211 : i32 to index
    %c0_54 = arith.constant 0 : index
    %256 = vector.load %arg13[%255, %c0_54] : memref<64x64xf32, #tpu.memory_space<vmem>>, vector<8x32xf32>
    tpu.vector_store %arg13[%255, %c0_54], %245 {strides = array<i32>} : memref<64x64xf32, #tpu.memory_space<vmem>>, vector<8x32xf32>,
    %257 = arith.index_cast %213 : i32 to index
    %c32_55 = arith.constant 32 : index
    %258 = vector.load %arg13[%257, %c32_55] : memref<64x64xf32, #tpu.memory_space<vmem>>, vector<8x32xf32>
    tpu.vector_store %arg13[%257, %c32_55], %254 {strides = array<i32>} : memref<64x64xf32, #tpu.memory_space<vmem>>, vector<8x32xf32>,
    %c5_i32 = arith.constant 5 : i32
    %c7_i32_56 = arith.constant 7 : i32
    %259 = arith.subi %c7_i32_56, %c5_i32 : i32
    %c8_i32_57 = arith.constant 8 : i32
    %260 = arith.muli %c5_i32, %c8_i32_57 : i32
    %261 = tpu.assume_multiple %260, 8 : i32
    %c8_i32_58 = arith.constant 8 : i32
    %262 = arith.muli %259, %c8_i32_58 : i32
    %263 = tpu.assume_multiple %262, 8 : i32
    %264 = arith.index_cast %261 : i32 to index
    %c0_59 = arith.constant 0 : index
    %265 = vector.load %arg12[%264, %c0_59] : memref<64x256xf32, #tpu.memory_space<vmem>>, vector<8x128xf32>
    %266 = arith.index_cast %263 : i32 to index
    %c128_60 = arith.constant 128 : index
    %267 = vector.load %arg12[%266, %c128_60] : memref<64x256xf32, #tpu.memory_space<vmem>>, vector<8x128xf32>
    %268 = tpu.concatenate %245, %254 in 1 : vector<8x32xf32>, vector<8x32xf32> -> vector<8x64xf32>
    %269 = arith.truncf %268 : vector<8x64xf32> to vector<8x64xbf16>
    %cst_61 = arith.constant dense<0.000000e+00> : vector<8x256xf32>
    %270 = tpu.matmul %269, %7, %cst_61 {dimension_numbers = #tpu.dot_dimension_numbers<[1], [0], [0], [1], [0, 0, 1, 1], [], []>} : vector<8x64xbf16>, vector<64x256xbf16>, vector<8x256xf32> -> vector<8x256xf32>
    %271 = vector.extract_strided_slice %270 {offsets = [0, 0], sizes = [8, 128], strides = [1, 1]} : vector<8x256xf32> to vector<8x128xf32>
    %272 = arith.addf %265, %271 : vector<8x128xf32>
    %273 = vector.extract_strided_slice %270 {offsets = [0, 128], sizes = [8, 128], strides = [1, 1]} : vector<8x256xf32> to vector<8x128xf32>
    %274 = arith.addf %267, %273 : vector<8x128xf32>
    %275 = arith.negf %272 : vector<8x128xf32>
    %276 = math.exp %275 : vector<8x128xf32>
    %cst_62 = arith.constant 1.000000e+00 : f32
    %277 = vector.broadcast %cst_62 : f32 to vector<8x128xf32>
    %278 = arith.addf %277, %276 : vector<8x128xf32>
    %279 = arith.divf %277, %278 : vector<8x128xf32>
    %280 = math.tanh %272 : vector<8x128xf32>
    %281 = arith.negf %274 : vector<8x128xf32>
    %282 = math.exp %281 : vector<8x128xf32>
    %cst_63 = arith.constant 1.000000e+00 : f32
    %283 = vector.broadcast %cst_63 : f32 to vector<8x128xf32>
    %284 = arith.addf %283, %282 : vector<8x128xf32>
    %285 = arith.divf %283, %284 : vector<8x128xf32>
    %286 = math.tanh %274 : vector<8x128xf32>
    %287 = vector.extract_strided_slice %279 {offsets = [0, 32], sizes = [8, 32], strides = [1, 1]} : vector<8x128xf32> to vector<8x32xf32>
    %288 = arith.mulf %287, %242 : vector<8x32xf32>
    %289 = vector.extract_strided_slice %279 {offsets = [0, 0], sizes = [8, 32], strides = [1, 1]} : vector<8x128xf32> to vector<8x32xf32>
    %290 = vector.extract_strided_slice %280 {offsets = [0, 64], sizes = [8, 32], strides = [1, 1]} : vector<8x128xf32> to vector<8x32xf32>
    %291 = arith.mulf %289, %290 : vector<8x32xf32>
    %292 = arith.addf %288, %291 : vector<8x32xf32>
    %293 = vector.extract_strided_slice %279 {offsets = [0, 96], sizes = [8, 32], strides = [1, 1]} : vector<8x128xf32> to vector<8x32xf32>
    %294 = math.tanh %292 : vector<8x32xf32>
    %295 = arith.mulf %293, %294 : vector<8x32xf32>
    %296 = vector.extract_strided_slice %285 {offsets = [0, 32], sizes = [8, 32], strides = [1, 1]} : vector<8x128xf32> to vector<8x32xf32>
    %297 = arith.mulf %296, %251 : vector<8x32xf32>
    %298 = vector.extract_strided_slice %285 {offsets = [0, 0], sizes = [8, 32], strides = [1, 1]} : vector<8x128xf32> to vector<8x32xf32>
    %299 = vector.extract_strided_slice %286 {offsets = [0, 64], sizes = [8, 32], strides = [1, 1]} : vector<8x128xf32> to vector<8x32xf32>
    %300 = arith.mulf %298, %299 : vector<8x32xf32>
    %301 = arith.addf %297, %300 : vector<8x32xf32>
    %302 = vector.extract_strided_slice %285 {offsets = [0, 96], sizes = [8, 32], strides = [1, 1]} : vector<8x128xf32> to vector<8x32xf32>
    %303 = math.tanh %301 : vector<8x32xf32>
    %304 = arith.mulf %302, %303 : vector<8x32xf32>
    %305 = arith.index_cast %261 : i32 to index
    %c0_64 = arith.constant 0 : index
    %306 = vector.load %arg13[%305, %c0_64] : memref<64x64xf32, #tpu.memory_space<vmem>>, vector<8x32xf32>
    tpu.vector_store %arg13[%305, %c0_64], %295 {strides = array<i32>} : memref<64x64xf32, #tpu.memory_space<vmem>>, vector<8x32xf32>,
    %307 = arith.index_cast %263 : i32 to index
    %c32_65 = arith.constant 32 : index
    %308 = vector.load %arg13[%307, %c32_65] : memref<64x64xf32, #tpu.memory_space<vmem>>, vector<8x32xf32>
    tpu.vector_store %arg13[%307, %c32_65], %304 {strides = array<i32>} : memref<64x64xf32, #tpu.memory_space<vmem>>, vector<8x32xf32>,
    %c6_i32 = arith.constant 6 : i32
    %c7_i32_66 = arith.constant 7 : i32
    %309 = arith.subi %c7_i32_66, %c6_i32 : i32
    %c8_i32_67 = arith.constant 8 : i32
    %310 = arith.muli %c6_i32, %c8_i32_67 : i32
    %311 = tpu.assume_multiple %310, 8 : i32
    %c8_i32_68 = arith.constant 8 : i32
    %312 = arith.muli %309, %c8_i32_68 : i32
    %313 = tpu.assume_multiple %312, 8 : i32
    %314 = arith.index_cast %311 : i32 to index
    %c0_69 = arith.constant 0 : index
    %315 = vector.load %arg12[%314, %c0_69] : memref<64x256xf32, #tpu.memory_space<vmem>>, vector<8x128xf32>
    %316 = arith.index_cast %313 : i32 to index
    %c128_70 = arith.constant 128 : index
    %317 = vector.load %arg12[%316, %c128_70] : memref<64x256xf32, #tpu.memory_space<vmem>>, vector<8x128xf32>
    %318 = tpu.concatenate %295, %304 in 1 : vector<8x32xf32>, vector<8x32xf32> -> vector<8x64xf32>
    %319 = arith.truncf %318 : vector<8x64xf32> to vector<8x64xbf16>
    %cst_71 = arith.constant dense<0.000000e+00> : vector<8x256xf32>
    %320 = tpu.matmul %319, %7, %cst_71 {dimension_numbers = #tpu.dot_dimension_numbers<[1], [0], [0], [1], [0, 0, 1, 1], [], []>} : vector<8x64xbf16>, vector<64x256xbf16>, vector<8x256xf32> -> vector<8x256xf32>
    %321 = vector.extract_strided_slice %320 {offsets = [0, 0], sizes = [8, 128], strides = [1, 1]} : vector<8x256xf32> to vector<8x128xf32>
    %322 = arith.addf %315, %321 : vector<8x128xf32>
    %323 = vector.extract_strided_slice %320 {offsets = [0, 128], sizes = [8, 128], strides = [1, 1]} : vector<8x256xf32> to vector<8x128xf32>
    %324 = arith.addf %317, %323 : vector<8x128xf32>
    %325 = arith.negf %322 : vector<8x128xf32>
    %326 = math.exp %325 : vector<8x128xf32>
    %cst_72 = arith.constant 1.000000e+00 : f32
    %327 = vector.broadcast %cst_72 : f32 to vector<8x128xf32>
    %328 = arith.addf %327, %326 : vector<8x128xf32>
    %329 = arith.divf %327, %328 : vector<8x128xf32>
    %330 = math.tanh %322 : vector<8x128xf32>
    %331 = arith.negf %324 : vector<8x128xf32>
    %332 = math.exp %331 : vector<8x128xf32>
    %cst_73 = arith.constant 1.000000e+00 : f32
    %333 = vector.broadcast %cst_73 : f32 to vector<8x128xf32>
    %334 = arith.addf %333, %332 : vector<8x128xf32>
    %335 = arith.divf %333, %334 : vector<8x128xf32>
    %336 = math.tanh %324 : vector<8x128xf32>
    %337 = vector.extract_strided_slice %329 {offsets = [0, 32], sizes = [8, 32], strides = [1, 1]} : vector<8x128xf32> to vector<8x32xf32>
    %338 = arith.mulf %337, %292 : vector<8x32xf32>
    %339 = vector.extract_strided_slice %329 {offsets = [0, 0], sizes = [8, 32], strides = [1, 1]} : vector<8x128xf32> to vector<8x32xf32>
    %340 = vector.extract_strided_slice %330 {offsets = [0, 64], sizes = [8, 32], strides = [1, 1]} : vector<8x128xf32> to vector<8x32xf32>
    %341 = arith.mulf %339, %340 : vector<8x32xf32>
    %342 = arith.addf %338, %341 : vector<8x32xf32>
    %343 = vector.extract_strided_slice %329 {offsets = [0, 96], sizes = [8, 32], strides = [1, 1]} : vector<8x128xf32> to vector<8x32xf32>
    %344 = math.tanh %342 : vector<8x32xf32>
    %345 = arith.mulf %343, %344 : vector<8x32xf32>
    %346 = vector.extract_strided_slice %335 {offsets = [0, 32], sizes = [8, 32], strides = [1, 1]} : vector<8x128xf32> to vector<8x32xf32>
    %347 = arith.mulf %346, %301 : vector<8x32xf32>
    %348 = vector.extract_strided_slice %335 {offsets = [0, 0], sizes = [8, 32], strides = [1, 1]} : vector<8x128xf32> to vector<8x32xf32>
    %349 = vector.extract_strided_slice %336 {offsets = [0, 64], sizes = [8, 32], strides = [1, 1]} : vector<8x128xf32> to vector<8x32xf32>
    %350 = arith.mulf %348, %349 : vector<8x32xf32>
    %351 = arith.addf %347, %350 : vector<8x32xf32>
    %352 = vector.extract_strided_slice %335 {offsets = [0, 96], sizes = [8, 32], strides = [1, 1]} : vector<8x128xf32> to vector<8x32xf32>
    %353 = math.tanh %351 : vector<8x32xf32>
    %354 = arith.mulf %352, %353 : vector<8x32xf32>
    %355 = arith.index_cast %311 : i32 to index
    %c0_74 = arith.constant 0 : index
    %356 = vector.load %arg13[%355, %c0_74] : memref<64x64xf32, #tpu.memory_space<vmem>>, vector<8x32xf32>
    tpu.vector_store %arg13[%355, %c0_74], %345 {strides = array<i32>} : memref<64x64xf32, #tpu.memory_space<vmem>>, vector<8x32xf32>,
    %357 = arith.index_cast %313 : i32 to index
    %c32_75 = arith.constant 32 : index
    %358 = vector.load %arg13[%357, %c32_75] : memref<64x64xf32, #tpu.memory_space<vmem>>, vector<8x32xf32>
    tpu.vector_store %arg13[%357, %c32_75], %354 {strides = array<i32>} : memref<64x64xf32, #tpu.memory_space<vmem>>, vector<8x32xf32>,
    %c7_i32_76 = arith.constant 7 : i32
    %c7_i32_77 = arith.constant 7 : i32
    %359 = arith.subi %c7_i32_77, %c7_i32_76 : i32
    %c8_i32_78 = arith.constant 8 : i32
    %360 = arith.muli %c7_i32_76, %c8_i32_78 : i32
    %361 = tpu.assume_multiple %360, 8 : i32
    %c8_i32_79 = arith.constant 8 : i32
    %362 = arith.muli %359, %c8_i32_79 : i32
    %363 = tpu.assume_multiple %362, 8 : i32
    %364 = arith.index_cast %361 : i32 to index
    %c0_80 = arith.constant 0 : index
    %365 = vector.load %arg12[%364, %c0_80] : memref<64x256xf32, #tpu.memory_space<vmem>>, vector<8x128xf32>
    %366 = arith.index_cast %363 : i32 to index
    %c128_81 = arith.constant 128 : index
    %367 = vector.load %arg12[%366, %c128_81] : memref<64x256xf32, #tpu.memory_space<vmem>>, vector<8x128xf32>
    %368 = tpu.concatenate %345, %354 in 1 : vector<8x32xf32>, vector<8x32xf32> -> vector<8x64xf32>
    %369 = arith.truncf %368 : vector<8x64xf32> to vector<8x64xbf16>
    %cst_82 = arith.constant dense<0.000000e+00> : vector<8x256xf32>
    %370 = tpu.matmul %369, %7, %cst_82 {dimension_numbers = #tpu.dot_dimension_numbers<[1], [0], [0], [1], [0, 0, 1, 1], [], []>} : vector<8x64xbf16>, vector<64x256xbf16>, vector<8x256xf32> -> vector<8x256xf32>
    %371 = vector.extract_strided_slice %370 {offsets = [0, 0], sizes = [8, 128], strides = [1, 1]} : vector<8x256xf32> to vector<8x128xf32>
    %372 = arith.addf %365, %371 : vector<8x128xf32>
    %373 = vector.extract_strided_slice %370 {offsets = [0, 128], sizes = [8, 128], strides = [1, 1]} : vector<8x256xf32> to vector<8x128xf32>
    %374 = arith.addf %367, %373 : vector<8x128xf32>
    %375 = arith.negf %372 : vector<8x128xf32>
    %376 = math.exp %375 : vector<8x128xf32>
    %cst_83 = arith.constant 1.000000e+00 : f32
    %377 = vector.broadcast %cst_83 : f32 to vector<8x128xf32>
    %378 = arith.addf %377, %376 : vector<8x128xf32>
    %379 = arith.divf %377, %378 : vector<8x128xf32>
    %380 = math.tanh %372 : vector<8x128xf32>
    %381 = arith.negf %374 : vector<8x128xf32>
    %382 = math.exp %381 : vector<8x128xf32>
    %cst_84 = arith.constant 1.000000e+00 : f32
    %383 = vector.broadcast %cst_84 : f32 to vector<8x128xf32>
    %384 = arith.addf %383, %382 : vector<8x128xf32>
    %385 = arith.divf %383, %384 : vector<8x128xf32>
    %386 = math.tanh %374 : vector<8x128xf32>
    %387 = vector.extract_strided_slice %379 {offsets = [0, 32], sizes = [8, 32], strides = [1, 1]} : vector<8x128xf32> to vector<8x32xf32>
    %388 = arith.mulf %387, %342 : vector<8x32xf32>
    %389 = vector.extract_strided_slice %379 {offsets = [0, 0], sizes = [8, 32], strides = [1, 1]} : vector<8x128xf32> to vector<8x32xf32>
    %390 = vector.extract_strided_slice %380 {offsets = [0, 64], sizes = [8, 32], strides = [1, 1]} : vector<8x128xf32> to vector<8x32xf32>
    %391 = arith.mulf %389, %390 : vector<8x32xf32>
    %392 = arith.addf %388, %391 : vector<8x32xf32>
    %393 = vector.extract_strided_slice %379 {offsets = [0, 96], sizes = [8, 32], strides = [1, 1]} : vector<8x128xf32> to vector<8x32xf32>
    %394 = math.tanh %392 : vector<8x32xf32>
    %395 = arith.mulf %393, %394 : vector<8x32xf32>
    %396 = vector.extract_strided_slice %385 {offsets = [0, 32], sizes = [8, 32], strides = [1, 1]} : vector<8x128xf32> to vector<8x32xf32>
    %397 = arith.mulf %396, %351 : vector<8x32xf32>
    %398 = vector.extract_strided_slice %385 {offsets = [0, 0], sizes = [8, 32], strides = [1, 1]} : vector<8x128xf32> to vector<8x32xf32>
    %399 = vector.extract_strided_slice %386 {offsets = [0, 64], sizes = [8, 32], strides = [1, 1]} : vector<8x128xf32> to vector<8x32xf32>
    %400 = arith.mulf %398, %399 : vector<8x32xf32>
    %401 = arith.addf %397, %400 : vector<8x32xf32>
    %402 = vector.extract_strided_slice %385 {offsets = [0, 96], sizes = [8, 32], strides = [1, 1]} : vector<8x128xf32> to vector<8x32xf32>
    %403 = math.tanh %401 : vector<8x32xf32>
    %404 = arith.mulf %402, %403 : vector<8x32xf32>
    %405 = arith.index_cast %361 : i32 to index
    %c0_85 = arith.constant 0 : index
    %406 = vector.load %arg13[%405, %c0_85] : memref<64x64xf32, #tpu.memory_space<vmem>>, vector<8x32xf32>
    tpu.vector_store %arg13[%405, %c0_85], %395 {strides = array<i32>} : memref<64x64xf32, #tpu.memory_space<vmem>>, vector<8x32xf32>,
    %407 = arith.index_cast %363 : i32 to index
    %c32_86 = arith.constant 32 : index
    %408 = vector.load %arg13[%407, %c32_86] : memref<64x64xf32, #tpu.memory_space<vmem>>, vector<8x32xf32>
    tpu.vector_store %arg13[%407, %c32_86], %404 {strides = array<i32>} : memref<64x64xf32, #tpu.memory_space<vmem>>, vector<8x32xf32>,
    %c8_i32_87 = arith.constant 8 : i32
    %c0_88 = arith.constant 0 : index
    %c0_89 = arith.constant 0 : index
    %409 = vector.load %arg13[%c0_88, %c0_89] : memref<64x64xf32, #tpu.memory_space<vmem>>, vector<64x64xf32>
    %410 = arith.truncf %409 : vector<64x64xf32> to vector<64x64xbf16>
    %c0_90 = arith.constant 0 : index
    %c0_91 = arith.constant 0 : index
    %411 = vector.load %arg4[%c0_90, %c0_91] : memref<64x128xbf16, #tpu.memory_space<vmem>>, vector<64x128xbf16>
    %cst_92 = arith.constant dense<0.000000e+00> : vector<64x128xf32>
    %412 = tpu.matmul %410, %411, %cst_92 {dimension_numbers = #tpu.dot_dimension_numbers<[1], [0], [0], [1], [0, 0, 1, 1], [], []>} : vector<64x64xbf16>, vector<64x128xbf16>, vector<64x128xf32> -> vector<64x128xf32>
    %c0_93 = arith.constant 0 : index
    %c0_94 = arith.constant 0 : index
    %413 = vector.load %arg5[%c0_93, %c0_94] : memref<1x128xf32, #tpu.memory_space<vmem>>, vector<1x128xf32>
    %414 = vector.broadcast %413 : vector<1x128xf32> to vector<64x128xf32>
    %415 = arith.addf %412, %414 : vector<64x128xf32>
    %c0_95 = arith.constant 0 : index
    %c0_96 = arith.constant 0 : index
    %416 = vector.load %arg14[%c0_95, %c0_96] : memref<64x128xf32, #tpu.memory_space<vmem>>, vector<64x128xf32>
    tpu.vector_store %arg14[%c0_95, %c0_96], %415 {strides = array<i32>} : memref<64x128xf32, #tpu.memory_space<vmem>>, vector<64x128xf32>,
    %c0_97 = arith.constant 0 : index
    %c0_98 = arith.constant 0 : index
    %417 = vector.load %arg6[%c0_97, %c0_98] : memref<1x128xf32, #tpu.memory_space<vmem>>, vector<1x128xf32>
    %c0_99 = arith.constant 0 : index
    %c0_100 = arith.constant 0 : index
    %418 = vector.load %arg7[%c0_99, %c0_100] : memref<1x128xf32, #tpu.memory_space<vmem>>, vector<1x128xf32>
    %c0_101 = arith.constant 0 : index
    %c0_102 = arith.constant 0 : index
    %419 = vector.load %arg8[%c0_101, %c0_102] : memref<128x128xf32, #tpu.memory_space<vmem>>, vector<128x128xf32>
    %420 = math.exp %419 : vector<128x128xf32>
    %c0_103 = arith.constant 0 : index
    %c0_104 = arith.constant 0 : index
    %421 = vector.load %arg9[%c0_103, %c0_104] : memref<64x1xf32, #tpu.memory_space<vmem>>, vector<8x1xf32>
    %c0_105 = arith.constant 0 : index
    %c0_106 = arith.constant 0 : index
    %422 = vector.load %arg14[%c0_105, %c0_106] : memref<64x128xf32, #tpu.memory_space<vmem>>, vector<8x128xf32>
    %423 = vector.broadcast %417 : vector<1x128xf32> to vector<8x128xf32>
    %424 = arith.addf %423, %422 : vector<8x128xf32>
    %c1_i32_107 = arith.constant 1 : i32
    %c8_i32_108 = arith.constant 8 : i32
    %425 = arith.muli %c1_i32_107, %c8_i32_108 : i32
    %426 = tpu.assume_multiple %425, 8 : i32
    %427 = arith.index_cast %426 : i32 to index
    %c0_109 = arith.constant 0 : index
    %428 = vector.load %arg14[%427, %c0_109] : memref<64x128xf32, #tpu.memory_space<vmem>>, vector<8x128xf32>
    %429 = arith.index_cast %426 : i32 to index
    %c0_110 = arith.constant 0 : index
    %430 = vector.load %arg9[%429, %c0_110] : memref<64x1xf32, #tpu.memory_space<vmem>>, vector<8x1xf32>
    %cst_111 = arith.constant dense<0xFF800000> : vector<8xf32>
    %431 = vector.multi_reduction <maximumf>, %424, %cst_111 [1] : vector<8x128xf32> to vector<8xf32>
    %432 = vector.shape_cast %431 : vector<8xf32> to vector<8x1xf32>
    %433 = vector.broadcast %432 : vector<8x1xf32> to vector<8x128xf32>
    %434 = arith.subf %424, %433 : vector<8x128xf32>
    %435 = math.exp %434 : vector<8x128xf32>
    %cst_112 = arith.constant dense<0.000000e+00> : vector<8x128xf32>
    %436 = tpu.matmul %435, %420, %cst_112 {dimension_numbers = #tpu.dot_dimension_numbers<[1], [0], [0], [1], [0, 0, 1, 1], [], []>} : vector<8x128xf32>, vector<128x128xf32>, vector<8x128xf32> -> vector<8x128xf32>
    %437 = math.log %436 : vector<8x128xf32>
    %438 = vector.broadcast %432 : vector<8x1xf32> to vector<8x128xf32>
    %439 = arith.addf %438, %437 : vector<8x128xf32>
    %440 = arith.addf %439, %428 : vector<8x128xf32>
    %cst_113 = arith.constant 5.000000e-01 : f32
    %441 = vector.broadcast %cst_113 : f32 to vector<8x1xf32>
    %442 = arith.cmpf ogt, %430, %441 : vector<8x1xf32>
    %443 = vector.shape_cast %442 : vector<8x1xi1> to vector<8x1xi1>
    %444 = vector.broadcast %443 : vector<8x1xi1> to vector<8x128xi1>
    %445 = arith.select %444, %440, %424 : vector<8x128xi1>, vector<8x128xf32>
    %c2_i32_114 = arith.constant 2 : i32
    %c8_i32_115 = arith.constant 8 : i32
    %446 = arith.muli %c2_i32_114, %c8_i32_115 : i32
    %447 = tpu.assume_multiple %446, 8 : i32
    %448 = arith.index_cast %447 : i32 to index
    %c0_116 = arith.constant 0 : index
    %449 = vector.load %arg14[%448, %c0_116] : memref<64x128xf32, #tpu.memory_space<vmem>>, vector<8x128xf32>
    %450 = arith.index_cast %447 : i32 to index
    %c0_117 = arith.constant 0 : index
    %451 = vector.load %arg9[%450, %c0_117] : memref<64x1xf32, #tpu.memory_space<vmem>>, vector<8x1xf32>
    %cst_118 = arith.constant dense<0xFF800000> : vector<8xf32>
    %452 = vector.multi_reduction <maximumf>, %445, %cst_118 [1] : vector<8x128xf32> to vector<8xf32>
    %453 = vector.shape_cast %452 : vector<8xf32> to vector<8x1xf32>
    %454 = vector.broadcast %453 : vector<8x1xf32> to vector<8x128xf32>
    %455 = arith.subf %445, %454 : vector<8x128xf32>
    %456 = math.exp %455 : vector<8x128xf32>
    %cst_119 = arith.constant dense<0.000000e+00> : vector<8x128xf32>
    %457 = tpu.matmul %456, %420, %cst_119 {dimension_numbers = #tpu.dot_dimension_numbers<[1], [0], [0], [1], [0, 0, 1, 1], [], []>} : vector<8x128xf32>, vector<128x128xf32>, vector<8x128xf32> -> vector<8x128xf32>
    %458 = math.log %457 : vector<8x128xf32>
    %459 = vector.broadcast %453 : vector<8x1xf32> to vector<8x128xf32>
    %460 = arith.addf %459, %458 : vector<8x128xf32>
    %461 = arith.addf %460, %449 : vector<8x128xf32>
    %cst_120 = arith.constant 5.000000e-01 : f32
    %462 = vector.broadcast %cst_120 : f32 to vector<8x1xf32>
    %463 = arith.cmpf ogt, %451, %462 : vector<8x1xf32>
    %464 = vector.shape_cast %463 : vector<8x1xi1> to vector<8x1xi1>
    %465 = vector.broadcast %464 : vector<8x1xi1> to vector<8x128xi1>
    %466 = arith.select %465, %461, %445 : vector<8x128xi1>, vector<8x128xf32>
    %c3_i32_121 = arith.constant 3 : i32
    %c8_i32_122 = arith.constant 8 : i32
    %467 = arith.muli %c3_i32_121, %c8_i32_122 : i32
    %468 = tpu.assume_multiple %467, 8 : i32
    %469 = arith.index_cast %468 : i32 to index
    %c0_123 = arith.constant 0 : index
    %470 = vector.load %arg14[%469, %c0_123] : memref<64x128xf32, #tpu.memory_space<vmem>>, vector<8x128xf32>
    %471 = arith.index_cast %468 : i32 to index
    %c0_124 = arith.constant 0 : index
    %472 = vector.load %arg9[%471, %c0_124] : memref<64x1xf32, #tpu.memory_space<vmem>>, vector<8x1xf32>
    %cst_125 = arith.constant dense<0xFF800000> : vector<8xf32>
    %473 = vector.multi_reduction <maximumf>, %466, %cst_125 [1] : vector<8x128xf32> to vector<8xf32>
    %474 = vector.shape_cast %473 : vector<8xf32> to vector<8x1xf32>
    %475 = vector.broadcast %474 : vector<8x1xf32> to vector<8x128xf32>
    %476 = arith.subf %466, %475 : vector<8x128xf32>
    %477 = math.exp %476 : vector<8x128xf32>
    %cst_126 = arith.constant dense<0.000000e+00> : vector<8x128xf32>
    %478 = tpu.matmul %477, %420, %cst_126 {dimension_numbers = #tpu.dot_dimension_numbers<[1], [0], [0], [1], [0, 0, 1, 1], [], []>} : vector<8x128xf32>, vector<128x128xf32>, vector<8x128xf32> -> vector<8x128xf32>
    %479 = math.log %478 : vector<8x128xf32>
    %480 = vector.broadcast %474 : vector<8x1xf32> to vector<8x128xf32>
    %481 = arith.addf %480, %479 : vector<8x128xf32>
    %482 = arith.addf %481, %470 : vector<8x128xf32>
    %cst_127 = arith.constant 5.000000e-01 : f32
    %483 = vector.broadcast %cst_127 : f32 to vector<8x1xf32>
    %484 = arith.cmpf ogt, %472, %483 : vector<8x1xf32>
    %485 = vector.shape_cast %484 : vector<8x1xi1> to vector<8x1xi1>
    %486 = vector.broadcast %485 : vector<8x1xi1> to vector<8x128xi1>
    %487 = arith.select %486, %482, %466 : vector<8x128xi1>, vector<8x128xf32>
    %c4_i32_128 = arith.constant 4 : i32
    %c8_i32_129 = arith.constant 8 : i32
    %488 = arith.muli %c4_i32_128, %c8_i32_129 : i32
    %489 = tpu.assume_multiple %488, 8 : i32
    %490 = arith.index_cast %489 : i32 to index
    %c0_130 = arith.constant 0 : index
    %491 = vector.load %arg14[%490, %c0_130] : memref<64x128xf32, #tpu.memory_space<vmem>>, vector<8x128xf32>
    %492 = arith.index_cast %489 : i32 to index
    %c0_131 = arith.constant 0 : index
    %493 = vector.load %arg9[%492, %c0_131] : memref<64x1xf32, #tpu.memory_space<vmem>>, vector<8x1xf32>
    %cst_132 = arith.constant dense<0xFF800000> : vector<8xf32>
    %494 = vector.multi_reduction <maximumf>, %487, %cst_132 [1] : vector<8x128xf32> to vector<8xf32>
    %495 = vector.shape_cast %494 : vector<8xf32> to vector<8x1xf32>
    %496 = vector.broadcast %495 : vector<8x1xf32> to vector<8x128xf32>
    %497 = arith.subf %487, %496 : vector<8x128xf32>
    %498 = math.exp %497 : vector<8x128xf32>
    %cst_133 = arith.constant dense<0.000000e+00> : vector<8x128xf32>
    %499 = tpu.matmul %498, %420, %cst_133 {dimension_numbers = #tpu.dot_dimension_numbers<[1], [0], [0], [1], [0, 0, 1, 1], [], []>} : vector<8x128xf32>, vector<128x128xf32>, vector<8x128xf32> -> vector<8x128xf32>
    %500 = math.log %499 : vector<8x128xf32>
    %501 = vector.broadcast %495 : vector<8x1xf32> to vector<8x128xf32>
    %502 = arith.addf %501, %500 : vector<8x128xf32>
    %503 = arith.addf %502, %491 : vector<8x128xf32>
    %cst_134 = arith.constant 5.000000e-01 : f32
    %504 = vector.broadcast %cst_134 : f32 to vector<8x1xf32>
    %505 = arith.cmpf ogt, %493, %504 : vector<8x1xf32>
    %506 = vector.shape_cast %505 : vector<8x1xi1> to vector<8x1xi1>
    %507 = vector.broadcast %506 : vector<8x1xi1> to vector<8x128xi1>
    %508 = arith.select %507, %503, %487 : vector<8x128xi1>, vector<8x128xf32>
    %c5_i32_135 = arith.constant 5 : i32
    %c8_i32_136 = arith.constant 8 : i32
    %509 = arith.muli %c5_i32_135, %c8_i32_136 : i32
    %510 = tpu.assume_multiple %509, 8 : i32
    %511 = arith.index_cast %510 : i32 to index
    %c0_137 = arith.constant 0 : index
    %512 = vector.load %arg14[%511, %c0_137] : memref<64x128xf32, #tpu.memory_space<vmem>>, vector<8x128xf32>
    %513 = arith.index_cast %510 : i32 to index
    %c0_138 = arith.constant 0 : index
    %514 = vector.load %arg9[%513, %c0_138] : memref<64x1xf32, #tpu.memory_space<vmem>>, vector<8x1xf32>
    %cst_139 = arith.constant dense<0xFF800000> : vector<8xf32>
    %515 = vector.multi_reduction <maximumf>, %508, %cst_139 [1] : vector<8x128xf32> to vector<8xf32>
    %516 = vector.shape_cast %515 : vector<8xf32> to vector<8x1xf32>
    %517 = vector.broadcast %516 : vector<8x1xf32> to vector<8x128xf32>
    %518 = arith.subf %508, %517 : vector<8x128xf32>
    %519 = math.exp %518 : vector<8x128xf32>
    %cst_140 = arith.constant dense<0.000000e+00> : vector<8x128xf32>
    %520 = tpu.matmul %519, %420, %cst_140 {dimension_numbers = #tpu.dot_dimension_numbers<[1], [0], [0], [1], [0, 0, 1, 1], [], []>} : vector<8x128xf32>, vector<128x128xf32>, vector<8x128xf32> -> vector<8x128xf32>
    %521 = math.log %520 : vector<8x128xf32>
    %522 = vector.broadcast %516 : vector<8x1xf32> to vector<8x128xf32>
    %523 = arith.addf %522, %521 : vector<8x128xf32>
    %524 = arith.addf %523, %512 : vector<8x128xf32>
    %cst_141 = arith.constant 5.000000e-01 : f32
    %525 = vector.broadcast %cst_141 : f32 to vector<8x1xf32>
    %526 = arith.cmpf ogt, %514, %525 : vector<8x1xf32>
    %527 = vector.shape_cast %526 : vector<8x1xi1> to vector<8x1xi1>
    %528 = vector.broadcast %527 : vector<8x1xi1> to vector<8x128xi1>
    %529 = arith.select %528, %524, %508 : vector<8x128xi1>, vector<8x128xf32>
    %c6_i32_142 = arith.constant 6 : i32
    %c8_i32_143 = arith.constant 8 : i32
    %530 = arith.muli %c6_i32_142, %c8_i32_143 : i32
    %531 = tpu.assume_multiple %530, 8 : i32
    %532 = arith.index_cast %531 : i32 to index
    %c0_144 = arith.constant 0 : index
    %533 = vector.load %arg14[%532, %c0_144] : memref<64x128xf32, #tpu.memory_space<vmem>>, vector<8x128xf32>
    %534 = arith.index_cast %531 : i32 to index
    %c0_145 = arith.constant 0 : index
    %535 = vector.load %arg9[%534, %c0_145] : memref<64x1xf32, #tpu.memory_space<vmem>>, vector<8x1xf32>
    %cst_146 = arith.constant dense<0xFF800000> : vector<8xf32>
    %536 = vector.multi_reduction <maximumf>, %529, %cst_146 [1] : vector<8x128xf32> to vector<8xf32>
    %537 = vector.shape_cast %536 : vector<8xf32> to vector<8x1xf32>
    %538 = vector.broadcast %537 : vector<8x1xf32> to vector<8x128xf32>
    %539 = arith.subf %529, %538 : vector<8x128xf32>
    %540 = math.exp %539 : vector<8x128xf32>
    %cst_147 = arith.constant dense<0.000000e+00> : vector<8x128xf32>
    %541 = tpu.matmul %540, %420, %cst_147 {dimension_numbers = #tpu.dot_dimension_numbers<[1], [0], [0], [1], [0, 0, 1, 1], [], []>} : vector<8x128xf32>, vector<128x128xf32>, vector<8x128xf32> -> vector<8x128xf32>
    %542 = math.log %541 : vector<8x128xf32>
    %543 = vector.broadcast %537 : vector<8x1xf32> to vector<8x128xf32>
    %544 = arith.addf %543, %542 : vector<8x128xf32>
    %545 = arith.addf %544, %533 : vector<8x128xf32>
    %cst_148 = arith.constant 5.000000e-01 : f32
    %546 = vector.broadcast %cst_148 : f32 to vector<8x1xf32>
    %547 = arith.cmpf ogt, %535, %546 : vector<8x1xf32>
    %548 = vector.shape_cast %547 : vector<8x1xi1> to vector<8x1xi1>
    %549 = vector.broadcast %548 : vector<8x1xi1> to vector<8x128xi1>
    %550 = arith.select %549, %545, %529 : vector<8x128xi1>, vector<8x128xf32>
    %c7_i32_149 = arith.constant 7 : i32
    %c8_i32_150 = arith.constant 8 : i32
    %551 = arith.muli %c7_i32_149, %c8_i32_150 : i32
    %552 = tpu.assume_multiple %551, 8 : i32
    %553 = arith.index_cast %552 : i32 to index
    %c0_151 = arith.constant 0 : index
    %554 = vector.load %arg14[%553, %c0_151] : memref<64x128xf32, #tpu.memory_space<vmem>>, vector<8x128xf32>
    %555 = arith.index_cast %552 : i32 to index
    %c0_152 = arith.constant 0 : index
    %556 = vector.load %arg9[%555, %c0_152] : memref<64x1xf32, #tpu.memory_space<vmem>>, vector<8x1xf32>
    %cst_153 = arith.constant dense<0xFF800000> : vector<8xf32>
    %557 = vector.multi_reduction <maximumf>, %550, %cst_153 [1] : vector<8x128xf32> to vector<8xf32>
    %558 = vector.shape_cast %557 : vector<8xf32> to vector<8x1xf32>
    %559 = vector.broadcast %558 : vector<8x1xf32> to vector<8x128xf32>
    %560 = arith.subf %550, %559 : vector<8x128xf32>
    %561 = math.exp %560 : vector<8x128xf32>
    %cst_154 = arith.constant dense<0.000000e+00> : vector<8x128xf32>
    %562 = tpu.matmul %561, %420, %cst_154 {dimension_numbers = #tpu.dot_dimension_numbers<[1], [0], [0], [1], [0, 0, 1, 1], [], []>} : vector<8x128xf32>, vector<128x128xf32>, vector<8x128xf32> -> vector<8x128xf32>
    %563 = math.log %562 : vector<8x128xf32>
    %564 = vector.broadcast %558 : vector<8x1xf32> to vector<8x128xf32>
    %565 = arith.addf %564, %563 : vector<8x128xf32>
    %566 = arith.addf %565, %554 : vector<8x128xf32>
    %cst_155 = arith.constant 5.000000e-01 : f32
    %567 = vector.broadcast %cst_155 : f32 to vector<8x1xf32>
    %568 = arith.cmpf ogt, %556, %567 : vector<8x1xf32>
    %569 = vector.shape_cast %568 : vector<8x1xi1> to vector<8x1xi1>
    %570 = vector.broadcast %569 : vector<8x1xi1> to vector<8x128xi1>
    %571 = arith.select %570, %566, %550 : vector<8x128xi1>, vector<8x128xf32>
    %c7_i32_156 = arith.constant 7 : i32
    %572 = vector.broadcast %418 : vector<1x128xf32> to vector<8x128xf32>
    %573 = arith.addf %571, %572 : vector<8x128xf32>
    %cst_157 = arith.constant dense<0xFF800000> : vector<8xf32>
    %574 = vector.multi_reduction <maximumf>, %573, %cst_157 [1] : vector<8x128xf32> to vector<8xf32>
    %575 = vector.shape_cast %574 : vector<8xf32> to vector<8x1xf32>
    %576 = vector.broadcast %575 : vector<8x1xf32> to vector<8x128xf32>
    %577 = arith.subf %573, %576 : vector<8x128xf32>
    %578 = math.exp %577 : vector<8x128xf32>
    %cst_158 = arith.constant dense<0.000000e+00> : vector<8xf32>
    %579 = vector.multi_reduction <add>, %578, %cst_158 [1] : vector<8x128xf32> to vector<8xf32>
    %580 = vector.shape_cast %579 : vector<8xf32> to vector<8x1xf32>
    %581 = math.log %580 : vector<8x1xf32>
    %582 = arith.addf %575, %581 : vector<8x1xf32>
    %583 = arith.mulf %582, %421 : vector<8x1xf32>
    %584 = vector.shape_cast %583 : vector<8x1xf32> to vector<1x8x1xf32>
    %cst_159 = arith.constant dense<0.000000e+00> : vector<1xf32>
    %585 = vector.multi_reduction <add>, %584, %cst_159 [1, 2] : vector<1x8x1xf32> to vector<1xf32>
    %586 = vector.shape_cast %585 : vector<1xf32> to vector<1x1x1xf32>
    %587 = vector.extract %586[0, 0, 0] : f32 from vector<1x1x1xf32>
    %588 = vector.broadcast %587 : f32 to vector<1x1xf32>
    %c0_160 = arith.constant 0 : index
    %c0_161 = arith.constant 0 : index
    %589 = vector.load %arg14[%c0_160, %c0_161] : memref<64x128xf32, #tpu.memory_space<vmem>>, vector<64x128xf32>
    %c0_162 = arith.constant 0 : index
    %c0_163 = arith.constant 0 : index
    %590 = vector.load %arg9[%c0_162, %c0_163] : memref<64x1xf32, #tpu.memory_space<vmem>>, vector<64x1xf32>
    %591 = tpu.iota {dimensions = array<i32: 1>} : vector<64x128xi32>
    %c0_164 = arith.constant 0 : index
    %c0_165 = arith.constant 0 : index
    %592 = vector.load %arg10[%c0_164, %c0_165] : memref<64x1xi32, #tpu.memory_space<vmem>>, vector<64x1xi32>
    %593 = vector.broadcast %592 : vector<64x1xi32> to vector<64x128xi32>
    %594 = arith.cmpi eq, %591, %593 : vector<64x128xi32>
    %595 = arith.extui %594 : vector<64x128xi1> to vector<64x128xi32>
    %596 = arith.sitofp %595 : vector<64x128xi32> to vector<64x128xf32>
    %597 = arith.mulf %589, %596 : vector<64x128xf32>
    %cst_166 = arith.constant dense<0.000000e+00> : vector<64xf32>
    %598 = vector.multi_reduction <add>, %597, %cst_166 [1] : vector<64x128xf32> to vector<64xf32>
    %599 = vector.shape_cast %598 : vector<64xf32> to vector<64x1xf32>
    %600 = vector.broadcast %418 : vector<1x128xf32> to vector<64x128xf32>
    %601 = arith.mulf %596, %600 : vector<64x128xf32>
    %cst_167 = arith.constant dense<0.000000e+00> : vector<64xf32>
    %602 = vector.multi_reduction <add>, %601, %cst_167 [1] : vector<64x128xf32> to vector<64xf32>
    %603 = vector.shape_cast %602 : vector<64xf32> to vector<64x1xf32>
    %604 = vector.extract_strided_slice %596 {offsets = [0, 0], sizes = [8, 128], strides = [1, 1]} : vector<64x128xf32> to vector<8x128xf32>
    %605 = vector.broadcast %417 : vector<1x128xf32> to vector<8x128xf32>
    %606 = arith.mulf %604, %605 : vector<8x128xf32>
    %cst_168 = arith.constant dense<0.000000e+00> : vector<8xf32>
    %607 = vector.multi_reduction <add>, %606, %cst_168 [1] : vector<8x128xf32> to vector<8xf32>
    %608 = vector.shape_cast %607 : vector<8xf32> to vector<8x1xf32>
    %609 = vector.extract_strided_slice %599 {offsets = [0, 0], sizes = [8, 1], strides = [1, 1]} : vector<64x1xf32> to vector<8x1xf32>
    %610 = arith.addf %608, %609 : vector<8x1xf32>
    %611 = arith.mulf %610, %421 : vector<8x1xf32>
    %612 = vector.shape_cast %611 : vector<8x1xf32> to vector<1x8x1xf32>
    %cst_169 = arith.constant dense<0.000000e+00> : vector<1xf32>
    %613 = vector.multi_reduction <add>, %612, %cst_169 [1, 2] : vector<1x8x1xf32> to vector<1xf32>
    %614 = vector.shape_cast %613 : vector<1xf32> to vector<1x1x1xf32>
    %615 = vector.extract %614[0, 0, 0] : f32 from vector<1x1x1xf32>
    %616 = vector.broadcast %615 : f32 to vector<1x1xf32>
    %617 = vector.extract_strided_slice %596 {offsets = [0, 0], sizes = [56, 128], strides = [1, 1]} : vector<64x128xf32> to vector<56x128xf32>
    %cst_170 = arith.constant dense<0.000000e+00> : vector<56x128xf32>
    %618 = tpu.matmul %617, %419, %cst_170 {dimension_numbers = #tpu.dot_dimension_numbers<[1], [0], [0], [1], [0, 0, 1, 1], [], []>} : vector<56x128xf32>, vector<128x128xf32>, vector<56x128xf32> -> vector<56x128xf32>
    %619 = vector.extract_strided_slice %596 {offsets = [8, 0], sizes = [56, 128], strides = [1, 1]} : vector<64x128xf32> to vector<56x128xf32>
    %620 = arith.mulf %618, %619 : vector<56x128xf32>
    %cst_171 = arith.constant dense<0.000000e+00> : vector<56xf32>
    %621 = vector.multi_reduction <add>, %620, %cst_171 [1] : vector<56x128xf32> to vector<56xf32>
    %622 = vector.shape_cast %621 : vector<56xf32> to vector<56x1xf32>
    %623 = vector.extract_strided_slice %599 {offsets = [8, 0], sizes = [56, 1], strides = [1, 1]} : vector<64x1xf32> to vector<56x1xf32>
    %624 = arith.addf %622, %623 : vector<56x1xf32>
    %625 = vector.extract_strided_slice %590 {offsets = [8, 0], sizes = [56, 1], strides = [1, 1]} : vector<64x1xf32> to vector<56x1xf32>
    %626 = arith.mulf %624, %625 : vector<56x1xf32>
    %627 = vector.shape_cast %626 : vector<56x1xf32> to vector<1x56x1xf32>
    %cst_172 = arith.constant dense<0.000000e+00> : vector<1xf32>
    %628 = vector.multi_reduction <add>, %627, %cst_172 [1, 2] : vector<1x56x1xf32> to vector<1xf32>
    %629 = vector.shape_cast %628 : vector<1xf32> to vector<1x1x1xf32>
    %630 = vector.extract %629[0, 0, 0] : f32 from vector<1x1x1xf32>
    %631 = vector.broadcast %630 : f32 to vector<1x1xf32>
    %632 = arith.addf %616, %631 : vector<1x1xf32>
    %633 = vector.extract_strided_slice %590 {offsets = [0, 0], sizes = [56, 1], strides = [1, 1]} : vector<64x1xf32> to vector<56x1xf32>
    %634 = vector.extract_strided_slice %590 {offsets = [8, 0], sizes = [56, 1], strides = [1, 1]} : vector<64x1xf32> to vector<56x1xf32>
    %cst_173 = arith.constant 1.000000e+00 : f32
    %635 = vector.broadcast %cst_173 : f32 to vector<56x1xf32>
    %636 = arith.subf %635, %634 : vector<56x1xf32>
    %637 = arith.mulf %633, %636 : vector<56x1xf32>
    %638 = vector.extract_strided_slice %603 {offsets = [0, 0], sizes = [56, 1], strides = [1, 1]} : vector<64x1xf32> to vector<56x1xf32>
    %639 = arith.mulf %637, %638 : vector<56x1xf32>
    %640 = vector.shape_cast %639 : vector<56x1xf32> to vector<1x56x1xf32>
    %cst_174 = arith.constant dense<0.000000e+00> : vector<1xf32>
    %641 = vector.multi_reduction <add>, %640, %cst_174 [1, 2] : vector<1x56x1xf32> to vector<1xf32>
    %642 = vector.shape_cast %641 : vector<1xf32> to vector<1x1x1xf32>
    %643 = vector.extract %642[0, 0, 0] : f32 from vector<1x1x1xf32>
    %644 = vector.broadcast %643 : f32 to vector<1x1xf32>
    %645 = arith.addf %632, %644 : vector<1x1xf32>
    %646 = vector.extract_strided_slice %590 {offsets = [56, 0], sizes = [8, 1], strides = [1, 1]} : vector<64x1xf32> to vector<8x1xf32>
    %647 = vector.extract_strided_slice %603 {offsets = [56, 0], sizes = [8, 1], strides = [1, 1]} : vector<64x1xf32> to vector<8x1xf32>
    %648 = arith.mulf %646, %647 : vector<8x1xf32>
    %649 = vector.shape_cast %648 : vector<8x1xf32> to vector<1x8x1xf32>
    %cst_175 = arith.constant dense<0.000000e+00> : vector<1xf32>
    %650 = vector.multi_reduction <add>, %649, %cst_175 [1, 2] : vector<1x8x1xf32> to vector<1xf32>
    %651 = vector.shape_cast %650 : vector<1xf32> to vector<1x1x1xf32>
    %652 = vector.extract %651[0, 0, 0] : f32 from vector<1x1x1xf32>
    %653 = vector.broadcast %652 : f32 to vector<1x1xf32>
    %654 = arith.addf %645, %653 : vector<1x1xf32>
    %655 = arith.subf %588, %654 : vector<1x1xf32>
    %c0_176 = arith.constant 0 : index
    %c0_177 = arith.constant 0 : index
    %656 = vector.load %arg11[%c0_176, %c0_177] : memref<1x1xf32, #tpu.memory_space<vmem>>, vector<1x1xf32>
    tpu.vector_store %arg11[%c0_176, %c0_177], %655 {strides = array<i32>} : memref<1x1xf32, #tpu.memory_space<vmem>>, vector<1x1xf32>,
    return
  }
}

</mosaic_0001>

<llo_original>
// kernel: bilstm_crf_loss.1
$region0: #{bilstm_crf_loss.1}
  #allocation0 [shape = 'u32[]', space=smem, size = 0x4, offset = 0x4, fixed_abs, tag = 'smem constant byte address 0x4 - core index']
  #allocation1 [shape = 'u32[72,128]{1,0:T(1,128)}', space=vmem, size = 0x9000, scoped, tag = 'internal scratch']
  #allocation2 [shape = 'f32[64,256]{1,0:T(8,128)}', space=vmem, size = 0x10000, scoped, tag = 'scratch operand']
  #allocation3 [shape = 'f32[64,64]{1,0:T(8,128)}', space=vmem, size = 0x8000, scoped, tag = 'scratch operand']
  #allocation4 [shape = 'f32[64,128]{1,0:T(8,128)}', space=vmem, size = 0x8000, scoped, tag = 'scratch operand']
  %s0 = inlined_call_operand.vmem [shape: bf16[64,32], index: 0, kind: input, shape index: {}]
  %s1 = inlined_call_operand.vmem [shape: bf16[32,256], index: 1, kind: input, shape index: {}]
  %s2 = inlined_call_operand.vmem [shape: bf16[64,256], index: 2, kind: input, shape index: {}]
  %s3 = inlined_call_operand.vmem [shape: f32[1,256], index: 3, kind: input, shape index: {}]
  %s4 = inlined_call_operand.vmem [shape: bf16[64,128], index: 4, kind: input, shape index: {}]
  %s5 = inlined_call_operand.vmem [shape: f32[1,128], index: 5, kind: input, shape index: {}]
  %s6 = inlined_call_operand.vmem [shape: f32[1,128], index: 6, kind: input, shape index: {}]
  %s7 = inlined_call_operand.vmem [shape: f32[1,128], index: 7, kind: input, shape index: {}]
  %s8 = inlined_call_operand.vmem [shape: f32[128,128], index: 8, kind: input, shape index: {}]
  %s9 = inlined_call_operand.vmem [shape: f32[64,1], index: 9, kind: input, shape index: {}]
  %s10 = inlined_call_operand.vmem [shape: s32[64,1], index: 10, kind: input, shape index: {}]
  %s11 = inlined_call_operand.hbm [shape: f32[1,1], index: 11, kind: output, shape index: {}]
  %s12 = sld [smem:[#allocation0]]
  $region54: #{bilstm_crf_loss.1} parent=0
    _
  %s14 = ssub.s32 1, %s12
  %s15 = scalar_select 0, %s14, %s12
  $region1: #{bilstm_crf_loss.1} parent=0
    #allocation5 [shape = 'u8[512]{0}', space=vmem, size = 0x400, scoped, tag = 'output window, operand 0, single buffered']
    #allocation6 [shape = 's32[1]{0}', space=sflag, size = 0x4, scoped, tag = 'scoped memory for bilstm_crf_loss.1']
    %16 = vsyncpa [#allocation6], 0
    // Predicated region
    $region2: #{bilstm_crf_loss.1} parent=1 // pred_check
      _
    $region3: #{bilstm_crf_loss.1} parent=1 // pred_check_branch
      %18 = sbr.rel (0) target = $region5
    $region4: #{bilstm_crf_loss.1} parent=1 // pred_region
      _
    $region5: #{bilstm_crf_loss.1} parent=1 // pred_fallthru
      _
    // Predicated region
    $region6: #{bilstm_crf_loss.1} parent=1 // pred_check
      _
    $region7: #{bilstm_crf_loss.1} parent=1 // pred_check_branch
      %20 = sbr.rel (0) target = $region9
    $region8: #{bilstm_crf_loss.1} parent=1 // pred_region
      _
    $region9: #{bilstm_crf_loss.1} parent=1 // pred_fallthru
      _
    // Predicated region
    $region10: #{bilstm_crf_loss.1} parent=1 // pred_check
      _
    $region11: #{bilstm_crf_loss.1} parent=1 // pred_check_branch
      %22 = sbr.rel (0) target = $region13
    $region12: #{bilstm_crf_loss.1} parent=1 // pred_region
      _
    $region13: #{bilstm_crf_loss.1} parent=1 // pred_fallthru
      _
    // Predicated region
    $region14: #{bilstm_crf_loss.1} parent=1 // pred_check
      _
    $region15: #{bilstm_crf_loss.1} parent=1 // pred_check_branch
      %24 = sbr.rel (0) target = $region17
    $region16: #{bilstm_crf_loss.1} parent=1 // pred_region
      _
    $region17: #{bilstm_crf_loss.1} parent=1 // pred_fallthru
      _
    // Predicated region
    $region18: #{bilstm_crf_loss.1} parent=1 // pred_check
      _
    $region19: #{bilstm_crf_loss.1} parent=1 // pred_check_branch
      %26 = sbr.rel (0) target = $region21
    $region20: #{bilstm_crf_loss.1} parent=1 // pred_region
      _
    $region21: #{bilstm_crf_loss.1} parent=1 // pred_fallthru
      _
    // Predicated region
    $region22: #{bilstm_crf_loss.1} parent=1 // pred_check
      _
    $region23: #{bilstm_crf_loss.1} parent=1 // pred_check_branch
      %28 = sbr.rel (0) target = $region25
    $region24: #{bilstm_crf_loss.1} parent=1 // pred_region
      _
    $region25: #{bilstm_crf_loss.1} parent=1 // pred_fallthru
      _
    // Predicated region
    $region26: #{bilstm_crf_loss.1} parent=1 // pred_check
      _
    $region27: #{bilstm_crf_loss.1} parent=1 // pred_check_branch
      %30 = sbr.rel (0) target = $region29
    $region28: #{bilstm_crf_loss.1} parent=1 // pred_region
      _
    $region29: #{bilstm_crf_loss.1} parent=1 // pred_fallthru
      _
    // Predicated region
    $region30: #{bilstm_crf_loss.1} parent=1 // pred_check
      _
    $region31: #{bilstm_crf_loss.1} parent=1 // pred_check_branch
      %32 = sbr.rel (0) target = $region33
    $region32: #{bilstm_crf_loss.1} parent=1 // pred_region
      _
    $region33: #{bilstm_crf_loss.1} parent=1 // pred_fallthru
      _
    // Predicated region
    $region34: #{bilstm_crf_loss.1} parent=1 // pred_check
      _
    $region35: #{bilstm_crf_loss.1} parent=1 // pred_check_branch
      %34 = sbr.rel (0) target = $region37
    $region36: #{bilstm_crf_loss.1} parent=1 // pred_region
      _
    $region37: #{bilstm_crf_loss.1} parent=1 // pred_fallthru
      _
    // Predicated region
    $region38: #{bilstm_crf_loss.1} parent=1 // pred_check
      _
    $region39: #{bilstm_crf_loss.1} parent=1 // pred_check_branch
      %36 = sbr.rel (0) target = $region41
    $region40: #{bilstm_crf_loss.1} parent=1 // pred_region
      _
    $region41: #{bilstm_crf_loss.1} parent=1 // pred_fallthru
      _
    // Predicated region
    $region42: #{bilstm_crf_loss.1} parent=1 // pred_check
      _
    $region43: #{bilstm_crf_loss.1} parent=1 // pred_check_branch
      %38 = sbr.rel (0) target = $region45
    $region44: #{bilstm_crf_loss.1} parent=1 // pred_region
      _
    $region45: #{bilstm_crf_loss.1} parent=1 // pred_fallthru
      _
    %v40 = vld [vmem:[%s0] sm:$0xf]
    %v41 = vld [vmem:[%s0 + $0x4] sm:$0xf]
    %v42 = vld [vmem:[%s0 + $0x8] sm:$0xf]
    %v43 = vld [vmem:[%s0 + $0xc] sm:$0xf]
    %v44 = vld [vmem:[%s0 + $0x10] sm:$0xf]
    %v45 = vld [vmem:[%s0 + $0x14] sm:$0xf]
    %v46 = vld [vmem:[%s0 + $0x18] sm:$0xf]
    %v47 = vld [vmem:[%s0 + $0x1c] sm:$0xf]
    %v48 = vld [vmem:[%s1] sm:$0xff]
    %v49 = vld [vmem:[%s1 + $0x8] sm:$0xff]
    %v50 = vld [vmem:[%s1 + $0x10] sm:$0xff]
    %v51 = vld [vmem:[%s1 + $0x18] sm:$0xff]
    %v52 = vld [vmem:[%s3] sm:$0x3]
    %v54 = vperm.slane %v52, 0
    %v55 = vperm.slane %v52, 1
    %v66 = vunpack.c.l.b16 %v40
    %v67 = vunpack.c.l.b16 %v41
    %v68 = vunpack.c.l.b16 %v42
    %v69 = vunpack.c.l.b16 %v43
    %v70 = vunpack.c.l.b16 %v44
    %v71 = vunpack.c.l.b16 %v45
    %v72 = vunpack.c.l.b16 %v46
    %v73 = vunpack.c.l.b16 %v47
    %v74 = vpack.c.b16 %v67, %v66
    %v75 = vpack.c.b16 %v69, %v68
    %v76 = vpack.c.b16 %v71, %v70
    %v77 = vpack.c.b16 %v73, %v72
    %v82 = vunpack.c.l.b16 %v48
    %v83 = vunpack.c.h.b16 %v48
    %v84 = vunpack.c.l.b16 %v49
    %v85 = vunpack.c.h.b16 %v49
    %v86 = vunpack.c.l.b16 %v50
    %v87 = vunpack.c.h.b16 %v50
    %v88 = vunpack.c.l.b16 %v51
    %v89 = vunpack.c.h.b16 %v51
    %v90 = vpack.c.b16 %v84, %v82
    %v91 = vpack.c.b16 %v85, %v83
    %v92 = vpack.c.b16 %v88, %v86
    %v93 = vpack.c.b16 %v89, %v87
    %vm98 = vcmask 261120
    %v100 = vsel %vm98, %v74, 0
    %v103 = vsel %vm98, %v75, 0
    %v106 = vsel %vm98, %v76, 0
    %v109 = vsel %vm98, %v77, 0
    %111 = vmatpush.bf16.msra.mxu0 0
    %112 = vmatpush.bf16.msra.mxu0 0
    %113 = vmatpush.bf16.msra.mxu0 0
    %114 = vmatpush.bf16.msra.mxu0 0
    %115 = vmatpush.bf16.msra.mxu0 0
    %116 = vmatpush.bf16.msra.mxu0 0
    %117 = vmatpush.bf16.msra.mxu0 %v92
    %118 = vmatpush.bf16.msra.mxu0 %v90
    %119 = vmatmul.bf16.gmra.mxu0 %v100
    %v120 = vpop.f32.mrf.mxu0
    %v121 = vadd.f32 %v54, %v120
    %v122 = vpop.f32.mrf.mxu0
    %v123 = vadd.f32 %v54, %v122
    %124 = vmatmul.bf16.gmra.mxu0 %v103
    %v125 = vpop.f32.mrf.mxu0
    %v126 = vadd.f32 %v54, %v125
    %v127 = vpop.f32.mrf.mxu0
    %v128 = vadd.f32 %v54, %v127
    %129 = vmatmul.bf16.gmra.mxu0 %v106
    %v130 = vpop.f32.mrf.mxu0
    %v131 = vadd.f32 %v54, %v130
    %v132 = vpop.f32.mrf.mxu0
    %v133 = vadd.f32 %v54, %v132
    %134 = vmatmul.bf16.gmra.mxu0 %v109
    %v135 = vpop.f32.mrf.mxu0
    %v136 = vadd.f32 %v54, %v135
    %v137 = vpop.f32.mrf.mxu0
    %v138 = vadd.f32 %v54, %v137
    %139 = vdwg.mxu0
    %140 = vmatpush.bf16.msra.mxu0 0
    %141 = vmatpush.bf16.msra.mxu0 0
    %142 = vmatpush.bf16.msra.mxu0 0
    %143 = vmatpush.bf16.msra.mxu0 0
    %144 = vmatpush.bf16.msra.mxu0 0
    %145 = vmatpush.bf16.msra.mxu0 0
    %146 = vmatpush.bf16.msra.mxu0 %v93
    %147 = vmatpush.bf16.msra.mxu0 %v91
    %148 = vmatmul.bf16.gmra.mxu0 %v100
    %v149 = vpop.f32.mrf.mxu0
    %v150 = vadd.f32 %v55, %v149
    %v151 = vpop.f32.mrf.mxu0
    %v152 = vadd.f32 %v55, %v151
    %153 = vmatmul.bf16.gmra.mxu0 %v103
    %v154 = vpop.f32.mrf.mxu0
    %v155 = vadd.f32 %v55, %v154
    %v156 = vpop.f32.mrf.mxu0
    %v157 = vadd.f32 %v55, %v156
    %158 = vmatmul.bf16.gmra.mxu0 %v106
    %v159 = vpop.f32.mrf.mxu0
    %v160 = vadd.f32 %v55, %v159
    %v161 = vpop.f32.mrf.mxu0
    %v162 = vadd.f32 %v55, %v161
    %163 = vmatmul.bf16.gmra.mxu0 %v109
    %v164 = vpop.f32.mrf.mxu0
    %v165 = vadd.f32 %v55, %v164
    %v166 = vpop.f32.mrf.mxu0
    %v167 = vadd.f32 %v55, %v166
    %168 = vdwg.mxu0
    %169 = vst [vmem:[#allocation2] sm:$0xff] %v121
    %170 = vst [vmem:[#allocation2 + $0x8] sm:$0xff] %v150
    %171 = vst [vmem:[#allocation2 + $0x10] sm:$0xff] %v123
    %172 = vst [vmem:[#allocation2 + $0x18] sm:$0xff] %v152
    %173 = vst [vmem:[#allocation2 + $0x20] sm:$0xff] %v126
    %174 = vst [vmem:[#allocation2 + $0x28] sm:$0xff] %v155
    %175 = vst [vmem:[#allocation2 + $0x30] sm:$0xff] %v128
    %176 = vst [vmem:[#allocation2 + $0x38] sm:$0xff] %v157
    %177 = vst [vmem:[#allocation2 + $0x40] sm:$0xff] %v131
    %178 = vst [vmem:[#allocation2 + $0x48] sm:$0xff] %v160
    %179 = vst [vmem:[#allocation2 + $0x50] sm:$0xff] %v133
    %180 = vst [vmem:[#allocation2 + $0x58] sm:$0xff] %v162
    %181 = vst [vmem:[#allocation2 + $0x60] sm:$0xff] %v136
    %182 = vst [vmem:[#allocation2 + $0x68] sm:$0xff] %v165
    %183 = vst [vmem:[#allocation2 + $0x70] sm:$0xff] %v138
    %184 = vst [vmem:[#allocation2 + $0x78] sm:$0xff] %v167
    %v185 = vld [vmem:[%s2] sm:$0xff]
    %v186 = vld [vmem:[%s2 + $0x8] sm:$0xff]
    %v187 = vld [vmem:[%s2 + $0x10] sm:$0xff]
    %v188 = vld [vmem:[%s2 + $0x18] sm:$0xff]
    %v189 = vld [vmem:[%s2 + $0x20] sm:$0xff]
    %v190 = vld [vmem:[%s2 + $0x28] sm:$0xff]
    %v191 = vld [vmem:[%s2 + $0x30] sm:$0xff]
    %v192 = vld [vmem:[%s2 + $0x38] sm:$0xff]
    %s193 = smul.u32 0, 2
    %s194 = smul.addr %s193, 8
    %s195 = scalar_lea.vmem [#allocation2], %s194
    %v196 = vld [vmem:[%s195] sm:$0xff]
    %s197 = smul.u32 7, 2
    %s198 = smul.addr %s197, 8
    %s199 = scalar_lea.vmem [#allocation2], %s198
    %v200 = vld [vmem:[%s199 + $0x8] sm:$0xff]
    %v201 = vpack.c.bf16 0.0, 0.0
    %v210 = vunpack.c.l.b16 %v185
    %v211 = vunpack.c.h.b16 %v185
    %v212 = vunpack.c.l.b16 %v186
    %v213 = vunpack.c.h.b16 %v186
    %v214 = vunpack.c.l.b16 %v187
    %v215 = vunpack.c.h.b16 %v187
    %v216 = vunpack.c.l.b16 %v188
    %v217 = vunpack.c.h.b16 %v188
    %v218 = vunpack.c.l.b16 %v189
    %v219 = vunpack.c.h.b16 %v189
    %v220 = vunpack.c.l.b16 %v190
    %v221 = vunpack.c.h.b16 %v190
    %v222 = vunpack.c.l.b16 %v191
    %v223 = vunpack.c.h.b16 %v191
    %v224 = vunpack.c.l.b16 %v192
    %v225 = vunpack.c.h.b16 %v192
    %v226 = vpack.c.b16 %v212, %v210
    %v227 = vpack.c.b16 %v213, %v211
    %v228 = vpack.c.b16 %v216, %v214
    %v229 = vpack.c.b16 %v217, %v215
    %v230 = vpack.c.b16 %v220, %v218
    %v231 = vpack.c.b16 %v221, %v219
    %v232 = vpack.c.b16 %v224, %v222
    %v233 = vpack.c.b16 %v225, %v223
    %vm242 = vcmask 523264
    %v244 = vsel %vm242, %v201, 0
    %246 = vmatpush.bf16.msra.mxu0 0
    %247 = vmatpush.bf16.msra.mxu0 0
    %248 = vmatpush.bf16.msra.mxu0 0
    %249 = vmatpush.bf16.msra.mxu0 0
    %250 = vmatpush.bf16.msra.mxu0 %v232
    %251 = vmatpush.bf16.msra.mxu0 %v230
    %252 = vmatpush.bf16.msra.mxu0 %v228
    %253 = vmatpush.bf16.msra.mxu0 %v226
    %254 = vmatmul.bf16.gmra.mxu0 %v244
    %v255 = vpop.f32.mrf.mxu0
    %v256 = vadd.f32 0.0, %v255
    %v257 = vpop.f32.mrf.mxu0
    %258 = vdwg.mxu0
    %259 = vmatpush.bf16.msra.mxu0 0
    %260 = vmatpush.bf16.msra.mxu0 0
    %261 = vmatpush.bf16.msra.mxu0 0
    %262 = vmatpush.bf16.msra.mxu0 0
    %263 = vmatpush.bf16.msra.mxu0 %v233
    %264 = vmatpush.bf16.msra.mxu0 %v231
    %265 = vmatpush.bf16.msra.mxu0 %v229
    %266 = vmatpush.bf16.msra.mxu0 %v227
    %267 = vmatmul.bf16.gmra.mxu0 %v244
    %v268 = vpop.f32.mrf.mxu0
    %v269 = vadd.f32 0.0, %v268
    %v270 = vpop.f32.mrf.mxu0
    %271 = vdwg.mxu0
    %v272 = vadd.f32 %v196, %v256
    %v273 = vadd.f32 %v200, %v269
    %v274 = vxor.u32 %v272, 2147483648
    %v275 = vmul.f32 %v274, 1.442695
    %v276 = vpow.pop %v275
    %v277 = vadd.f32 %v276, 1.0
    %v278 = vrcp.pop %v277
    %v279 = vmul.f32 %v277, %v278
    %v280 = vsub.f32 1.0, %v279
    %v281 = vmul.f32 %v278, %v280
    %v282 = vadd.f32 %v278, %v281
    %vm283 = vweird.f32 %v277
    %vm284 = vweird.f32 %v278
    %vm285 = vmor %vm283, %vm284
    %v286 = vsel %vm285, %v278, %v282
    %v287 = vand.u32 2147483647, %v277
    %vm288 = vcmp.eq.f32.partialorder %v287, 8.507059e+37
    %v289 = vand.u32 %v277, 2147483648
    %v290 = vor.u32 1.1754944e-38, %v289
    %v291 = vsel %vm288, %v290, %v286
    %v292 = vmul.f32 1.0, %v291
    %v293 = vtanh.pop %v272
    %v294 = vxor.u32 %v273, 2147483648
    %v295 = vmul.f32 %v294, 1.442695
    %v296 = vpow.pop %v295
    %v297 = vadd.f32 %v296, 1.0
    %v298 = vrcp.pop %v297
    %v299 = vmul.f32 %v297, %v298
    %v300 = vsub.f32 1.0, %v299
    %v301 = vmul.f32 %v298, %v300
    %v302 = vadd.f32 %v298, %v301
    %vm303 = vweird.f32 %v297
    %vm304 = vweird.f32 %v298
    %vm305 = vmor %vm303, %vm304
    %v306 = vsel %vm305, %v298, %v302
    %v307 = vand.u32 2147483647, %v297
    %vm308 = vcmp.eq.f32.partialorder %v307, 8.507059e+37
    %v309 = vand.u32 %v297, 2147483648
    %v310 = vor.u32 1.1754944e-38, %v309
    %v311 = vsel %vm308, %v310, %v306
    %v312 = vmul.f32 1.0, %v311
    %v313 = vtanh.pop %v273
    %v314 = vmul.f32 %v292, 0.0
    %316 = vrot.lane.b32.xlu0 %v293, 64
    %v317 = vpop.permute.xlu0 %316
    %v319 = vmul.f32 %v292, %v317
    %321 = vrot.lane.b32.xlu0 %v319, 32
    %v322 = vpop.permute.xlu0 %321
    %v324 = vadd.f32 %v314, %v322
    %v325 = vtanh.pop %v324
    %327 = vrot.lane.b32.xlu0 %v325, 64
    %v328 = vpop.permute.xlu0 %327
    %v330 = vmul.f32 %v292, %v328
    %v331 = vmul.f32 %v312, 0.0
    %333 = vrot.lane.b32.xlu0 %v313, 64
    %v334 = vpop.permute.xlu0 %333
    %v336 = vmul.f32 %v312, %v334
    %338 = vrot.lane.b32.xlu0 %v336, 32
    %v339 = vpop.permute.xlu0 %338
    %v341 = vadd.f32 %v331, %v339
    %v342 = vtanh.pop %v341
    %344 = vrot.lane.b32.xlu0 %v342, 64
    %v345 = vpop.permute.xlu0 %344
    %v347 = vmul.f32 %v312, %v345
    %349 = vrot.lane.b32.xlu0 %v330, 32
    %v350 = vpop.permute.xlu0 %349
    %352 = vst.msk [vmem:[#allocation3] sm:$0xff] %vm98, %v350
    %354 = vrot.lane.b32.xlu0 %v347, 64
    %v355 = vpop.permute.xlu0 %354
    %s357 = scalar_lea.vmem [#allocation3], 56
    %vm358 = vcmask 523520
    %359 = vst.msk [vmem:[%s357] sm:$0xff] %vm358, %v355
    %s360 = smul.u32 1, 2
    %s361 = smul.addr %s360, 8
    %s362 = scalar_lea.vmem [#allocation2], %s361
    %v363 = vld [vmem:[%s362] sm:$0xff]
    %s364 = smul.u32 6, 2
    %s365 = smul.addr %s364, 8
    %s366 = scalar_lea.vmem [#allocation2], %s365
    %v367 = vld [vmem:[%s366 + $0x8] sm:$0xff]
    %v368 = vsel %vm98, %v350, %v355
    %v369 = vpack.c.bf16 %v368, %v368
    %v371 = vsel %vm242, %v369, 0
    %373 = vmatpush.bf16.msra.mxu0 0
    %374 = vmatpush.bf16.msra.mxu0 0
    %375 = vmatpush.bf16.msra.mxu0 0
    %376 = vmatpush.bf16.msra.mxu0 0
    %377 = vmatpush.bf16.msra.mxu0 %v232
    %378 = vmatpush.bf16.msra.mxu0 %v230
    %379 = vmatpush.bf16.msra.mxu0 %v228
    %380 = vmatpush.bf16.msra.mxu0 %v226
    %381 = vmatmul.bf16.gmra.mxu0 %v371
    %v382 = vpop.f32.mrf.mxu0
    %v383 = vadd.f32 0.0, %v382
    %v384 = vpop.f32.mrf.mxu0
    %385 = vdwg.mxu0
    %386 = vmatpush.bf16.msra.mxu0 0
    %387 = vmatpush.bf16.msra.mxu0 0
    %388 = vmatpush.bf16.msra.mxu0 0
    %389 = vmatpush.bf16.msra.mxu0 0
    %390 = vmatpush.bf16.msra.mxu0 %v233
    %391 = vmatpush.bf16.msra.mxu0 %v231
    %392 = vmatpush.bf16.msra.mxu0 %v229
    %393 = vmatpush.bf16.msra.mxu0 %v227
    %394 = vmatmul.bf16.gmra.mxu0 %v371
    %v395 = vpop.f32.mrf.mxu0
    %v396 = vadd.f32 0.0, %v395
    %v397 = vpop.f32.mrf.mxu0
    %398 = vdwg.mxu0
    %v399 = vadd.f32 %v363, %v383
    %v400 = vadd.f32 %v367, %v396
    %v401 = vxor.u32 %v399, 2147483648
    %v402 = vmul.f32 %v401, 1.442695
    %v403 = vpow.pop %v402
    %v404 = vadd.f32 %v403, 1.0
    %v405 = vrcp.pop %v404
    %v406 = vmul.f32 %v404, %v405
    %v407 = vsub.f32 1.0, %v406
    %v408 = vmul.f32 %v405, %v407
    %v409 = vadd.f32 %v405, %v408
    %vm410 = vweird.f32 %v404
    %vm411 = vweird.f32 %v405
    %vm412 = vmor %vm410, %vm411
    %v413 = vsel %vm412, %v405, %v409
    %v414 = vand.u32 2147483647, %v404
    %vm415 = vcmp.eq.f32.partialorder %v414, 8.507059e+37
    %v416 = vand.u32 %v404, 2147483648
    %v417 = vor.u32 1.1754944e-38, %v416
    %v418 = vsel %vm415, %v417, %v413
    %v419 = vmul.f32 1.0, %v418
    %v420 = vtanh.pop %v399
    %v421 = vxor.u32 %v400, 2147483648
    %v422 = vmul.f32 %v421, 1.442695
    %v423 = vpow.pop %v422
    %v424 = vadd.f32 %v423, 1.0
    %v425 = vrcp.pop %v424
    %v426 = vmul.f32 %v424, %v425
    %v427 = vsub.f32 1.0, %v426
    %v428 = vmul.f32 %v425, %v427
    %v429 = vadd.f32 %v425, %v428
    %vm430 = vweird.f32 %v424
    %vm431 = vweird.f32 %v425
    %vm432 = vmor %vm430, %vm431
    %v433 = vsel %vm432, %v425, %v429
    %v434 = vand.u32 2147483647, %v424
    %vm435 = vcmp.eq.f32.partialorder %v434, 8.507059e+37
    %v436 = vand.u32 %v424, 2147483648
    %v437 = vor.u32 1.1754944e-38, %v436
    %v438 = vsel %vm435, %v437, %v433
    %v439 = vmul.f32 1.0, %v438
    %v440 = vtanh.pop %v400
    %v441 = vmul.f32 %v419, %v324
    %443 = vrot.lane.b32.xlu0 %v420, 64
    %v444 = vpop.permute.xlu0 %443
    %v446 = vmul.f32 %v419, %v444
    %448 = vrot.lane.b32.xlu0 %v446, 32
    %v449 = vpop.permute.xlu0 %448
    %v451 = vadd.f32 %v441, %v449
    %v452 = vtanh.pop %v451
    %454 = vrot.lane.b32.xlu0 %v452, 64
    %v455 = vpop.permute.xlu0 %454
    %v457 = vmul.f32 %v419, %v455
    %v458 = vmul.f32 %v439, %v341
    %460 = vrot.lane.b32.xlu0 %v440, 64
    %v461 = vpop.permute.xlu0 %460
    %v463 = vmul.f32 %v439, %v461
    %465 = vrot.lane.b32.xlu0 %v463, 32
    %v466 = vpop.permute.xlu0 %465
    %v468 = vadd.f32 %v458, %v466
    %v469 = vtanh.pop %v468
    %471 = vrot.lane.b32.xlu0 %v469, 64
    %v472 = vpop.permute.xlu0 %471
    %v474 = vmul.f32 %v439, %v472
    %476 = vrot.lane.b32.xlu0 %v457, 32
    %v477 = vpop.permute.xlu0 %476
    %s479 = scalar_lea.vmem [#allocation3], 8
    %480 = vst.msk [vmem:[%s479] sm:$0xff] %vm98, %v477
    %482 = vrot.lane.b32.xlu0 %v474, 64
    %v483 = vpop.permute.xlu0 %482
    %s485 = scalar_lea.vmem [#allocation3], 48
    %486 = vst.msk [vmem:[%s485] sm:$0xff] %vm358, %v483
    %s487 = smul.u32 2, 2
    %s488 = smul.addr %s487, 8
    %s489 = scalar_lea.vmem [#allocation2], %s488
    %v490 = vld [vmem:[%s489] sm:$0xff]
    %s491 = smul.u32 5, 2
    %s492 = smul.addr %s491, 8
    %s493 = scalar_lea.vmem [#allocation2], %s492
    %v494 = vld [vmem:[%s493 + $0x8] sm:$0xff]
    %v495 = vsel %vm98, %v477, %v483
    %v496 = vpack.c.bf16 %v495, %v495
    %v498 = vsel %vm242, %v496, 0
    %500 = vmatpush.bf16.msra.mxu0 0
    %501 = vmatpush.bf16.msra.mxu0 0
    %502 = vmatpush.bf16.msra.mxu0 0
    %503 = vmatpush.bf16.msra.mxu0 0
    %504 = vmatpush.bf16.msra.mxu0 %v232
    %505 = vmatpush.bf16.msra.mxu0 %v230
    %506 = vmatpush.bf16.msra.mxu0 %v228
    %507 = vmatpush.bf16.msra.mxu0 %v226
    %508 = vmatmul.bf16.gmra.mxu0 %v498
    %v509 = vpop.f32.mrf.mxu0
    %v510 = vadd.f32 0.0, %v509
    %v511 = vpop.f32.mrf.mxu0
    %512 = vdwg.mxu0
    %513 = vmatpush.bf16.msra.mxu0 0
    %514 = vmatpush.bf16.msra.mxu0 0
    %515 = vmatpush.bf16.msra.mxu0 0
    %516 = vmatpush.bf16.msra.mxu0 0
    %517 = vmatpush.bf16.msra.mxu0 %v233
    %518 = vmatpush.bf16.msra.mxu0 %v231
    %519 = vmatpush.bf16.msra.mxu0 %v229
    %520 = vmatpush.bf16.msra.mxu0 %v227
    %521 = vmatmul.bf16.gmra.mxu0 %v498
    %v522 = vpop.f32.mrf.mxu0
    %v523 = vadd.f32 0.0, %v522
    %v524 = vpop.f32.mrf.mxu0
    %525 = vdwg.mxu0
    %v526 = vadd.f32 %v490, %v510
    %v527 = vadd.f32 %v494, %v523
    %v528 = vxor.u32 %v526, 2147483648
    %v529 = vmul.f32 %v528, 1.442695
    %v530 = vpow.pop %v529
    %v531 = vadd.f32 %v530, 1.0
    %v532 = vrcp.pop %v531
    %v533 = vmul.f32 %v531, %v532
    %v534 = vsub.f32 1.0, %v533
    %v535 = vmul.f32 %v532, %v534
    %v536 = vadd.f32 %v532, %v535
    %vm537 = vweird.f32 %v531
    %vm538 = vweird.f32 %v532
    %vm539 = vmor %vm537, %vm538
    %v540 = vsel %vm539, %v532, %v536
    %v541 = vand.u32 2147483647, %v531
    %vm542 = vcmp.eq.f32.partialorder %v541, 8.507059e+37
    %v543 = vand.u32 %v531, 2147483648
    %v544 = vor.u32 1.1754944e-38, %v543
    %v545 = vsel %vm542, %v544, %v540
    %v546 = vmul.f32 1.0, %v545
    %v547 = vtanh.pop %v526
    %v548 = vxor.u32 %v527, 2147483648
    %v549 = vmul.f32 %v548, 1.442695
    %v550 = vpow.pop %v549
    %v551 = vadd.f32 %v550, 1.0
    %v552 = vrcp.pop %v551
    %v553 = vmul.f32 %v551, %v552
    %v554 = vsub.f32 1.0, %v553
    %v555 = vmul.f32 %v552, %v554
    %v556 = vadd.f32 %v552, %v555
    %vm557 = vweird.f32 %v551
    %vm558 = vweird.f32 %v552
    %vm559 = vmor %vm557, %vm558
    %v560 = vsel %vm559, %v552, %v556
    %v561 = vand.u32 2147483647, %v551
    %vm562 = vcmp.eq.f32.partialorder %v561, 8.507059e+37
    %v563 = vand.u32 %v551, 2147483648
    %v564 = vor.u32 1.1754944e-38, %v563
    %v565 = vsel %vm562, %v564, %v560
    %v566 = vmul.f32 1.0, %v565
    %v567 = vtanh.pop %v527
    %v568 = vmul.f32 %v546, %v451
    %570 = vrot.lane.b32.xlu0 %v547, 64
    %v571 = vpop.permute.xlu0 %570
    %v573 = vmul.f32 %v546, %v571
    %575 = vrot.lane.b32.xlu0 %v573, 32
    %v576 = vpop.permute.xlu0 %575
    %v578 = vadd.f32 %v568, %v576
    %v579 = vtanh.pop %v578
    %581 = vrot.lane.b32.xlu0 %v579, 64
    %v582 = vpop.permute.xlu0 %581
    %v584 = vmul.f32 %v546, %v582
    %v585 = vmul.f32 %v566, %v468
    %587 = vrot.lane.b32.xlu0 %v567, 64
    %v588 = vpop.permute.xlu0 %587
    %v590 = vmul.f32 %v566, %v588
    %592 = vrot.lane.b32.xlu0 %v590, 32
    %v593 = vpop.permute.xlu0 %592
    %v595 = vadd.f32 %v585, %v593
    %v596 = vtanh.pop %v595
    %598 = vrot.lane.b32.xlu0 %v596, 64
    %v599 = vpop.permute.xlu0 %598
    %v601 = vmul.f32 %v566, %v599
    %603 = vrot.lane.b32.xlu0 %v584, 32
    %v604 = vpop.permute.xlu0 %603
    %s606 = scalar_lea.vmem [#allocation3], 16
    %607 = vst.msk [vmem:[%s606] sm:$0xff] %vm98, %v604
    %609 = vrot.lane.b32.xlu0 %v601, 64
    %v610 = vpop.permute.xlu0 %609
    %s612 = scalar_lea.vmem [#allocation3], 40
    %613 = vst.msk [vmem:[%s612] sm:$0xff] %vm358, %v610
    %s614 = smul.u32 3, 2
    %s615 = smul.addr %s614, 8
    %s616 = scalar_lea.vmem [#allocation2], %s615
    %v617 = vld [vmem:[%s616] sm:$0xff]
    %s618 = smul.u32 4, 2
    %s619 = smul.addr %s618, 8
    %s620 = scalar_lea.vmem [#allocation2], %s619
    %v621 = vld [vmem:[%s620 + $0x8] sm:$0xff]
    %v622 = vsel %vm98, %v604, %v610
    %v623 = vpack.c.bf16 %v622, %v622
    %v625 = vsel %vm242, %v623, 0
    %627 = vmatpush.bf16.msra.mxu0 0
    %628 = vmatpush.bf16.msra.mxu0 0
    %629 = vmatpush.bf16.msra.mxu0 0
    %630 = vmatpush.bf16.msra.mxu0 0
    %631 = vmatpush.bf16.msra.mxu0 %v232
    %632 = vmatpush.bf16.msra.mxu0 %v230
    %633 = vmatpush.bf16.msra.mxu0 %v228
    %634 = vmatpush.bf16.msra.mxu0 %v226
    %635 = vmatmul.bf16.gmra.mxu0 %v625
    %v636 = vpop.f32.mrf.mxu0
    %v637 = vadd.f32 0.0, %v636
    %v638 = vpop.f32.mrf.mxu0
    %639 = vdwg.mxu0
    %640 = vmatpush.bf16.msra.mxu0 0
    %641 = vmatpush.bf16.msra.mxu0 0
    %642 = vmatpush.bf16.msra.mxu0 0
    %643 = vmatpush.bf16.msra.mxu0 0
    %644 = vmatpush.bf16.msra.mxu0 %v233
    %645 = vmatpush.bf16.msra.mxu0 %v231
    %646 = vmatpush.bf16.msra.mxu0 %v229
    %647 = vmatpush.bf16.msra.mxu0 %v227
    %648 = vmatmul.bf16.gmra.mxu0 %v625
    %v649 = vpop.f32.mrf.mxu0
    %v650 = vadd.f32 0.0, %v649
    %v651 = vpop.f32.mrf.mxu0
    %652 = vdwg.mxu0
    %v653 = vadd.f32 %v617, %v637
    %v654 = vadd.f32 %v621, %v650
    %v655 = vxor.u32 %v653, 2147483648
    %v656 = vmul.f32 %v655, 1.442695
    %v657 = vpow.pop %v656
    %v658 = vadd.f32 %v657, 1.0
    %v659 = vrcp.pop %v658
    %v660 = vmul.f32 %v658, %v659
    %v661 = vsub.f32 1.0, %v660
    %v662 = vmul.f32 %v659, %v661
    %v663 = vadd.f32 %v659, %v662
    %vm664 = vweird.f32 %v658
    %vm665 = vweird.f32 %v659
    %vm666 = vmor %vm664, %vm665
    %v667 = vsel %vm666, %v659, %v663
    %v668 = vand.u32 2147483647, %v658
    %vm669 = vcmp.eq.f32.partialorder %v668, 8.507059e+37
    %v670 = vand.u32 %v658, 2147483648
    %v671 = vor.u32 1.1754944e-38, %v670
    %v672 = vsel %vm669, %v671, %v667
    %v673 = vmul.f32 1.0, %v672
    %v674 = vtanh.pop %v653
    %v675 = vxor.u32 %v654, 2147483648
    %v676 = vmul.f32 %v675, 1.442695
    %v677 = vpow.pop %v676
    %v678 = vadd.f32 %v677, 1.0
    %v679 = vrcp.pop %v678
    %v680 = vmul.f32 %v678, %v679
    %v681 = vsub.f32 1.0, %v680
    %v682 = vmul.f32 %v679, %v681
    %v683 = vadd.f32 %v679, %v682
    %vm684 = vweird.f32 %v678
    %vm685 = vweird.f32 %v679
    %vm686 = vmor %vm684, %vm685
    %v687 = vsel %vm686, %v679, %v683
    %v688 = vand.u32 2147483647, %v678
    %vm689 = vcmp.eq.f32.partialorder %v688, 8.507059e+37
    %v690 = vand.u32 %v678, 2147483648
    %v691 = vor.u32 1.1754944e-38, %v690
    %v692 = vsel %vm689, %v691, %v687
    %v693 = vmul.f32 1.0, %v692
    %v694 = vtanh.pop %v654
    %v695 = vmul.f32 %v673, %v578
    %697 = vrot.lane.b32.xlu0 %v674, 64
    %v698 = vpop.permute.xlu0 %697
    %v700 = vmul.f32 %v673, %v698
    %702 = vrot.lane.b32.xlu0 %v700, 32
    %v703 = vpop.permute.xlu0 %702
    %v705 = vadd.f32 %v695, %v703
    %v706 = vtanh.pop %v705
    %708 = vrot.lane.b32.xlu0 %v706, 64
    %v709 = vpop.permute.xlu0 %708
    %v711 = vmul.f32 %v673, %v709
    %v712 = vmul.f32 %v693, %v595
    %714 = vrot.lane.b32.xlu0 %v694, 64
    %v715 = vpop.permute.xlu0 %714
    %v717 = vmul.f32 %v693, %v715
    %719 = vrot.lane.b32.xlu0 %v717, 32
    %v720 = vpop.permute.xlu0 %719
    %v722 = vadd.f32 %v712, %v720
    %v723 = vtanh.pop %v722
    %725 = vrot.lane.b32.xlu0 %v723, 64
    %v726 = vpop.permute.xlu0 %725
    %v728 = vmul.f32 %v693, %v726
    %730 = vrot.lane.b32.xlu0 %v711, 32
    %v731 = vpop.permute.xlu0 %730
    %s733 = scalar_lea.vmem [#allocation3], 24
    %734 = vst.msk [vmem:[%s733] sm:$0xff] %vm98, %v731
    %736 = vrot.lane.b32.xlu0 %v728, 64
    %v737 = vpop.permute.xlu0 %736
    %s739 = scalar_lea.vmem [#allocation3], 32
    %740 = vst.msk [vmem:[%s739] sm:$0xff] %vm358, %v737
    %v741 = vld [vmem:[%s620] sm:$0xff]
    %v742 = vld [vmem:[%s616 + $0x8] sm:$0xff]
    %v743 = vsel %vm98, %v731, %v737
    %v744 = vpack.c.bf16 %v743, %v743
    %v746 = vsel %vm242, %v744, 0
    %748 = vmatpush.bf16.msra.mxu0 0
    %749 = vmatpush.bf16.msra.mxu0 0
    %750 = vmatpush.bf16.msra.mxu0 0
    %751 = vmatpush.bf16.msra.mxu0 0
    %752 = vmatpush.bf16.msra.mxu0 %v232
    %753 = vmatpush.bf16.msra.mxu0 %v230
    %754 = vmatpush.bf16.msra.mxu0 %v228
    %755 = vmatpush.bf16.msra.mxu0 %v226
    %756 = vmatmul.bf16.gmra.mxu0 %v746
    %v757 = vpop.f32.mrf.mxu0
    %v758 = vadd.f32 0.0, %v757
    %v759 = vpop.f32.mrf.mxu0
    %760 = vdwg.mxu0
    %761 = vmatpush.bf16.msra.mxu0 0
    %762 = vmatpush.bf16.msra.mxu0 0
    %763 = vmatpush.bf16.msra.mxu0 0
    %764 = vmatpush.bf16.msra.mxu0 0
    %765 = vmatpush.bf16.msra.mxu0 %v233
    %766 = vmatpush.bf16.msra.mxu0 %v231
    %767 = vmatpush.bf16.msra.mxu0 %v229
    %768 = vmatpush.bf16.msra.mxu0 %v227
    %769 = vmatmul.bf16.gmra.mxu0 %v746
    %v770 = vpop.f32.mrf.mxu0
    %v771 = vadd.f32 0.0, %v770
    %v772 = vpop.f32.mrf.mxu0
    %773 = vdwg.mxu0
    %v774 = vadd.f32 %v741, %v758
    %v775 = vadd.f32 %v742, %v771
    %v776 = vxor.u32 %v774, 2147483648
    %v777 = vmul.f32 %v776, 1.442695
    %v778 = vpow.pop %v777
    %v779 = vadd.f32 %v778, 1.0
    %v780 = vrcp.pop %v779
    %v781 = vmul.f32 %v779, %v780
    %v782 = vsub.f32 1.0, %v781
    %v783 = vmul.f32 %v780, %v782
    %v784 = vadd.f32 %v780, %v783
    %vm785 = vweird.f32 %v779
    %vm786 = vweird.f32 %v780
    %vm787 = vmor %vm785, %vm786
    %v788 = vsel %vm787, %v780, %v784
    %v789 = vand.u32 2147483647, %v779
    %vm790 = vcmp.eq.f32.partialorder %v789, 8.507059e+37
    %v791 = vand.u32 %v779, 2147483648
    %v792 = vor.u32 1.1754944e-38, %v791
    %v793 = vsel %vm790, %v792, %v788
    %v794 = vmul.f32 1.0, %v793
    %v795 = vtanh.pop %v774
    %v796 = vxor.u32 %v775, 2147483648
    %v797 = vmul.f32 %v796, 1.442695
    %v798 = vpow.pop %v797
    %v799 = vadd.f32 %v798, 1.0
    %v800 = vrcp.pop %v799
    %v801 = vmul.f32 %v799, %v800
    %v802 = vsub.f32 1.0, %v801
    %v803 = vmul.f32 %v800, %v802
    %v804 = vadd.f32 %v800, %v803
    %vm805 = vweird.f32 %v799
    %vm806 = vweird.f32 %v800
    %vm807 = vmor %vm805, %vm806
    %v808 = vsel %vm807, %v800, %v804
    %v809 = vand.u32 2147483647, %v799
    %vm810 = vcmp.eq.f32.partialorder %v809, 8.507059e+37
    %v811 = vand.u32 %v799, 2147483648
    %v812 = vor.u32 1.1754944e-38, %v811
    %v813 = vsel %vm810, %v812, %v808
    %v814 = vmul.f32 1.0, %v813
    %v815 = vtanh.pop %v775
    %v816 = vmul.f32 %v794, %v705
    %818 = vrot.lane.b32.xlu0 %v795, 64
    %v819 = vpop.permute.xlu0 %818
    %v821 = vmul.f32 %v794, %v819
    %823 = vrot.lane.b32.xlu0 %v821, 32
    %v824 = vpop.permute.xlu0 %823
    %v826 = vadd.f32 %v816, %v824
    %v827 = vtanh.pop %v826
    %829 = vrot.lane.b32.xlu0 %v827, 64
    %v830 = vpop.permute.xlu0 %829
    %v832 = vmul.f32 %v794, %v830
    %v833 = vmul.f32 %v814, %v722
    %835 = vrot.lane.b32.xlu0 %v815, 64
    %v836 = vpop.permute.xlu0 %835
    %v838 = vmul.f32 %v814, %v836
    %840 = vrot.lane.b32.xlu0 %v838, 32
    %v841 = vpop.permute.xlu0 %840
    %v843 = vadd.f32 %v833, %v841
    %v844 = vtanh.pop %v843
    %846 = vrot.lane.b32.xlu0 %v844, 64
    %v847 = vpop.permute.xlu0 %846
    %v849 = vmul.f32 %v814, %v847
    %851 = vrot.lane.b32.xlu0 %v832, 32
    %v852 = vpop.permute.xlu0 %851
    %854 = vst.msk [vmem:[%s739] sm:$0xff] %vm98, %v852
    %856 = vrot.lane.b32.xlu0 %v849, 64
    %v857 = vpop.permute.xlu0 %856
    %859 = vst.msk [vmem:[%s733] sm:$0xff] %vm358, %v857
    %v860 = vld [vmem:[%s493] sm:$0xff]
    %v861 = vld [vmem:[%s489 + $0x8] sm:$0xff]
    %v862 = vsel %vm98, %v852, %v857
    %v863 = vpack.c.bf16 %v862, %v862
    %v865 = vsel %vm242, %v863, 0
    %867 = vmatpush.bf16.msra.mxu0 0
    %868 = vmatpush.bf16.msra.mxu0 0
    %869 = vmatpush.bf16.msra.mxu0 0
    %870 = vmatpush.bf16.msra.mxu0 0
    %871 = vmatpush.bf16.msra.mxu0 %v232
    %872 = vmatpush.bf16.msra.mxu0 %v230
    %873 = vmatpush.bf16.msra.mxu0 %v228
    %874 = vmatpush.bf16.msra.mxu0 %v226
    %875 = vmatmul.bf16.gmra.mxu0 %v865
    %v876 = vpop.f32.mrf.mxu0
    %v877 = vadd.f32 0.0, %v876
    %v878 = vpop.f32.mrf.mxu0
    %879 = vdwg.mxu0
    %880 = vmatpush.bf16.msra.mxu0 0
    %881 = vmatpush.bf16.msra.mxu0 0
    %882 = vmatpush.bf16.msra.mxu0 0
    %883 = vmatpush.bf16.msra.mxu0 0
    %884 = vmatpush.bf16.msra.mxu0 %v233
    %885 = vmatpush.bf16.msra.mxu0 %v231
    %886 = vmatpush.bf16.msra.mxu0 %v229
    %887 = vmatpush.bf16.msra.mxu0 %v227
    %888 = vmatmul.bf16.gmra.mxu0 %v865
    %v889 = vpop.f32.mrf.mxu0
    %v890 = vadd.f32 0.0, %v889
    %v891 = vpop.f32.mrf.mxu0
    %892 = vdwg.mxu0
    %v893 = vadd.f32 %v860, %v877
    %v894 = vadd.f32 %v861, %v890
    %v895 = vxor.u32 %v893, 2147483648
    %v896 = vmul.f32 %v895, 1.442695
    %v897 = vpow.pop %v896
    %v898 = vadd.f32 %v897, 1.0
    %v899 = vrcp.pop %v898
    %v900 = vmul.f32 %v898, %v899
    %v901 = vsub.f32 1.0, %v900
    %v902 = vmul.f32 %v899, %v901
    %v903 = vadd.f32 %v899, %v902
    %vm904 = vweird.f32 %v898
    %vm905 = vweird.f32 %v899
    %vm906 = vmor %vm904, %vm905
    %v907 = vsel %vm906, %v899, %v903
    %v908 = vand.u32 2147483647, %v898
    %vm909 = vcmp.eq.f32.partialorder %v908, 8.507059e+37
    %v910 = vand.u32 %v898, 2147483648
    %v911 = vor.u32 1.1754944e-38, %v910
    %v912 = vsel %vm909, %v911, %v907
    %v913 = vmul.f32 1.0, %v912
    %v914 = vtanh.pop %v893
    %v915 = vxor.u32 %v894, 2147483648
    %v916 = vmul.f32 %v915, 1.442695
    %v917 = vpow.pop %v916
    %v918 = vadd.f32 %v917, 1.0
    %v919 = vrcp.pop %v918
    %v920 = vmul.f32 %v918, %v919
    %v921 = vsub.f32 1.0, %v920
    %v922 = vmul.f32 %v919, %v921
    %v923 = vadd.f32 %v919, %v922
    %vm924 = vweird.f32 %v918
    %vm925 = vweird.f32 %v919
    %vm926 = vmor %vm924, %vm925
    %v927 = vsel %vm926, %v919, %v923
    %v928 = vand.u32 2147483647, %v918
    %vm929 = vcmp.eq.f32.partialorder %v928, 8.507059e+37
    %v930 = vand.u32 %v918, 2147483648
    %v931 = vor.u32 1.1754944e-38, %v930
    %v932 = vsel %vm929, %v931, %v927
    %v933 = vmul.f32 1.0, %v932
    %v934 = vtanh.pop %v894
    %v935 = vmul.f32 %v913, %v826
    %937 = vrot.lane.b32.xlu0 %v914, 64
    %v938 = vpop.permute.xlu0 %937
    %v940 = vmul.f32 %v913, %v938
    %942 = vrot.lane.b32.xlu0 %v940, 32
    %v943 = vpop.permute.xlu0 %942
    %v945 = vadd.f32 %v935, %v943
    %v946 = vtanh.pop %v945
    %948 = vrot.lane.b32.xlu0 %v946, 64
    %v949 = vpop.permute.xlu0 %948
    %v951 = vmul.f32 %v913, %v949
    %v952 = vmul.f32 %v933, %v843
    %954 = vrot.lane.b32.xlu0 %v934, 64
    %v955 = vpop.permute.xlu0 %954
    %v957 = vmul.f32 %v933, %v955
    %959 = vrot.lane.b32.xlu0 %v957, 32
    %v960 = vpop.permute.xlu0 %959
    %v962 = vadd.f32 %v952, %v960
    %v963 = vtanh.pop %v962
    %965 = vrot.lane.b32.xlu0 %v963, 64
    %v966 = vpop.permute.xlu0 %965
    %v968 = vmul.f32 %v933, %v966
    %970 = vrot.lane.b32.xlu0 %v951, 32
    %v971 = vpop.permute.xlu0 %970
    %973 = vst.msk [vmem:[%s612] sm:$0xff] %vm98, %v971
    %975 = vrot.lane.b32.xlu0 %v968, 64
    %v976 = vpop.permute.xlu0 %975
    %978 = vst.msk [vmem:[%s606] sm:$0xff] %vm358, %v976
    %v979 = vld [vmem:[%s366] sm:$0xff]
    %v980 = vld [vmem:[%s362 + $0x8] sm:$0xff]
    %v981 = vsel %vm98, %v971, %v976
    %v982 = vpack.c.bf16 %v981, %v981
    %v984 = vsel %vm242, %v982, 0
    %986 = vmatpush.bf16.msra.mxu0 0
    %987 = vmatpush.bf16.msra.mxu0 0
    %988 = vmatpush.bf16.msra.mxu0 0
    %989 = vmatpush.bf16.msra.mxu0 0
    %990 = vmatpush.bf16.msra.mxu0 %v232
    %991 = vmatpush.bf16.msra.mxu0 %v230
    %992 = vmatpush.bf16.msra.mxu0 %v228
    %993 = vmatpush.bf16.msra.mxu0 %v226
    %994 = vmatmul.bf16.gmra.mxu0 %v984
    %v995 = vpop.f32.mrf.mxu0
    %v996 = vadd.f32 0.0, %v995
    %v997 = vpop.f32.mrf.mxu0
    %998 = vdwg.mxu0
    %999 = vmatpush.bf16.msra.mxu0 0
    %1000 = vmatpush.bf16.msra.mxu0 0
    %1001 = vmatpush.bf16.msra.mxu0 0
    %1002 = vmatpush.bf16.msra.mxu0 0
    %1003 = vmatpush.bf16.msra.mxu0 %v233
    %1004 = vmatpush.bf16.msra.mxu0 %v231
    %1005 = vmatpush.bf16.msra.mxu0 %v229
    %1006 = vmatpush.bf16.msra.mxu0 %v227
    %1007 = vmatmul.bf16.gmra.mxu0 %v984
    %v1008 = vpop.f32.mrf.mxu0
    %v1009 = vadd.f32 0.0, %v1008
    %v1010 = vpop.f32.mrf.mxu0
    %1011 = vdwg.mxu0
    %v1012 = vadd.f32 %v979, %v996
    %v1013 = vadd.f32 %v980, %v1009
    %v1014 = vxor.u32 %v1012, 2147483648
    %v1015 = vmul.f32 %v1014, 1.442695
    %v1016 = vpow.pop %v1015
    %v1017 = vadd.f32 %v1016, 1.0
    %v1018 = vrcp.pop %v1017
    %v1019 = vmul.f32 %v1017, %v1018
    %v1020 = vsub.f32 1.0, %v1019
    %v1021 = vmul.f32 %v1018, %v1020
    %v1022 = vadd.f32 %v1018, %v1021
    %vm1023 = vweird.f32 %v1017
    %vm1024 = vweird.f32 %v1018
    %vm1025 = vmor %vm1023, %vm1024
    %v1026 = vsel %vm1025, %v1018, %v1022
    %v1027 = vand.u32 2147483647, %v1017
    %vm1028 = vcmp.eq.f32.partialorder %v1027, 8.507059e+37
    %v1029 = vand.u32 %v1017, 2147483648
    %v1030 = vor.u32 1.1754944e-38, %v1029
    %v1031 = vsel %vm1028, %v1030, %v1026
    %v1032 = vmul.f32 1.0, %v1031
    %v1033 = vtanh.pop %v1012
    %v1034 = vxor.u32 %v1013, 2147483648
    %v1035 = vmul.f32 %v1034, 1.442695
    %v1036 = vpow.pop %v1035
    %v1037 = vadd.f32 %v1036, 1.0
    %v1038 = vrcp.pop %v1037
    %v1039 = vmul.f32 %v1037, %v1038
    %v1040 = vsub.f32 1.0, %v1039
    %v1041 = vmul.f32 %v1038, %v1040
    %v1042 = vadd.f32 %v1038, %v1041
    %vm1043 = vweird.f32 %v1037
    %vm1044 = vweird.f32 %v1038
    %vm1045 = vmor %vm1043, %vm1044
    %v1046 = vsel %vm1045, %v1038, %v1042
    %v1047 = vand.u32 2147483647, %v1037
    %vm1048 = vcmp.eq.f32.partialorder %v1047, 8.507059e+37
    %v1049 = vand.u32 %v1037, 2147483648
    %v1050 = vor.u32 1.1754944e-38, %v1049
    %v1051 = vsel %vm1048, %v1050, %v1046
    %v1052 = vmul.f32 1.0, %v1051
    %v1053 = vtanh.pop %v1013
    %v1054 = vmul.f32 %v1032, %v945
    %1056 = vrot.lane.b32.xlu0 %v1033, 64
    %v1057 = vpop.permute.xlu0 %1056
    %v1059 = vmul.f32 %v1032, %v1057
    %1061 = vrot.lane.b32.xlu0 %v1059, 32
    %v1062 = vpop.permute.xlu0 %1061
    %v1064 = vadd.f32 %v1054, %v1062
    %v1065 = vtanh.pop %v1064
    %1067 = vrot.lane.b32.xlu0 %v1065, 64
    %v1068 = vpop.permute.xlu0 %1067
    %v1070 = vmul.f32 %v1032, %v1068
    %v1071 = vmul.f32 %v1052, %v962
    %1073 = vrot.lane.b32.xlu0 %v1053, 64
    %v1074 = vpop.permute.xlu0 %1073
    %v1076 = vmul.f32 %v1052, %v1074
    %1078 = vrot.lane.b32.xlu0 %v1076, 32
    %v1079 = vpop.permute.xlu0 %1078
    %v1081 = vadd.f32 %v1071, %v1079
    %v1082 = vtanh.pop %v1081
    %1084 = vrot.lane.b32.xlu0 %v1082, 64
    %v1085 = vpop.permute.xlu0 %1084
    %v1087 = vmul.f32 %v1052, %v1085
    %1089 = vrot.lane.b32.xlu0 %v1070, 32
    %v1090 = vpop.permute.xlu0 %1089
    %1092 = vst.msk [vmem:[%s485] sm:$0xff] %vm98, %v1090
    %1094 = vrot.lane.b32.xlu0 %v1087, 64
    %v1095 = vpop.permute.xlu0 %1094
    %1097 = vst.msk [vmem:[%s479] sm:$0xff] %vm358, %v1095
    %v1098 = vld [vmem:[%s199] sm:$0xff]
    %v1099 = vld [vmem:[%s195 + $0x8] sm:$0xff]
    %v1100 = vsel %vm98, %v1090, %v1095
    %v1101 = vpack.c.bf16 %v1100, %v1100
    %v1103 = vsel %vm242, %v1101, 0
    %1105 = vmatpush.bf16.msra.mxu0 0
    %1106 = vmatpush.bf16.msra.mxu0 0
    %1107 = vmatpush.bf16.msra.mxu0 0
    %1108 = vmatpush.bf16.msra.mxu0 0
    %1109 = vmatpush.bf16.msra.mxu0 %v232
    %1110 = vmatpush.bf16.msra.mxu0 %v230
    %1111 = vmatpush.bf16.msra.mxu0 %v228
    %1112 = vmatpush.bf16.msra.mxu0 %v226
    %1113 = vmatmul.bf16.gmra.mxu0 %v1103
    %v1114 = vpop.f32.mrf.mxu0
    %v1115 = vadd.f32 0.0, %v1114
    %v1116 = vpop.f32.mrf.mxu0
    %1117 = vdwg.mxu0
    %1118 = vmatpush.bf16.msra.mxu0 0
    %1119 = vmatpush.bf16.msra.mxu0 0
    %1120 = vmatpush.bf16.msra.mxu0 0
    %1121 = vmatpush.bf16.msra.mxu0 0
    %1122 = vmatpush.bf16.msra.mxu0 %v233
    %1123 = vmatpush.bf16.msra.mxu0 %v231
    %1124 = vmatpush.bf16.msra.mxu0 %v229
    %1125 = vmatpush.bf16.msra.mxu0 %v227
    %1126 = vmatmul.bf16.gmra.mxu0 %v1103
    %v1127 = vpop.f32.mrf.mxu0
    %v1128 = vadd.f32 0.0, %v1127
    %v1129 = vpop.f32.mrf.mxu0
    %1130 = vdwg.mxu0
    %v1131 = vadd.f32 %v1098, %v1115
    %v1132 = vadd.f32 %v1099, %v1128
    %v1133 = vxor.u32 %v1131, 2147483648
    %v1134 = vmul.f32 %v1133, 1.442695
    %v1135 = vpow.pop %v1134
    %v1136 = vadd.f32 %v1135, 1.0
    %v1137 = vrcp.pop %v1136
    %v1138 = vmul.f32 %v1136, %v1137
    %v1139 = vsub.f32 1.0, %v1138
    %v1140 = vmul.f32 %v1137, %v1139
    %v1141 = vadd.f32 %v1137, %v1140
    %vm1142 = vweird.f32 %v1136
    %vm1143 = vweird.f32 %v1137
    %vm1144 = vmor %vm1142, %vm1143
    %v1145 = vsel %vm1144, %v1137, %v1141
    %v1146 = vand.u32 2147483647, %v1136
    %vm1147 = vcmp.eq.f32.partialorder %v1146, 8.507059e+37
    %v1148 = vand.u32 %v1136, 2147483648
    %v1149 = vor.u32 1.1754944e-38, %v1148
    %v1150 = vsel %vm1147, %v1149, %v1145
    %v1151 = vmul.f32 1.0, %v1150
    %v1152 = vtanh.pop %v1131
    %v1153 = vxor.u32 %v1132, 2147483648
    %v1154 = vmul.f32 %v1153, 1.442695
    %v1155 = vpow.pop %v1154
    %v1156 = vadd.f32 %v1155, 1.0
    %v1157 = vrcp.pop %v1156
    %v1158 = vmul.f32 %v1156, %v1157
    %v1159 = vsub.f32 1.0, %v1158
    %v1160 = vmul.f32 %v1157, %v1159
    %v1161 = vadd.f32 %v1157, %v1160
    %vm1162 = vweird.f32 %v1156
    %vm1163 = vweird.f32 %v1157
    %vm1164 = vmor %vm1162, %vm1163
    %v1165 = vsel %vm1164, %v1157, %v1161
    %v1166 = vand.u32 2147483647, %v1156
    %vm1167 = vcmp.eq.f32.partialorder %v1166, 8.507059e+37
    %v1168 = vand.u32 %v1156, 2147483648
    %v1169 = vor.u32 1.1754944e-38, %v1168
    %v1170 = vsel %vm1167, %v1169, %v1165
    %v1171 = vmul.f32 1.0, %v1170
    %v1172 = vtanh.pop %v1132
    %v1173 = vmul.f32 %v1151, %v1064
    %1175 = vrot.lane.b32.xlu0 %v1152, 64
    %v1176 = vpop.permute.xlu0 %1175
    %v1178 = vmul.f32 %v1151, %v1176
    %1180 = vrot.lane.b32.xlu0 %v1178, 32
    %v1181 = vpop.permute.xlu0 %1180
    %v1183 = vadd.f32 %v1173, %v1181
    %v1184 = vtanh.pop %v1183
    %1186 = vrot.lane.b32.xlu0 %v1184, 64
    %v1187 = vpop.permute.xlu0 %1186
    %v1189 = vmul.f32 %v1151, %v1187
    %v1190 = vmul.f32 %v1171, %v1081
    %1192 = vrot.lane.b32.xlu0 %v1172, 64
    %v1193 = vpop.permute.xlu0 %1192
    %v1195 = vmul.f32 %v1171, %v1193
    %1197 = vrot.lane.b32.xlu0 %v1195, 32
    %v1198 = vpop.permute.xlu0 %1197
    %v1200 = vadd.f32 %v1190, %v1198
    %v1201 = vtanh.pop %v1200
    %1203 = vrot.lane.b32.xlu0 %v1201, 64
    %v1204 = vpop.permute.xlu0 %1203
    %v1206 = vmul.f32 %v1171, %v1204
    %1208 = vrot.lane.b32.xlu0 %v1189, 32
    %v1209 = vpop.permute.xlu0 %1208
    %1211 = vst.msk [vmem:[%s357] sm:$0xff] %vm98, %v1209
    %1213 = vrot.lane.b32.xlu0 %v1206, 64
    %v1214 = vpop.permute.xlu0 %1213
    %1216 = vst.msk [vmem:[#allocation3] sm:$0xff] %vm358, %v1214
    %v1217 = vld [vmem:[#allocation3] sm:$0xff]
    %v1218 = vld [vmem:[#allocation3 + $0x8] sm:$0xff]
    %v1219 = vld [vmem:[#allocation3 + $0x10] sm:$0xff]
    %v1220 = vld [vmem:[#allocation3 + $0x18] sm:$0xff]
    %v1221 = vld [vmem:[#allocation3 + $0x20] sm:$0xff]
    %v1222 = vld [vmem:[#allocation3 + $0x28] sm:$0xff]
    %v1223 = vld [vmem:[#allocation3 + $0x30] sm:$0xff]
    %v1224 = vld [vmem:[#allocation3 + $0x38] sm:$0xff]
    %v1225 = vpack.c.bf16 %v1218, %v1217
    %v1226 = vpack.c.bf16 %v1220, %v1219
    %v1227 = vpack.c.bf16 %v1222, %v1221
    %v1228 = vpack.c.bf16 %v1224, %v1223
    %v1229 = vld [vmem:[%s4] sm:$0xf]
    %v1230 = vld [vmem:[%s4 + $0x4] sm:$0xf]
    %v1231 = vld [vmem:[%s4 + $0x8] sm:$0xf]
    %v1232 = vld [vmem:[%s4 + $0xc] sm:$0xf]
    %v1233 = vld [vmem:[%s4 + $0x10] sm:$0xf]
    %v1234 = vld [vmem:[%s4 + $0x14] sm:$0xf]
    %v1235 = vld [vmem:[%s4 + $0x18] sm:$0xf]
    %v1236 = vld [vmem:[%s4 + $0x1c] sm:$0xf]
    %v1237 = vld [vmem:[%s5] sm:$0x1]
    %v1239 = vperm.slane %v1237, 0
    %v1249 = vunpack.c.l.b16 %v1229
    %v1250 = vunpack.c.l.b16 %v1230
    %v1251 = vunpack.c.l.b16 %v1231
    %v1252 = vunpack.c.l.b16 %v1232
    %v1253 = vunpack.c.l.b16 %v1233
    %v1254 = vunpack.c.l.b16 %v1234
    %v1255 = vunpack.c.l.b16 %v1235
    %v1256 = vunpack.c.l.b16 %v1236
    %v1257 = vpack.c.b16 %v1250, %v1249
    %v1258 = vpack.c.b16 %v1252, %v1251
    %v1259 = vpack.c.b16 %v1254, %v1253
    %v1260 = vpack.c.b16 %v1256, %v1255
    %v1266 = vsel %vm242, %v1225, 0
    %v1269 = vsel %vm242, %v1226, 0
    %v1272 = vsel %vm242, %v1227, 0
    %v1275 = vsel %vm242, %v1228, 0
    %1277 = vmatpush.bf16.msra.mxu0 0
    %1278 = vmatpush.bf16.msra.mxu0 0
    %1279 = vmatpush.bf16.msra.mxu0 0
    %1280 = vmatpush.bf16.msra.mxu0 0
    %1281 = vmatpush.bf16.msra.mxu0 %v1260
    %1282 = vmatpush.bf16.msra.mxu0 %v1259
    %1283 = vmatpush.bf16.msra.mxu0 %v1258
    %1284 = vmatpush.bf16.msra.mxu0 %v1257
    %1285 = vmatmul.bf16.gmra.mxu0 %v1266
    %v1286 = vpop.f32.mrf.mxu0
    %v1287 = vadd.f32 %v1239, %v1286
    %v1288 = vpop.f32.mrf.mxu0
    %v1289 = vadd.f32 %v1239, %v1288
    %1290 = vmatmul.bf16.gmra.mxu0 %v1269
    %v1291 = vpop.f32.mrf.mxu0
    %v1292 = vadd.f32 %v1239, %v1291
    %v1293 = vpop.f32.mrf.mxu0
    %v1294 = vadd.f32 %v1239, %v1293
    %1295 = vmatmul.bf16.gmra.mxu0 %v1272
    %v1296 = vpop.f32.mrf.mxu0
    %v1297 = vadd.f32 %v1239, %v1296
    %v1298 = vpop.f32.mrf.mxu0
    %v1299 = vadd.f32 %v1239, %v1298
    %1300 = vmatmul.bf16.gmra.mxu0 %v1275
    %v1301 = vpop.f32.mrf.mxu0
    %v1302 = vadd.f32 %v1239, %v1301
    %v1303 = vpop.f32.mrf.mxu0
    %v1304 = vadd.f32 %v1239, %v1303
    %1305 = vdwg.mxu0
    %1306 = vst [vmem:[#allocation4] sm:$0xff] %v1287
    %1307 = vst [vmem:[#allocation4 + $0x8] sm:$0xff] %v1289
    %1308 = vst [vmem:[#allocation4 + $0x10] sm:$0xff] %v1292
    %1309 = vst [vmem:[#allocation4 + $0x18] sm:$0xff] %v1294
    %1310 = vst [vmem:[#allocation4 + $0x20] sm:$0xff] %v1297
    %1311 = vst [vmem:[#allocation4 + $0x28] sm:$0xff] %v1299
    %1312 = vst [vmem:[#allocation4 + $0x30] sm:$0xff] %v1302
    %1313 = vst [vmem:[#allocation4 + $0x38] sm:$0xff] %v1304
    %v1314 = vld [vmem:[%s6] sm:$0x1]
    %v1315 = vld [vmem:[%s7] sm:$0x1]
    %v1316 = vld [vmem:[%s8] sm:$0xff]
    %v1317 = vld [vmem:[%s8 + $0x8] sm:$0xff]
    %v1318 = vld [vmem:[%s8 + $0x10] sm:$0xff]
    %v1319 = vld [vmem:[%s8 + $0x18] sm:$0xff]
    %v1320 = vld [vmem:[%s8 + $0x20] sm:$0xff]
    %v1321 = vld [vmem:[%s8 + $0x28] sm:$0xff]
    %v1322 = vld [vmem:[%s8 + $0x30] sm:$0xff]
    %v1323 = vld [vmem:[%s8 + $0x38] sm:$0xff]
    %v1324 = vld [vmem:[%s8 + $0x40] sm:$0xff]
    %v1325 = vld [vmem:[%s8 + $0x48] sm:$0xff]
    %v1326 = vld [vmem:[%s8 + $0x50] sm:$0xff]
    %v1327 = vld [vmem:[%s8 + $0x58] sm:$0xff]
    %v1328 = vld [vmem:[%s8 + $0x60] sm:$0xff]
    %v1329 = vld [vmem:[%s8 + $0x68] sm:$0xff]
    %v1330 = vld [vmem:[%s8 + $0x70] sm:$0xff]
    %v1331 = vld [vmem:[%s8 + $0x78] sm:$0xff]
    %v1332 = vmul.f32 %v1316, 1.442695
    %v1333 = vpow.pop %v1332
    %v1334 = vmul.f32 %v1317, 1.442695
    %v1335 = vpow.pop %v1334
    %v1336 = vmul.f32 %v1318, 1.442695
    %v1337 = vpow.pop %v1336
    %v1338 = vmul.f32 %v1319, 1.442695
    %v1339 = vpow.pop %v1338
    %v1340 = vmul.f32 %v1320, 1.442695
    %v1341 = vpow.pop %v1340
    %v1342 = vmul.f32 %v1321, 1.442695
    %v1343 = vpow.pop %v1342
    %v1344 = vmul.f32 %v1322, 1.442695
    %v1345 = vpow.pop %v1344
    %v1346 = vmul.f32 %v1323, 1.442695
    %v1347 = vpow.pop %v1346
    %v1348 = vmul.f32 %v1324, 1.442695
    %v1349 = vpow.pop %v1348
    %v1350 = vmul.f32 %v1325, 1.442695
    %v1351 = vpow.pop %v1350
    %v1352 = vmul.f32 %v1326, 1.442695
    %v1353 = vpow.pop %v1352
    %v1354 = vmul.f32 %v1327, 1.442695
    %v1355 = vpow.pop %v1354
    %v1356 = vmul.f32 %v1328, 1.442695
    %v1357 = vpow.pop %v1356
    %v1358 = vmul.f32 %v1329, 1.442695
    %v1359 = vpow.pop %v1358
    %v1360 = vmul.f32 %v1330, 1.442695
    %v1361 = vpow.pop %v1360
    %v1362 = vmul.f32 %v1331, 1.442695
    %v1363 = vpow.pop %v1362
    %v1364 = vld [vmem:[%s9] sm:$0xff]
    %v1365 = vld [vmem:[#allocation4] sm:$0xff]
    %v1367 = vperm.slane %v1314, 0
    %v1369 = vadd.f32 %v1367, %v1365
    %s1370 = scalar_lea.vmem [#allocation4], 8
    %v1371 = vld [vmem:[%s1370] sm:$0xff]
    %s1372 = scalar_lea.vmem %s9, 8
    %v1373 = vld [vmem:[%s1372] sm:$0xff]
    %1374 = vmax.xlane.f32.xlu0 %v1369
    %v1375 = vpop.xlane.xlu0 %1374
    %v1376 = vsub.f32 %v1369, %v1375
    %v1377 = vmul.f32 %v1376, 1.442695
    %v1378 = vpow.pop %v1377
    %1379 = vmatpush.msra.mxu0 %v1363
    %1380 = vmatpush.msra.mxu0 %v1361
    %1381 = vmatpush.msra.mxu0 %v1359
    %1382 = vmatpush.msra.mxu0 %v1357
    %1383 = vmatpush.msra.mxu0 %v1355
    %1384 = vmatpush.msra.mxu0 %v1353
    %1385 = vmatpush.msra.mxu0 %v1351
    %1386 = vmatpush.msra.mxu0 %v1349
    %1387 = vmatpush.msra.mxu0 %v1347
    %1388 = vmatpush.msra.mxu0 %v1345
    %1389 = vmatpush.msra.mxu0 %v1343
    %1390 = vmatpush.msra.mxu0 %v1341
    %1391 = vmatpush.msra.mxu0 %v1339
    %1392 = vmatpush.msra.mxu0 %v1337
    %1393 = vmatpush.msra.mxu0 %v1335
    %1394 = vmatpush.msra.mxu0 %v1333
    %1395 = vmatmul.f32.gmra.mxu0 %v1378
    %v1396 = vpop.f32.mrf.mxu0
    %v1397 = vadd.f32 0.0, %v1396
    %1398 = vdwg.mxu0
    %v1399 = vlog2.pop %v1397
    %v1400 = vmul.f32 %v1399, 0.6931472
    %v1401 = vadd.f32 %v1375, %v1400
    %v1402 = vadd.f32 %v1401, %v1371
    %vm1403 = vcmp.gt.f32.partialorder %v1373, 0.5
    %v1404 = vsel %vm1403, 1, 0
    %1405 = vset.pattern.permute.xlu0 0
    %1406 = vperm.xlu0 %1405, %v1404
    %v1407 = vpop.permute.xlu0 %1406
    %vm1408 = vcmp.eq.s32.totalorder %v1407, 1
    %v1409 = vsel %vm1408, %v1402, %v1369
    %s1410 = scalar_lea.vmem [#allocation4], 16
    %v1411 = vld [vmem:[%s1410] sm:$0xff]
    %s1412 = scalar_lea.vmem %s9, 16
    %v1413 = vld [vmem:[%s1412] sm:$0xff]
    %1414 = vmax.xlane.f32.xlu0 %v1409
    %v1415 = vpop.xlane.xlu0 %1414
    %v1416 = vsub.f32 %v1409, %v1415
    %v1417 = vmul.f32 %v1416, 1.442695
    %v1418 = vpow.pop %v1417
    %1419 = vmatpush.msra.mxu0 %v1363
    %1420 = vmatpush.msra.mxu0 %v1361
    %1421 = vmatpush.msra.mxu0 %v1359
    %1422 = vmatpush.msra.mxu0 %v1357
    %1423 = vmatpush.msra.mxu0 %v1355
    %1424 = vmatpush.msra.mxu0 %v1353
    %1425 = vmatpush.msra.mxu0 %v1351
    %1426 = vmatpush.msra.mxu0 %v1349
    %1427 = vmatpush.msra.mxu0 %v1347
    %1428 = vmatpush.msra.mxu0 %v1345
    %1429 = vmatpush.msra.mxu0 %v1343
    %1430 = vmatpush.msra.mxu0 %v1341
    %1431 = vmatpush.msra.mxu0 %v1339
    %1432 = vmatpush.msra.mxu0 %v1337
    %1433 = vmatpush.msra.mxu0 %v1335
    %1434 = vmatpush.msra.mxu0 %v1333
    %1435 = vmatmul.f32.gmra.mxu0 %v1418
    %v1436 = vpop.f32.mrf.mxu0
    %v1437 = vadd.f32 0.0, %v1436
    %1438 = vdwg.mxu0
    %v1439 = vlog2.pop %v1437
    %v1440 = vmul.f32 %v1439, 0.6931472
    %v1441 = vadd.f32 %v1415, %v1440
    %v1442 = vadd.f32 %v1441, %v1411
    %vm1443 = vcmp.gt.f32.partialorder %v1413, 0.5
    %v1444 = vsel %vm1443, 1, 0
    %1445 = vset.pattern.permute.xlu0 0
    %1446 = vperm.xlu0 %1445, %v1444
    %v1447 = vpop.permute.xlu0 %1446
    %vm1448 = vcmp.eq.s32.totalorder %v1447, 1
    %v1449 = vsel %vm1448, %v1442, %v1409
    %s1450 = scalar_lea.vmem [#allocation4], 24
    %v1451 = vld [vmem:[%s1450] sm:$0xff]
    %s1452 = scalar_lea.vmem %s9, 24
    %v1453 = vld [vmem:[%s1452] sm:$0xff]
    %1454 = vmax.xlane.f32.xlu0 %v1449
    %v1455 = vpop.xlane.xlu0 %1454
    %v1456 = vsub.f32 %v1449, %v1455
    %v1457 = vmul.f32 %v1456, 1.442695
    %v1458 = vpow.pop %v1457
    %1459 = vmatpush.msra.mxu0 %v1363
    %1460 = vmatpush.msra.mxu0 %v1361
    %1461 = vmatpush.msra.mxu0 %v1359
    %1462 = vmatpush.msra.mxu0 %v1357
    %1463 = vmatpush.msra.mxu0 %v1355
    %1464 = vmatpush.msra.mxu0 %v1353
    %1465 = vmatpush.msra.mxu0 %v1351
    %1466 = vmatpush.msra.mxu0 %v1349
    %1467 = vmatpush.msra.mxu0 %v1347
    %1468 = vmatpush.msra.mxu0 %v1345
    %1469 = vmatpush.msra.mxu0 %v1343
    %1470 = vmatpush.msra.mxu0 %v1341
    %1471 = vmatpush.msra.mxu0 %v1339
    %1472 = vmatpush.msra.mxu0 %v1337
    %1473 = vmatpush.msra.mxu0 %v1335
    %1474 = vmatpush.msra.mxu0 %v1333
    %1475 = vmatmul.f32.gmra.mxu0 %v1458
    %v1476 = vpop.f32.mrf.mxu0
    %v1477 = vadd.f32 0.0, %v1476
    %1478 = vdwg.mxu0
    %v1479 = vlog2.pop %v1477
    %v1480 = vmul.f32 %v1479, 0.6931472
    %v1481 = vadd.f32 %v1455, %v1480
    %v1482 = vadd.f32 %v1481, %v1451
    %vm1483 = vcmp.gt.f32.partialorder %v1453, 0.5
    %v1484 = vsel %vm1483, 1, 0
    %1485 = vset.pattern.permute.xlu0 0
    %1486 = vperm.xlu0 %1485, %v1484
    %v1487 = vpop.permute.xlu0 %1486
    %vm1488 = vcmp.eq.s32.totalorder %v1487, 1
    %v1489 = vsel %vm1488, %v1482, %v1449
    %s1490 = scalar_lea.vmem [#allocation4], 32
    %v1491 = vld [vmem:[%s1490] sm:$0xff]
    %s1492 = scalar_lea.vmem %s9, 32
    %v1493 = vld [vmem:[%s1492] sm:$0xff]
    %1494 = vmax.xlane.f32.xlu0 %v1489
    %v1495 = vpop.xlane.xlu0 %1494
    %v1496 = vsub.f32 %v1489, %v1495
    %v1497 = vmul.f32 %v1496, 1.442695
    %v1498 = vpow.pop %v1497
    %1499 = vmatpush.msra.mxu0 %v1363
    %1500 = vmatpush.msra.mxu0 %v1361
    %1501 = vmatpush.msra.mxu0 %v1359
    %1502 = vmatpush.msra.mxu0 %v1357
    %1503 = vmatpush.msra.mxu0 %v1355
    %1504 = vmatpush.msra.mxu0 %v1353
    %1505 = vmatpush.msra.mxu0 %v1351
    %1506 = vmatpush.msra.mxu0 %v1349
    %1507 = vmatpush.msra.mxu0 %v1347
    %1508 = vmatpush.msra.mxu0 %v1345
    %1509 = vmatpush.msra.mxu0 %v1343
    %1510 = vmatpush.msra.mxu0 %v1341
    %1511 = vmatpush.msra.mxu0 %v1339
    %1512 = vmatpush.msra.mxu0 %v1337
    %1513 = vmatpush.msra.mxu0 %v1335
    %1514 = vmatpush.msra.mxu0 %v1333
    %1515 = vmatmul.f32.gmra.mxu0 %v1498
    %v1516 = vpop.f32.mrf.mxu0
    %v1517 = vadd.f32 0.0, %v1516
    %1518 = vdwg.mxu0
    %v1519 = vlog2.pop %v1517
    %v1520 = vmul.f32 %v1519, 0.6931472
    %v1521 = vadd.f32 %v1495, %v1520
    %v1522 = vadd.f32 %v1521, %v1491
    %vm1523 = vcmp.gt.f32.partialorder %v1493, 0.5
    %v1524 = vsel %vm1523, 1, 0
    %1525 = vset.pattern.permute.xlu0 0
    %1526 = vperm.xlu0 %1525, %v1524
    %v1527 = vpop.permute.xlu0 %1526
    %vm1528 = vcmp.eq.s32.totalorder %v1527, 1
    %v1529 = vsel %vm1528, %v1522, %v1489
    %s1530 = scalar_lea.vmem [#allocation4], 40
    %v1531 = vld [vmem:[%s1530] sm:$0xff]
    %s1532 = scalar_lea.vmem %s9, 40
    %v1533 = vld [vmem:[%s1532] sm:$0xff]
    %1534 = vmax.xlane.f32.xlu0 %v1529
    %v1535 = vpop.xlane.xlu0 %1534
    %v1536 = vsub.f32 %v1529, %v1535
    %v1537 = vmul.f32 %v1536, 1.442695
    %v1538 = vpow.pop %v1537
    %1539 = vmatpush.msra.mxu0 %v1363
    %1540 = vmatpush.msra.mxu0 %v1361
    %1541 = vmatpush.msra.mxu0 %v1359
    %1542 = vmatpush.msra.mxu0 %v1357
    %1543 = vmatpush.msra.mxu0 %v1355
    %1544 = vmatpush.msra.mxu0 %v1353
    %1545 = vmatpush.msra.mxu0 %v1351
    %1546 = vmatpush.msra.mxu0 %v1349
    %1547 = vmatpush.msra.mxu0 %v1347
    %1548 = vmatpush.msra.mxu0 %v1345
    %1549 = vmatpush.msra.mxu0 %v1343
    %1550 = vmatpush.msra.mxu0 %v1341
    %1551 = vmatpush.msra.mxu0 %v1339
    %1552 = vmatpush.msra.mxu0 %v1337
    %1553 = vmatpush.msra.mxu0 %v1335
    %1554 = vmatpush.msra.mxu0 %v1333
    %1555 = vmatmul.f32.gmra.mxu0 %v1538
    %v1556 = vpop.f32.mrf.mxu0
    %v1557 = vadd.f32 0.0, %v1556
    %1558 = vdwg.mxu0
    %v1559 = vlog2.pop %v1557
    %v1560 = vmul.f32 %v1559, 0.6931472
    %v1561 = vadd.f32 %v1535, %v1560
    %v1562 = vadd.f32 %v1561, %v1531
    %vm1563 = vcmp.gt.f32.partialorder %v1533, 0.5
    %v1564 = vsel %vm1563, 1, 0
    %1565 = vset.pattern.permute.xlu0 0
    %1566 = vperm.xlu0 %1565, %v1564
    %v1567 = vpop.permute.xlu0 %1566
    %vm1568 = vcmp.eq.s32.totalorder %v1567, 1
    %v1569 = vsel %vm1568, %v1562, %v1529
    %s1570 = scalar_lea.vmem [#allocation4], 48
    %v1571 = vld [vmem:[%s1570] sm:$0xff]
    %s1572 = scalar_lea.vmem %s9, 48
    %v1573 = vld [vmem:[%s1572] sm:$0xff]
    %1574 = vmax.xlane.f32.xlu0 %v1569
    %v1575 = vpop.xlane.xlu0 %1574
    %v1576 = vsub.f32 %v1569, %v1575
    %v1577 = vmul.f32 %v1576, 1.442695
    %v1578 = vpow.pop %v1577
    %1579 = vmatpush.msra.mxu0 %v1363
    %1580 = vmatpush.msra.mxu0 %v1361
    %1581 = vmatpush.msra.mxu0 %v1359
    %1582 = vmatpush.msra.mxu0 %v1357
    %1583 = vmatpush.msra.mxu0 %v1355
    %1584 = vmatpush.msra.mxu0 %v1353
    %1585 = vmatpush.msra.mxu0 %v1351
    %1586 = vmatpush.msra.mxu0 %v1349
    %1587 = vmatpush.msra.mxu0 %v1347
    %1588 = vmatpush.msra.mxu0 %v1345
    %1589 = vmatpush.msra.mxu0 %v1343
    %1590 = vmatpush.msra.mxu0 %v1341
    %1591 = vmatpush.msra.mxu0 %v1339
    %1592 = vmatpush.msra.mxu0 %v1337
    %1593 = vmatpush.msra.mxu0 %v1335
    %1594 = vmatpush.msra.mxu0 %v1333
    %1595 = vmatmul.f32.gmra.mxu0 %v1578
    %v1596 = vpop.f32.mrf.mxu0
    %v1597 = vadd.f32 0.0, %v1596
    %1598 = vdwg.mxu0
    %v1599 = vlog2.pop %v1597
    %v1600 = vmul.f32 %v1599, 0.6931472
    %v1601 = vadd.f32 %v1575, %v1600
    %v1602 = vadd.f32 %v1601, %v1571
    %vm1603 = vcmp.gt.f32.partialorder %v1573, 0.5
    %v1604 = vsel %vm1603, 1, 0
    %1605 = vset.pattern.permute.xlu0 0
    %1606 = vperm.xlu0 %1605, %v1604
    %v1607 = vpop.permute.xlu0 %1606
    %vm1608 = vcmp.eq.s32.totalorder %v1607, 1
    %v1609 = vsel %vm1608, %v1602, %v1569
    %s1610 = scalar_lea.vmem [#allocation4], 56
    %v1611 = vld [vmem:[%s1610] sm:$0xff]
    %s1612 = scalar_lea.vmem %s9, 56
    %v1613 = vld [vmem:[%s1612] sm:$0xff]
    %1614 = vmax.xlane.f32.xlu0 %v1609
    %v1615 = vpop.xlane.xlu0 %1614
    %v1616 = vsub.f32 %v1609, %v1615
    %v1617 = vmul.f32 %v1616, 1.442695
    %v1618 = vpow.pop %v1617
    %1619 = vmatpush.msra.mxu0 %v1363
    %1620 = vmatpush.msra.mxu0 %v1361
    %1621 = vmatpush.msra.mxu0 %v1359
    %1622 = vmatpush.msra.mxu0 %v1357
    %1623 = vmatpush.msra.mxu0 %v1355
    %1624 = vmatpush.msra.mxu0 %v1353
    %1625 = vmatpush.msra.mxu0 %v1351
    %1626 = vmatpush.msra.mxu0 %v1349
    %1627 = vmatpush.msra.mxu0 %v1347
    %1628 = vmatpush.msra.mxu0 %v1345
    %1629 = vmatpush.msra.mxu0 %v1343
    %1630 = vmatpush.msra.mxu0 %v1341
    %1631 = vmatpush.msra.mxu0 %v1339
    %1632 = vmatpush.msra.mxu0 %v1337
    %1633 = vmatpush.msra.mxu0 %v1335
    %1634 = vmatpush.msra.mxu0 %v1333
    %1635 = vmatmul.f32.gmra.mxu0 %v1618
    %v1636 = vpop.f32.mrf.mxu0
    %v1637 = vadd.f32 0.0, %v1636
    %1638 = vdwg.mxu0
    %v1639 = vlog2.pop %v1637
    %v1640 = vmul.f32 %v1639, 0.6931472
    %v1641 = vadd.f32 %v1615, %v1640
    %v1642 = vadd.f32 %v1641, %v1611
    %vm1643 = vcmp.gt.f32.partialorder %v1613, 0.5
    %v1644 = vsel %vm1643, 1, 0
    %1645 = vset.pattern.permute.xlu0 0
    %1646 = vperm.xlu0 %1645, %v1644
    %v1647 = vpop.permute.xlu0 %1646
    %vm1648 = vcmp.eq.s32.totalorder %v1647, 1
    %v1649 = vsel %vm1648, %v1642, %v1609
    %v1651 = vperm.slane %v1315, 0
    %v1653 = vadd.f32 %v1649, %v1651
    %1654 = vmax.xlane.f32.xlu0 %v1653
    %v1655 = vpop.xlane.xlu0 %1654
    %v1656 = vsub.f32 %v1653, %v1655
    %v1657 = vmul.f32 %v1656, 1.442695
    %v1658 = vpow.pop %v1657
    %1659 = vadd.xlane.f32.xlu0 %v1658
    %v1660 = vpop.xlane.xlu0 %1659
    %v1661 = vlog2.pop %v1660
    %v1662 = vmul.f32 %v1661, 0.6931472
    %v1663 = vadd.f32 %v1655, %v1662
    %v1664 = vmul.f32 %v1663, %v1364
    %vm1665 = vcmask 7168
    %v1666 = vsel %vm1665, %v1664, 0.0
    %1667 = vadd.xlane.f32.xlu0 %v1666
    %v1668 = vpop.xlane.xlu0 %1667
    %v1669 = vrot.slane %v1668, 4
    %v1670 = vadd.f32 %v1668, %v1669
    %v1671 = vrot.slane %v1670, 2
    %v1672 = vadd.f32 %v1670, %v1671
    %v1673 = vrot.slane %v1672, 1
    %v1674 = vadd.f32 %v1672, %v1673
    %s1675 = vtos %v1674
    %v1676 = vstv %s1675
    %v1677 = vld [vmem:[#allocation4] sm:$0xff]
    %v1678 = vld [vmem:[#allocation4 + $0x8] sm:$0xff]
    %v1679 = vld [vmem:[#allocation4 + $0x10] sm:$0xff]
    %v1680 = vld [vmem:[#allocation4 + $0x18] sm:$0xff]
    %v1681 = vld [vmem:[#allocation4 + $0x20] sm:$0xff]
    %v1682 = vld [vmem:[#allocation4 + $0x28] sm:$0xff]
    %v1683 = vld [vmem:[#allocation4 + $0x30] sm:$0xff]
    %v1684 = vld [vmem:[#allocation4 + $0x38] sm:$0xff]
    %v1685 = vld [vmem:[%s9] sm:$0xff]
    %v1686 = vld [vmem:[%s9 + $0x8] sm:$0xff]
    %v1687 = vld [vmem:[%s9 + $0x10] sm:$0xff]
    %v1688 = vld [vmem:[%s9 + $0x18] sm:$0xff]
    %v1689 = vld [vmem:[%s9 + $0x20] sm:$0xff]
    %v1690 = vld [vmem:[%s9 + $0x28] sm:$0xff]
    %v1691 = vld [vmem:[%s9 + $0x30] sm:$0xff]
    %v1692 = vld [vmem:[%s9 + $0x38] sm:$0xff]
    %v1693 = vlaneseq
    %v1694 = vand.u32 %v1693, 127
    %v1695 = vld [vmem:[%s10] sm:$0xff]
    %v1696 = vld [vmem:[%s10 + $0x8] sm:$0xff]
    %v1697 = vld [vmem:[%s10 + $0x10] sm:$0xff]
    %v1698 = vld [vmem:[%s10 + $0x18] sm:$0xff]
    %v1699 = vld [vmem:[%s10 + $0x20] sm:$0xff]
    %v1700 = vld [vmem:[%s10 + $0x28] sm:$0xff]
    %v1701 = vld [vmem:[%s10 + $0x30] sm:$0xff]
    %v1702 = vld [vmem:[%s10 + $0x38] sm:$0xff]
    %1703 = vset.pattern.permute.xlu0 0
    %1704 = vperm.xlu0 %1703, %v1695
    %v1705 = vpop.permute.xlu0 %1704
    %1706 = vset.pattern.permute.xlu0 0
    %1707 = vperm.xlu0 %1706, %v1696
    %v1708 = vpop.permute.xlu0 %1707
    %1709 = vset.pattern.permute.xlu0 0
    %1710 = vperm.xlu0 %1709, %v1697
    %v1711 = vpop.permute.xlu0 %1710
    %1712 = vset.pattern.permute.xlu0 0
    %1713 = vperm.xlu0 %1712, %v1698
    %v1714 = vpop.permute.xlu0 %1713
    %1715 = vset.pattern.permute.xlu0 0
    %1716 = vperm.xlu0 %1715, %v1699
    %v1717 = vpop.permute.xlu0 %1716
    %1718 = vset.pattern.permute.xlu0 0
    %1719 = vperm.xlu0 %1718, %v1700
    %v1720 = vpop.permute.xlu0 %1719
    %1721 = vset.pattern.permute.xlu0 0
    %1722 = vperm.xlu0 %1721, %v1701
    %v1723 = vpop.permute.xlu0 %1722
    %1724 = vset.pattern.permute.xlu0 0
    %1725 = vperm.xlu0 %1724, %v1702
    %v1726 = vpop.permute.xlu0 %1725
    %vm1727 = vcmp.eq.s32.totalorder %v1694, %v1705
    %vm1728 = vcmp.eq.s32.totalorder %v1694, %v1708
    %vm1729 = vcmp.eq.s32.totalorder %v1694, %v1711
    %vm1730 = vcmp.eq.s32.totalorder %v1694, %v1714
    %vm1731 = vcmp.eq.s32.totalorder %v1694, %v1717
    %vm1732 = vcmp.eq.s32.totalorder %v1694, %v1720
    %vm1733 = vcmp.eq.s32.totalorder %v1694, %v1723
    %vm1734 = vcmp.eq.s32.totalorder %v1694, %v1726
    %v1735 = vsel %vm1727, 1, 0
    %v1736 = vsel %vm1728, 1, 0
    %v1737 = vsel %vm1729, 1, 0
    %v1738 = vsel %vm1730, 1, 0
    %v1739 = vsel %vm1731, 1, 0
    %v1740 = vsel %vm1732, 1, 0
    %v1741 = vsel %vm1733, 1, 0
    %v1742 = vsel %vm1734, 1, 0
    %v1743 = vcvt.s32.f32 %v1735
    %v1744 = vcvt.s32.f32 %v1736
    %v1745 = vcvt.s32.f32 %v1737
    %v1746 = vcvt.s32.f32 %v1738
    %v1747 = vcvt.s32.f32 %v1739
    %v1748 = vcvt.s32.f32 %v1740
    %v1749 = vcvt.s32.f32 %v1741
    %v1750 = vcvt.s32.f32 %v1742
    %v1751 = vmul.f32 %v1677, %v1743
    %v1752 = vmul.f32 %v1678, %v1744
    %v1753 = vmul.f32 %v1679, %v1745
    %v1754 = vmul.f32 %v1680, %v1746
    %v1755 = vmul.f32 %v1681, %v1747
    %v1756 = vmul.f32 %v1682, %v1748
    %v1757 = vmul.f32 %v1683, %v1749
    %v1758 = vmul.f32 %v1684, %v1750
    %1759 = vadd.xlane.f32.xlu0 %v1751
    %v1760 = vpop.xlane.xlu0 %1759
    %1761 = vadd.xlane.f32.xlu0 %v1752
    %v1762 = vpop.xlane.xlu0 %1761
    %1763 = vadd.xlane.f32.xlu0 %v1753
    %v1764 = vpop.xlane.xlu0 %1763
    %1765 = vadd.xlane.f32.xlu0 %v1754
    %v1766 = vpop.xlane.xlu0 %1765
    %1767 = vadd.xlane.f32.xlu0 %v1755
    %v1768 = vpop.xlane.xlu0 %1767
    %1769 = vadd.xlane.f32.xlu0 %v1756
    %v1770 = vpop.xlane.xlu0 %1769
    %1771 = vadd.xlane.f32.xlu0 %v1757
    %v1772 = vpop.xlane.xlu0 %1771
    %1773 = vadd.xlane.f32.xlu0 %v1758
    %v1774 = vpop.xlane.xlu0 %1773
    %v1775 = vmul.f32 %v1743, %v1651
    %v1776 = vmul.f32 %v1744, %v1651
    %v1777 = vmul.f32 %v1745, %v1651
    %v1778 = vmul.f32 %v1746, %v1651
    %v1779 = vmul.f32 %v1747, %v1651
    %v1780 = vmul.f32 %v1748, %v1651
    %v1781 = vmul.f32 %v1749, %v1651
    %v1782 = vmul.f32 %v1750, %v1651
    %1783 = vadd.xlane.f32.xlu0 %v1775
    %v1784 = vpop.xlane.xlu0 %1783
    %1785 = vadd.xlane.f32.xlu0 %v1776
    %v1786 = vpop.xlane.xlu0 %1785
    %1787 = vadd.xlane.f32.xlu0 %v1777
    %v1788 = vpop.xlane.xlu0 %1787
    %1789 = vadd.xlane.f32.xlu0 %v1778
    %v1790 = vpop.xlane.xlu0 %1789
    %1791 = vadd.xlane.f32.xlu0 %v1779
    %v1792 = vpop.xlane.xlu0 %1791
    %1793 = vadd.xlane.f32.xlu0 %v1780
    %v1794 = vpop.xlane.xlu0 %1793
    %1795 = vadd.xlane.f32.xlu0 %v1781
    %v1796 = vpop.xlane.xlu0 %1795
    %1797 = vadd.xlane.f32.xlu0 %v1782
    %v1798 = vpop.xlane.xlu0 %1797
    %v1799 = vmul.f32 %v1743, %v1367
    %1800 = vadd.xlane.f32.xlu0 %v1799
    %v1801 = vpop.xlane.xlu0 %1800
    %v1802 = vadd.f32 %v1801, %v1760
    %v1803 = vmul.f32 %v1802, %v1364
    %v1804 = vsel %vm1665, %v1803, 0.0
    %1805 = vadd.xlane.f32.xlu0 %v1804
    %v1806 = vpop.xlane.xlu0 %1805
    %v1807 = vrot.slane %v1806, 4
    %v1808 = vadd.f32 %v1806, %v1807
    %v1809 = vrot.slane %v1808, 2
    %v1810 = vadd.f32 %v1808, %v1809
    %v1811 = vrot.slane %v1810, 1
    %v1812 = vadd.f32 %v1810, %v1811
    %s1813 = vtos %v1812
    %v1814 = vstv %s1813
    %1815 = vmatpush.msra.mxu0 %v1331
    %1816 = vmatpush.msra.mxu0 %v1330
    %1817 = vmatpush.msra.mxu0 %v1329
    %1818 = vmatpush.msra.mxu0 %v1328
    %1819 = vmatpush.msra.mxu0 %v1327
    %1820 = vmatpush.msra.mxu0 %v1326
    %1821 = vmatpush.msra.mxu0 %v1325
    %1822 = vmatpush.msra.mxu0 %v1324
    %1823 = vmatpush.msra.mxu0 %v1323
    %1824 = vmatpush.msra.mxu0 %v1322
    %1825 = vmatpush.msra.mxu0 %v1321
    %1826 = vmatpush.msra.mxu0 %v1320
    %1827 = vmatpush.msra.mxu0 %v1319
    %1828 = vmatpush.msra.mxu0 %v1318
    %1829 = vmatpush.msra.mxu0 %v1317
    %1830 = vmatpush.msra.mxu0 %v1316
    %1831 = vmatmul.f32.gmra.mxu0 %v1743
    %v1832 = vpop.f32.mrf.mxu0
    %v1833 = vadd.f32 0.0, %v1832
    %1834 = vmatmul.f32.gmra.mxu0 %v1744
    %v1835 = vpop.f32.mrf.mxu0
    %v1836 = vadd.f32 0.0, %v1835
    %1837 = vmatmul.f32.gmra.mxu0 %v1745
    %v1838 = vpop.f32.mrf.mxu0
    %v1839 = vadd.f32 0.0, %v1838
    %1840 = vmatmul.f32.gmra.mxu0 %v1746
    %v1841 = vpop.f32.mrf.mxu0
    %v1842 = vadd.f32 0.0, %v1841
    %1843 = vmatmul.f32.gmra.mxu0 %v1747
    %v1844 = vpop.f32.mrf.mxu0
    %v1845 = vadd.f32 0.0, %v1844
    %1846 = vmatmul.f32.gmra.mxu0 %v1748
    %v1847 = vpop.f32.mrf.mxu0
    %v1848 = vadd.f32 0.0, %v1847
    %1849 = vmatmul.f32.gmra.mxu0 %v1749
    %v1850 = vpop.f32.mrf.mxu0
    %v1851 = vadd.f32 0.0, %v1850
    %1852 = vdwg.mxu0
    %v1853 = vmul.f32 %v1833, %v1744
    %v1854 = vmul.f32 %v1836, %v1745
    %v1855 = vmul.f32 %v1839, %v1746
    %v1856 = vmul.f32 %v1842, %v1747
    %v1857 = vmul.f32 %v1845, %v1748
    %v1858 = vmul.f32 %v1848, %v1749
    %v1859 = vmul.f32 %v1851, %v1750
    %1860 = vadd.xlane.f32.xlu0 %v1853
    %v1861 = vpop.xlane.xlu0 %1860
    %1862 = vadd.xlane.f32.xlu0 %v1854
    %v1863 = vpop.xlane.xlu0 %1862
    %1864 = vadd.xlane.f32.xlu0 %v1855
    %v1865 = vpop.xlane.xlu0 %1864
    %1866 = vadd.xlane.f32.xlu0 %v1856
    %v1867 = vpop.xlane.xlu0 %1866
    %1868 = vadd.xlane.f32.xlu0 %v1857
    %v1869 = vpop.xlane.xlu0 %1868
    %1870 = vadd.xlane.f32.xlu0 %v1858
    %v1871 = vpop.xlane.xlu0 %1870
    %1872 = vadd.xlane.f32.xlu0 %v1859
    %v1873 = vpop.xlane.xlu0 %1872
    %v1874 = vadd.f32 %v1861, %v1762
    %v1875 = vadd.f32 %v1863, %v1764
    %v1876 = vadd.f32 %v1865, %v1766
    %v1877 = vadd.f32 %v1867, %v1768
    %v1878 = vadd.f32 %v1869, %v1770
    %v1879 = vadd.f32 %v1871, %v1772
    %v1880 = vadd.f32 %v1873, %v1774
    %v1881 = vmul.f32 %v1874, %v1686
    %v1882 = vmul.f32 %v1875, %v1687
    %v1883 = vmul.f32 %v1876, %v1688
    %v1884 = vmul.f32 %v1877, %v1689
    %v1885 = vmul.f32 %v1878, %v1690
    %v1886 = vmul.f32 %v1879, %v1691
    %v1887 = vmul.f32 %v1880, %v1692
    %v1888 = vsel %vm1665, %v1881, 0.0
    %v1889 = vsel %vm1665, %v1882, 0.0
    %v1890 = vadd.f32 %v1888, %v1889
    %v1891 = vsel %vm1665, %v1883, 0.0
    %v1892 = vadd.f32 %v1890, %v1891
    %v1893 = vsel %vm1665, %v1884, 0.0
    %v1894 = vadd.f32 %v1892, %v1893
    %v1895 = vsel %vm1665, %v1885, 0.0
    %v1896 = vadd.f32 %v1894, %v1895
    %v1897 = vsel %vm1665, %v1886, 0.0
    %v1898 = vadd.f32 %v1896, %v1897
    %v1899 = vsel %vm1665, %v1887, 0.0
    %v1900 = vadd.f32 %v1898, %v1899
    %1901 = vadd.xlane.f32.xlu0 %v1900
    %v1902 = vpop.xlane.xlu0 %1901
    %v1903 = vrot.slane %v1902, 4
    %v1904 = vadd.f32 %v1902, %v1903
    %v1905 = vrot.slane %v1904, 2
    %v1906 = vadd.f32 %v1904, %v1905
    %v1907 = vrot.slane %v1906, 1
    %v1908 = vadd.f32 %v1906, %v1907
    %s1909 = vtos %v1908
    %v1910 = vstv %s1909
    %v1911 = vadd.f32 %v1814, %v1910
    %v1912 = vsub.f32 1.0, %v1686
    %v1913 = vsub.f32 1.0, %v1687
    %v1914 = vsub.f32 1.0, %v1688
    %v1915 = vsub.f32 1.0, %v1689
    %v1916 = vsub.f32 1.0, %v1690
    %v1917 = vsub.f32 1.0, %v1691
    %v1918 = vsub.f32 1.0, %v1692
    %v1919 = vmul.f32 %v1685, %v1912
    %v1920 = vmul.f32 %v1686, %v1913
    %v1921 = vmul.f32 %v1687, %v1914
    %v1922 = vmul.f32 %v1688, %v1915
    %v1923 = vmul.f32 %v1689, %v1916
    %v1924 = vmul.f32 %v1690, %v1917
    %v1925 = vmul.f32 %v1691, %v1918
    %v1926 = vmul.f32 %v1919, %v1784
    %v1927 = vmul.f32 %v1920, %v1786
    %v1928 = vmul.f32 %v1921, %v1788
    %v1929 = vmul.f32 %v1922, %v1790
    %v1930 = vmul.f32 %v1923, %v1792
    %v1931 = vmul.f32 %v1924, %v1794
    %v1932 = vmul.f32 %v1925, %v1796
    %v1933 = vsel %vm1665, %v1926, 0.0
    %v1934 = vsel %vm1665, %v1927, 0.0
    %v1935 = vadd.f32 %v1933, %v1934
    %v1936 = vsel %vm1665, %v1928, 0.0
    %v1937 = vadd.f32 %v1935, %v1936
    %v1938 = vsel %vm1665, %v1929, 0.0
    %v1939 = vadd.f32 %v1937, %v1938
    %v1940 = vsel %vm1665, %v1930, 0.0
    %v1941 = vadd.f32 %v1939, %v1940
    %v1942 = vsel %vm1665, %v1931, 0.0
    %v1943 = vadd.f32 %v1941, %v1942
    %v1944 = vsel %vm1665, %v1932, 0.0
    %v1945 = vadd.f32 %v1943, %v1944
    %1946 = vadd.xlane.f32.xlu0 %v1945
    %v1947 = vpop.xlane.xlu0 %1946
    %v1948 = vrot.slane %v1947, 4
    %v1949 = vadd.f32 %v1947, %v1948
    %v1950 = vrot.slane %v1949, 2
    %v1951 = vadd.f32 %v1949, %v1950
    %v1952 = vrot.slane %v1951, 1
    %v1953 = vadd.f32 %v1951, %v1952
    %s1954 = vtos %v1953
    %v1955 = vstv %s1954
    %v1956 = vadd.f32 %v1911, %v1955
    %v1957 = vmul.f32 %v1692, %v1798
    %v1958 = vsel %vm1665, %v1957, 0.0
    %1959 = vadd.xlane.f32.xlu0 %v1958
    %v1960 = vpop.xlane.xlu0 %1959
    %v1961 = vrot.slane %v1960, 4
    %v1962 = vadd.f32 %v1960, %v1961
    %v1963 = vrot.slane %v1962, 2
    %v1964 = vadd.f32 %v1962, %v1963
    %v1965 = vrot.slane %v1964, 1
    %v1966 = vadd.f32 %v1964, %v1965
    %s1967 = vtos %v1966
    %v1968 = vstv %s1967
    %v1969 = vadd.f32 %v1956, %v1968
    %v1970 = vsub.f32 %v1676, %v1969
    %vm1971 = vcmask 0
    %1972 = vst.msk [vmem:[#allocation5] sm:$0x1] %vm1971, %v1970
    // Predicated region
    $region46: #{bilstm_crf_loss.1} parent=1 // pred_check
      _
    $region47: #{bilstm_crf_loss.1} parent=1 // pred_check_branch
      %1974 = sbr.rel (0) target = $region49
    $region48: #{bilstm_crf_loss.1} parent=1 // pred_region
      %1976 = vsyncadd [#allocation6], 0
      %s1978 = sshll.u32 [#allocation5], 4
      %s1979 = int_to_ptr.vmem [resolvable:$true] %s1978
      %s1980 = sshll.u32 %s11, 4
      %s1981 = int_to_ptr.hbm [resolvable:$true] %s1980
      %1983 = dma.vmem_to_hbm [thread:$0]  %s1979, 16, %s1981, [#allocation6]
    $region49: #{bilstm_crf_loss.1} parent=1 // pred_fallthru
      _
    // Predicated region
    $region50: #{bilstm_crf_loss.1} parent=1 // pred_check
      _
    $region51: #{bilstm_crf_loss.1} parent=1 // pred_check_branch
      %1985 = sbr.rel (0) target = $region53
    $region52: #{bilstm_crf_loss.1} parent=1 // pred_region
      %1987 = dma.done [#allocation6], 16
    $region53: #{bilstm_crf_loss.1} parent=1 // pred_fallthru
      _
    %1988 = vsyncpa [#allocation6], 1

</llo_original>
